<compile_context>
chip_gen: v7x
topology: tpu7x:2x2x1
jax: 0.10.0
libtpu: 0.0.40
codegen_flags: <defaults>
</compile_context>

<pallas_src>
import jax
import jax.numpy as jnp
from jax import lax
from jax.experimental import pallas as pl
from jax.experimental.pallas import tpu as pltpu


# --------------------------- fused whole-model kernel ------------------------

def _make_fused_kernel(nodes_per_graph):
    p1 = nodes_per_graph
    k1 = int(0.5 * p1)
    k2 = int(0.5 * k1)
    k3 = int(0.5 * k2)
    assert k3 >= 1, "nodes_per_graph too small for three 0.5-ratio pools"

    def level(a, feat, w, b, wa, ba, keep):
        """One SAGPool level for a single graph, everything in registers/VMEM.

            gcn   = relu(A @ (X W) + b)                  (p, H)
            s     = tanh(A @ (gcn w_a) + b_a)            scores
            S     = one-hot top-`keep` selection          (k, p)
            pool  = (S * s_row) @ gcn                     (k, H)
            adj'  = renorm(S @ A_bin @ S^T + I)           (k, k)
            gp    = [mean(pool) | max(pool)]              (1, 2H)
        """
        f32 = jnp.float32
        p = a.shape[0]
        k = keep

        # ---- main GCN: relu(A @ (X W) + b) -----------------------------------
        support = jnp.dot(feat, w, preferred_element_type=f32)
        gcn = jnp.maximum(
            jnp.dot(a, support, preferred_element_type=f32) + b, 0.0)  # (p, H)

        # ---- attention scores (A is symmetric -> row form via dot_general) ---
        z = jnp.dot(gcn, wa, preferred_element_type=f32)               # (p, 1)
        s_col = jnp.tanh(jnp.dot(a, z, preferred_element_type=f32) + ba)
        s_row = jnp.tanh(
            lax.dot_general(z, a, (((0,), (0,)), ((), ())),
                            preferred_element_type=f32) + ba)          # (1, p)

        # ---- top-k via pairwise rank (ties -> lower node index) --------------
        rP = lax.broadcasted_iota(jnp.int32, (p, p), 0)
        cP = lax.broadcasted_iota(jnp.int32, (p, p), 1)
        eye_p = (rP == cP).astype(f32)
        sj = jnp.broadcast_to(s_col, (p, p))            # score of row node j
        si = jnp.broadcast_to(s_row, (p, p))            # score of col node i
        ahead = (rP != cP) & ((sj > si) | ((sj == si) & (rP < cP)))
        rank = jnp.sum(ahead.astype(f32), axis=0, keepdims=True)       # (1, p)
        mask_row = rank < float(k)                                     # (1, p)

        # position of each kept node among kept nodes (prefix count, exact ints)
        lower = (rP < cP).astype(f32)
        pos_row = jnp.dot(mask_row.astype(f32), lower,
                          preferred_element_type=f32)                  # (1, p)

        # one-hot selection matrix S (k, p)
        rK = lax.broadcasted_iota(jnp.int32, (k, p), 0).astype(f32)
        S = (mask_row & (pos_row == rK)).astype(f32)

        # ---- pooled node features: gather + attention scale on the MXU -------
        pool = jnp.dot(S * s_row, gcn, preferred_element_type=f32)     # (k, H)

        # ---- filtered + re-normalized adjacency: S @ A_bin @ S^T -------------
        a_bin = (a != 0.0).astype(f32) * (1.0 - eye_p)  # drop self loops
        t1 = jnp.dot(S, a_bin, preferred_element_type=f32)             # (k, p)
        a_sub = lax.dot_general(t1, S, (((1,), (1,)), ((), ())),
                                preferred_element_type=f32)            # (k, k)
        rk = lax.broadcasted_iota(jnp.int32, (k, k), 0)
        ck = lax.broadcasted_iota(jnp.int32, (k, k), 1)
        a_hat = a_sub + (rk == ck).astype(f32)
        d_col = lax.rsqrt(jnp.sum(a_hat, axis=1, keepdims=True))       # (k, 1)
        d_row = lax.rsqrt(jnp.sum(a_hat, axis=0, keepdims=True))       # (1, k)
        new_a = a_hat * d_col * d_row

        # ---- graph readout: plain axis-0 mean/max of the (k, H) block --------
        gp = jnp.concatenate(
            [jnp.mean(pool, axis=0, keepdims=True),
             jnp.max(pool, axis=0, keepdims=True)], axis=1)            # (1, 2H)
        return new_a, pool, gp

    def kernel(a_ref, x_ref,
               w1_ref, b1_ref, wa1_ref, ba1_ref,
               w2_ref, b2_ref, wa2_ref, ba2_ref,
               w3_ref, b3_ref, wa3_ref, ba3_ref,
               mw1_ref, mb1_ref, mw2_ref, mb2_ref, mw3_ref, mb3_ref,
               o_ref):
        f32 = jnp.float32
        a0 = a_ref[0]                                   # (P, P) this graph
        x0 = x_ref[0]                                   # (P, D)

        a1, pool1, gp1 = level(a0, x0, w1_ref[...], b1_ref[...],
                               wa1_ref[...], ba1_ref[...], k1)
        a2, pool2, gp2 = level(a1, pool1, w2_ref[...], b2_ref[...],
                               wa2_ref[...], ba2_ref[...], k2)
        a3, pool3, gp3 = level(a2, pool2, w3_ref[...], b3_ref[...],
                               wa3_ref[...], ba3_ref[...], k3)

        readout = gp1 + gp2 + gp3                       # (1, 2H)
        h1 = jnp.maximum(jnp.dot(readout, mw1_ref[...],
                                 preferred_element_type=f32) + mb1_ref[...], 0.0)
        h2 = jnp.maximum(jnp.dot(h1, mw2_ref[...],
                                 preferred_element_type=f32) + mb2_ref[...], 0.0)
        o_ref[0] = jnp.dot(h2, mw3_ref[...],
                           preferred_element_type=f32) + mb3_ref[...]

    return kernel


def _cost_estimate(num_graphs, nodes_per_graph, input_dim, hidden_dim,
                   num_classes):
    g, h, nc = num_graphs, hidden_dim, num_classes
    flops, trans = 0, 0
    p, d_in = nodes_per_graph, input_dim
    for _ in range(3):
        k = int(0.5 * p)
        flops += 2 * p * d_in * h          # X @ W
        flops += 2 * p * p * h             # A @ support
        flops += 2 * p * h                 # gcn @ w_a
        flops += 2 * 2 * p * p             # A @ z (col + row forms)
        flops += 2 * p * p                 # mask @ lower
        flops += 2 * k * p * h             # (S*s) @ gcn
        flops += 2 * k * p * p             # S @ A_bin
        flops += 2 * k * p * k             # (S A_bin) @ S^T
        trans += 2 * p + 2 * k             # tanh + rsqrt
        p, d_in = k, h
    flops += 2 * (2 * h * h + h * (h // 2) + (h // 2) * nc)   # MLP
    flops *= g
    trans *= g
    n = num_graphs * nodes_per_graph
    weight_elems = (input_dim * h + h + h + 1
                    + 2 * (h * h + h + h + 1)
                    + 2 * h * h + h + h * (h // 2) + h // 2
                    + (h // 2) * nc + nc)
    bytes_accessed = 4 * (n * nodes_per_graph + n * input_dim
                          + weight_elems + g * nc)
    return pl.CostEstimate(flops=int(flops), transcendentals=int(trans),
                           bytes_accessed=int(bytes_accessed))


# --------------------------- wrapper -----------------------------------------

def model_b_forward(params, adj, x, graph_indicator,
                    num_graphs, nodes_per_graph):
    # graph_indicator is implied by the contiguous equal-size-graph layout and
    # therefore not needed by the kernel (kept in the signature for parity).
    del graph_indicator
    g, p = num_graphs, nodes_per_graph
    n, d = x.shape
    h = params["gcn1"][0].shape[1]
    nc = params["mlp"][2][0].shape[1]

    # Batch adjacency is block-diagonal: extract per-graph diagonal blocks.
    idx = jnp.arange(g)
    adj_blocks = adj.reshape(g, p, g, p)[idx, :, idx, :]      # (G, P, P)
    x_blocks = x.reshape(g, p, d)                             # (G, P, D)

    w1, b1 = params["gcn1"]; wa1, ba1 = params["attn1"]
    w2, b2 = params["gcn2"]; wa2, ba2 = params["attn2"]
    w3, b3 = params["gcn3"]; wa3, ba3 = params["attn3"]
    (mw1, mb1), (mw2, mb2), (mw3, mb3) = params["mlp"]

    inputs = (adj_blocks, x_blocks,
              w1, b1.reshape(1, -1), wa1, ba1.reshape(1, 1),
              w2, b2.reshape(1, -1), wa2, ba2.reshape(1, 1),
              w3, b3.reshape(1, -1), wa3, ba3.reshape(1, 1),
              mw1, mb1.reshape(1, -1), mw2, mb2.reshape(1, -1),
              mw3, mb3.reshape(1, -1))

    def full_spec(arr):
        nd = arr.ndim
        return pl.BlockSpec(arr.shape, lambda i, _nd=nd: (0,) * _nd)

    in_specs = [
        pl.BlockSpec((1, p, p), lambda i: (i, 0, 0)),          # this graph's adj
        pl.BlockSpec((1, p, d), lambda i: (i, 0, 0)),          # this graph's feats
    ] + [full_spec(a) for a in inputs[2:]]                     # weights (resident)

    out = pl.pallas_call(
        _make_fused_kernel(p),
        out_shape=jax.ShapeDtypeStruct((g, 1, nc), jnp.float32),
        grid=(g,),
        in_specs=in_specs,
        out_specs=pl.BlockSpec((1, 1, nc), lambda i: (i, 0, 0)),
        compiler_params=pltpu.CompilerParams(
            dimension_semantics=("parallel",)),
        cost_estimate=_cost_estimate(g, p, d, h, nc),
    )(*inputs)
    return out.reshape(g, nc)


# --------------------------- params ------------------------------------------

def init_params(key, input_dim, hidden_dim, num_classes=2):
    keys = jax.random.split(key, 9)

    def kaiming(k, fan_in, fan_out):
        bound = jnp.sqrt(6.0 / fan_in)
        return jax.random.uniform(k, (fan_in, fan_out), jnp.float32,
                                  -bound, bound)

    z = lambda dd: jnp.zeros((dd,), jnp.float32)
    return {
        "gcn1": (kaiming(keys[0], input_dim, hidden_dim), z(hidden_dim)),
        "attn1": (kaiming(keys[1], hidden_dim, 1), z(1)),
        "gcn2": (kaiming(keys[2], hidden_dim, hidden_dim), z(hidden_dim)),
        "attn2": (kaiming(keys[3], hidden_dim, 1), z(1)),
        "gcn3": (kaiming(keys[4], hidden_dim, hidden_dim), z(hidden_dim)),
        "attn3": (kaiming(keys[5], hidden_dim, 1), z(1)),
        "mlp": [
            (kaiming(keys[6], 2 * hidden_dim, hidden_dim), z(hidden_dim)),
            (kaiming(keys[7], hidden_dim, hidden_dim // 2), z(hidden_dim // 2)),
            (kaiming(keys[8], hidden_dim // 2, num_classes), z(num_classes)),
        ],
    }


# --------------------------- Main ---------------------------------------------

if __name__ == "__main__":
    key = jax.random.PRNGKey(0)
    k_adj, k_x, k_p = jax.random.split(key, 3)

    num_graphs, nodes_per_graph = 2, 16
    N = num_graphs * nodes_per_graph
    input_dim, hidden_dim, num_classes = 4, 32, 2

    # random symmetric block-diagonal binary adjacency (2 graphs of 16 nodes)
    blocks = []
    for gi in range(num_graphs):
        kg = jax.random.fold_in(k_adj, gi)
        a = (jax.random.uniform(kg, (nodes_per_graph, nodes_per_graph)) < 0.3
             ).astype(jnp.float32)
        a = jnp.triu(a, 1)
        blocks.append(a + a.T)
    adj_bin = jax.scipy.linalg.block_diag(*blocks)

    # normalization(): L = D^-0.5 (A + I) D^-0.5  (dense)
    a_hat = adj_bin + jnp.eye(N, dtype=jnp.float32)
    deg = 1.0 / jnp.sqrt(jnp.sum(a_hat, axis=1))
    adj = a_hat * deg[:, None] * deg[None, :]

    x = jax.random.normal(k_x, (N, input_dim), jnp.float32)
    graph_indicator = jnp.repeat(
        jnp.arange(num_graphs, dtype=jnp.int32), nodes_per_graph)

    params = init_params(k_p, input_dim, hidden_dim, num_classes)

    forward = jax.jit(model_b_forward,
                      static_argnames=("num_graphs", "nodes_per_graph"))
    logits = forward(params, adj, x, graph_indicator,
                     num_graphs=num_graphs, nodes_per_graph=nodes_per_graph)
    logits = jax.block_until_ready(logits)
    assert logits.shape == (num_graphs, num_classes)
    assert bool(jnp.all(jnp.isfinite(logits)))
    print("KERNEL_OK")
</pallas_src>

<mosaic_0001>
module attributes {stable_mosaic.version = 11 : i64} {
  func.func @kernel(%arg0: i32, %arg1: memref<1x16x16xf32, #tpu.memory_space<vmem>>, %arg2: memref<1x16x4xf32, #tpu.memory_space<vmem>>, %arg3: memref<4x32xf32, #tpu.memory_space<vmem>>, %arg4: memref<1x32xf32, #tpu.memory_space<vmem>>, %arg5: memref<32x1xf32, #tpu.memory_space<vmem>>, %arg6: memref<1x1xf32, #tpu.memory_space<vmem>>, %arg7: memref<32x32xf32, #tpu.memory_space<vmem>>, %arg8: memref<1x32xf32, #tpu.memory_space<vmem>>, %arg9: memref<32x1xf32, #tpu.memory_space<vmem>>, %arg10: memref<1x1xf32, #tpu.memory_space<vmem>>, %arg11: memref<32x32xf32, #tpu.memory_space<vmem>>, %arg12: memref<1x32xf32, #tpu.memory_space<vmem>>, %arg13: memref<32x1xf32, #tpu.memory_space<vmem>>, %arg14: memref<1x1xf32, #tpu.memory_space<vmem>>, %arg15: memref<64x32xf32, #tpu.memory_space<vmem>>, %arg16: memref<1x32xf32, #tpu.memory_space<vmem>>, %arg17: memref<32x16xf32, #tpu.memory_space<vmem>>, %arg18: memref<1x16xf32, #tpu.memory_space<vmem>>, %arg19: memref<16x2xf32, #tpu.memory_space<vmem>>, %arg20: memref<1x2xf32, #tpu.memory_space<vmem>>, %arg21: memref<1x1x2xf32, #tpu.memory_space<vmem>>) attributes {dimension_semantics = [#tpu.dimension_semantics<parallel>], iteration_bounds = array<i64: 2>, scalar_prefetch = 0 : i64, scratch_operands = 0 : i64, tpu.core_type = #tpu.core_type<tc>, window_params = [{transform_indices = @transform_0, window_bounds = array<i64: 1, 16, 16>}, {transform_indices = @transform_1, window_bounds = array<i64: 1, 16, 4>}, {pipeline_mode = #tpu.pipeline_mode<synchronous>, transform_indices = @transform_2, window_bounds = array<i64: 4, 32>}, {pipeline_mode = #tpu.pipeline_mode<synchronous>, transform_indices = @transform_3, window_bounds = array<i64: 1, 32>}, {pipeline_mode = #tpu.pipeline_mode<synchronous>, transform_indices = @transform_4, window_bounds = array<i64: 32, 1>}, {pipeline_mode = #tpu.pipeline_mode<synchronous>, transform_indices = @transform_5, window_bounds = array<i64: 1, 1>}, {pipeline_mode = #tpu.pipeline_mode<synchronous>, transform_indices = @transform_6, window_bounds = array<i64: 32, 32>}, {pipeline_mode = #tpu.pipeline_mode<synchronous>, transform_indices = @transform_7, window_bounds = array<i64: 1, 32>}, {pipeline_mode = #tpu.pipeline_mode<synchronous>, transform_indices = @transform_8, window_bounds = array<i64: 32, 1>}, {pipeline_mode = #tpu.pipeline_mode<synchronous>, transform_indices = @transform_9, window_bounds = array<i64: 1, 1>}, {pipeline_mode = #tpu.pipeline_mode<synchronous>, transform_indices = @transform_10, window_bounds = array<i64: 32, 32>}, {pipeline_mode = #tpu.pipeline_mode<synchronous>, transform_indices = @transform_11, window_bounds = array<i64: 1, 32>}, {pipeline_mode = #tpu.pipeline_mode<synchronous>, transform_indices = @transform_12, window_bounds = array<i64: 32, 1>}, {pipeline_mode = #tpu.pipeline_mode<synchronous>, transform_indices = @transform_13, window_bounds = array<i64: 1, 1>}, {pipeline_mode = #tpu.pipeline_mode<synchronous>, transform_indices = @transform_14, window_bounds = array<i64: 64, 32>}, {pipeline_mode = #tpu.pipeline_mode<synchronous>, transform_indices = @transform_15, window_bounds = array<i64: 1, 32>}, {pipeline_mode = #tpu.pipeline_mode<synchronous>, transform_indices = @transform_16, window_bounds = array<i64: 32, 16>}, {pipeline_mode = #tpu.pipeline_mode<synchronous>, transform_indices = @transform_17, window_bounds = array<i64: 1, 16>}, {pipeline_mode = #tpu.pipeline_mode<synchronous>, transform_indices = @transform_18, window_bounds = array<i64: 16, 2>}, {pipeline_mode = #tpu.pipeline_mode<synchronous>, transform_indices = @transform_19, window_bounds = array<i64: 1, 2>}, {transform_indices = @transform_20, window_bounds = array<i64: 1, 1, 2>}]} {
    %c0 = arith.constant 0 : index
    %c0_0 = arith.constant 0 : index
    %c0_1 = arith.constant 0 : index
    %0 = vector.load %arg1[%c0, %c0_0, %c0_1] : memref<1x16x16xf32, #tpu.memory_space<vmem>>, vector<1x16x16xf32>
    %1 = vector.shape_cast %0 : vector<1x16x16xf32> to vector<16x16xf32>
    %c0_2 = arith.constant 0 : index
    %c0_3 = arith.constant 0 : index
    %c0_4 = arith.constant 0 : index
    %2 = vector.load %arg2[%c0_2, %c0_3, %c0_4] : memref<1x16x4xf32, #tpu.memory_space<vmem>>, vector<1x16x4xf32>
    %3 = vector.shape_cast %2 : vector<1x16x4xf32> to vector<16x4xf32>
    %c0_5 = arith.constant 0 : index
    %c0_6 = arith.constant 0 : index
    %4 = vector.load %arg3[%c0_5, %c0_6] : memref<4x32xf32, #tpu.memory_space<vmem>>, vector<4x32xf32>
    %c0_7 = arith.constant 0 : index
    %c0_8 = arith.constant 0 : index
    %5 = vector.load %arg4[%c0_7, %c0_8] : memref<1x32xf32, #tpu.memory_space<vmem>>, vector<1x32xf32>
    %c0_9 = arith.constant 0 : index
    %c0_10 = arith.constant 0 : index
    %6 = vector.load %arg5[%c0_9, %c0_10] : memref<32x1xf32, #tpu.memory_space<vmem>>, vector<32x1xf32>
    %c0_11 = arith.constant 0 : index
    %c0_12 = arith.constant 0 : index
    %7 = vector.load %arg6[%c0_11, %c0_12] : memref<1x1xf32, #tpu.memory_space<vmem>>, vector<1x1xf32>
    %cst = arith.constant dense<0.000000e+00> : vector<16x32xf32>
    %8 = tpu.matmul %3, %4, %cst {dimension_numbers = #tpu.dot_dimension_numbers<[1], [0], [0], [1], [0, 0, 1, 1], [], []>} : vector<16x4xf32>, vector<4x32xf32>, vector<16x32xf32> -> vector<16x32xf32>
    %cst_13 = arith.constant dense<0.000000e+00> : vector<16x32xf32>
    %9 = tpu.matmul %1, %8, %cst_13 {dimension_numbers = #tpu.dot_dimension_numbers<[1], [0], [0], [1], [0, 0, 1, 1], [], []>} : vector<16x16xf32>, vector<16x32xf32>, vector<16x32xf32> -> vector<16x32xf32>
    %10 = vector.broadcast %5 : vector<1x32xf32> to vector<16x32xf32>
    %11 = arith.addf %9, %10 : vector<16x32xf32>
    %cst_14 = arith.constant 0.000000e+00 : f32
    %12 = vector.broadcast %cst_14 : f32 to vector<16x32xf32>
    %13 = arith.maximumf %11, %12 : vector<16x32xf32>
    %cst_15 = arith.constant dense<0.000000e+00> : vector<16x1xf32>
    %14 = tpu.matmul %13, %6, %cst_15 {dimension_numbers = #tpu.dot_dimension_numbers<[1], [0], [0], [1], [0, 0, 1, 1], [], []>} : vector<16x32xf32>, vector<32x1xf32>, vector<16x1xf32> -> vector<16x1xf32>
    %cst_16 = arith.constant dense<0.000000e+00> : vector<16x1xf32>
    %15 = tpu.matmul %1, %14, %cst_16 {dimension_numbers = #tpu.dot_dimension_numbers<[1], [0], [0], [1], [0, 0, 1, 1], [], []>} : vector<16x16xf32>, vector<16x1xf32>, vector<16x1xf32> -> vector<16x1xf32>
    %16 = vector.broadcast %7 : vector<1x1xf32> to vector<16x1xf32>
    %17 = arith.addf %15, %16 : vector<16x1xf32>
    %18 = math.tanh %17 : vector<16x1xf32>
    %cst_17 = arith.constant dense<0.000000e+00> : vector<1x16xf32>
    %19 = tpu.matmul %14, %1, %cst_17 {dimension_numbers = #tpu.dot_dimension_numbers<[0], [0], [1], [1], [0, 1, 1, 1], [], []>} : vector<16x1xf32>, vector<16x16xf32>, vector<1x16xf32> -> vector<1x16xf32>
    %20 = vector.broadcast %7 : vector<1x1xf32> to vector<1x16xf32>
    %21 = arith.addf %19, %20 : vector<1x16xf32>
    %22 = math.tanh %21 : vector<1x16xf32>
    %23 = tpu.iota {dimensions = array<i32: 0>} : vector<16x16xi32>
    %24 = tpu.iota {dimensions = array<i32: 1>} : vector<16x16xi32>
    %25 = arith.cmpi eq, %23, %24 : vector<16x16xi32>
    %26 = arith.extui %25 : vector<16x16xi1> to vector<16x16xi32>
    %27 = arith.sitofp %26 : vector<16x16xi32> to vector<16x16xf32>
    %28 = vector.shape_cast %18 : vector<16x1xf32> to vector<16x1xf32>
    %29 = vector.broadcast %28 : vector<16x1xf32> to vector<16x16xf32>
    %30 = vector.shape_cast %22 : vector<1x16xf32> to vector<1x16xf32>
    %31 = vector.broadcast %30 : vector<1x16xf32> to vector<16x16xf32>
    %32 = arith.cmpi ne, %23, %24 : vector<16x16xi32>
    %33 = arith.cmpf ogt, %29, %31 : vector<16x16xf32>
    %34 = arith.cmpf oeq, %29, %31 : vector<16x16xf32>
    %35 = arith.cmpi slt, %23, %24 : vector<16x16xi32>
    %36 = arith.andi %34, %35 : vector<16x16xi1>
    %37 = arith.ori %33, %36 : vector<16x16xi1>
    %38 = arith.andi %32, %37 : vector<16x16xi1>
    %39 = arith.extui %38 : vector<16x16xi1> to vector<16x16xi32>
    %40 = arith.sitofp %39 : vector<16x16xi32> to vector<16x16xf32>
    %cst_18 = arith.constant dense<0.000000e+00> : vector<16xf32>
    %41 = vector.multi_reduction <add>, %40, %cst_18 [0] : vector<16x16xf32> to vector<16xf32>
    %42 = vector.shape_cast %41 : vector<16xf32> to vector<1x16xf32>
    %cst_19 = arith.constant 8.000000e+00 : f32
    %43 = vector.broadcast %cst_19 : f32 to vector<1x16xf32>
    %44 = arith.cmpf olt, %42, %43 : vector<1x16xf32>
    %45 = arith.cmpi slt, %23, %24 : vector<16x16xi32>
    %46 = arith.extui %45 : vector<16x16xi1> to vector<16x16xi32>
    %47 = arith.sitofp %46 : vector<16x16xi32> to vector<16x16xf32>
    %48 = arith.extui %44 : vector<1x16xi1> to vector<1x16xi32>
    %49 = arith.sitofp %48 : vector<1x16xi32> to vector<1x16xf32>
    %cst_20 = arith.constant dense<0.000000e+00> : vector<1x16xf32>
    %50 = tpu.matmul %49, %47, %cst_20 {dimension_numbers = #tpu.dot_dimension_numbers<[1], [0], [0], [1], [0, 0, 1, 1], [], []>} : vector<1x16xf32>, vector<16x16xf32>, vector<1x16xf32> -> vector<1x16xf32>
    %51 = tpu.iota {dimensions = array<i32: 0>} : vector<8x16xi32>
    %52 = arith.sitofp %51 : vector<8x16xi32> to vector<8x16xf32>
    %53 = vector.broadcast %50 : vector<1x16xf32> to vector<8x16xf32>
    %54 = arith.cmpf oeq, %53, %52 : vector<8x16xf32>
    %55 = vector.broadcast %44 : vector<1x16xi1> to vector<8x16xi1>
    %56 = arith.andi %55, %54 : vector<8x16xi1>
    %57 = arith.extui %56 : vector<8x16xi1> to vector<8x16xi32>
    %58 = arith.sitofp %57 : vector<8x16xi32> to vector<8x16xf32>
    %59 = vector.broadcast %22 : vector<1x16xf32> to vector<8x16xf32>
    %60 = arith.mulf %58, %59 : vector<8x16xf32>
    %cst_21 = arith.constant dense<0.000000e+00> : vector<8x32xf32>
    %61 = tpu.matmul %60, %13, %cst_21 {dimension_numbers = #tpu.dot_dimension_numbers<[1], [0], [0], [1], [0, 0, 1, 1], [], []>} : vector<8x16xf32>, vector<16x32xf32>, vector<8x32xf32> -> vector<8x32xf32>
    %cst_22 = arith.constant 0.000000e+00 : f32
    %62 = vector.broadcast %cst_22 : f32 to vector<16x16xf32>
    %63 = arith.cmpf one, %1, %62 : vector<16x16xf32>
    %64 = arith.extui %63 : vector<16x16xi1> to vector<16x16xi32>
    %65 = arith.sitofp %64 : vector<16x16xi32> to vector<16x16xf32>
    %cst_23 = arith.constant 1.000000e+00 : f32
    %66 = vector.broadcast %cst_23 : f32 to vector<16x16xf32>
    %67 = arith.subf %66, %27 : vector<16x16xf32>
    %68 = arith.mulf %65, %67 : vector<16x16xf32>
    %cst_24 = arith.constant dense<0.000000e+00> : vector<8x16xf32>
    %69 = tpu.matmul %58, %68, %cst_24 {dimension_numbers = #tpu.dot_dimension_numbers<[1], [0], [0], [1], [0, 0, 1, 1], [], []>} : vector<8x16xf32>, vector<16x16xf32>, vector<8x16xf32> -> vector<8x16xf32>
    %cst_25 = arith.constant dense<0.000000e+00> : vector<8x8xf32>
    %70 = tpu.matmul %69, %58, %cst_25 {dimension_numbers = #tpu.dot_dimension_numbers<[1], [1], [0], [0], [0, 0, 1, 0], [], []>} : vector<8x16xf32>, vector<8x16xf32>, vector<8x8xf32> -> vector<8x8xf32>
    %71 = tpu.iota {dimensions = array<i32: 0>} : vector<8x8xi32>
    %72 = tpu.iota {dimensions = array<i32: 1>} : vector<8x8xi32>
    %73 = arith.cmpi eq, %71, %72 : vector<8x8xi32>
    %74 = arith.extui %73 : vector<8x8xi1> to vector<8x8xi32>
    %75 = arith.sitofp %74 : vector<8x8xi32> to vector<8x8xf32>
    %76 = arith.addf %70, %75 : vector<8x8xf32>
    %cst_26 = arith.constant dense<0.000000e+00> : vector<8xf32>
    %77 = vector.multi_reduction <add>, %76, %cst_26 [1] : vector<8x8xf32> to vector<8xf32>
    %78 = vector.shape_cast %77 : vector<8xf32> to vector<8x1xf32>
    %79 = math.rsqrt %78 : vector<8x1xf32>
    %cst_27 = arith.constant dense<0.000000e+00> : vector<8xf32>
    %80 = vector.multi_reduction <add>, %76, %cst_27 [0] : vector<8x8xf32> to vector<8xf32>
    %81 = vector.shape_cast %80 : vector<8xf32> to vector<1x8xf32>
    %82 = math.rsqrt %81 : vector<1x8xf32>
    %83 = vector.broadcast %79 : vector<8x1xf32> to vector<8x8xf32>
    %84 = arith.mulf %76, %83 : vector<8x8xf32>
    %85 = vector.broadcast %82 : vector<1x8xf32> to vector<8x8xf32>
    %86 = arith.mulf %84, %85 : vector<8x8xf32>
    %cst_28 = arith.constant dense<0.000000e+00> : vector<32xf32>
    %87 = vector.multi_reduction <add>, %61, %cst_28 [0] : vector<8x32xf32> to vector<32xf32>
    %88 = vector.shape_cast %87 : vector<32xf32> to vector<1x32xf32>
    %cst_29 = arith.constant 8.000000e+00 : f32
    %89 = vector.broadcast %cst_29 : f32 to vector<1x32xf32>
    %90 = arith.divf %88, %89 : vector<1x32xf32>
    %cst_30 = arith.constant dense<0xFF800000> : vector<32xf32>
    %91 = vector.multi_reduction <maximumf>, %61, %cst_30 [0] : vector<8x32xf32> to vector<32xf32>
    %92 = vector.shape_cast %91 : vector<32xf32> to vector<1x32xf32>
    %93 = tpu.concatenate %90, %92 in 1 : vector<1x32xf32>, vector<1x32xf32> -> vector<1x64xf32>
    %c0_31 = arith.constant 0 : index
    %c0_32 = arith.constant 0 : index
    %94 = vector.load %arg7[%c0_31, %c0_32] : memref<32x32xf32, #tpu.memory_space<vmem>>, vector<32x32xf32>
    %c0_33 = arith.constant 0 : index
    %c0_34 = arith.constant 0 : index
    %95 = vector.load %arg8[%c0_33, %c0_34] : memref<1x32xf32, #tpu.memory_space<vmem>>, vector<1x32xf32>
    %c0_35 = arith.constant 0 : index
    %c0_36 = arith.constant 0 : index
    %96 = vector.load %arg9[%c0_35, %c0_36] : memref<32x1xf32, #tpu.memory_space<vmem>>, vector<32x1xf32>
    %c0_37 = arith.constant 0 : index
    %c0_38 = arith.constant 0 : index
    %97 = vector.load %arg10[%c0_37, %c0_38] : memref<1x1xf32, #tpu.memory_space<vmem>>, vector<1x1xf32>
    %cst_39 = arith.constant dense<0.000000e+00> : vector<8x32xf32>
    %98 = tpu.matmul %61, %94, %cst_39 {dimension_numbers = #tpu.dot_dimension_numbers<[1], [0], [0], [1], [0, 0, 1, 1], [], []>} : vector<8x32xf32>, vector<32x32xf32>, vector<8x32xf32> -> vector<8x32xf32>
    %cst_40 = arith.constant dense<0.000000e+00> : vector<8x32xf32>
    %99 = tpu.matmul %86, %98, %cst_40 {dimension_numbers = #tpu.dot_dimension_numbers<[1], [0], [0], [1], [0, 0, 1, 1], [], []>} : vector<8x8xf32>, vector<8x32xf32>, vector<8x32xf32> -> vector<8x32xf32>
    %100 = vector.broadcast %95 : vector<1x32xf32> to vector<8x32xf32>
    %101 = arith.addf %99, %100 : vector<8x32xf32>
    %cst_41 = arith.constant 0.000000e+00 : f32
    %102 = vector.broadcast %cst_41 : f32 to vector<8x32xf32>
    %103 = arith.maximumf %101, %102 : vector<8x32xf32>
    %cst_42 = arith.constant dense<0.000000e+00> : vector<8x1xf32>
    %104 = tpu.matmul %103, %96, %cst_42 {dimension_numbers = #tpu.dot_dimension_numbers<[1], [0], [0], [1], [0, 0, 1, 1], [], []>} : vector<8x32xf32>, vector<32x1xf32>, vector<8x1xf32> -> vector<8x1xf32>
    %cst_43 = arith.constant dense<0.000000e+00> : vector<8x1xf32>
    %105 = tpu.matmul %86, %104, %cst_43 {dimension_numbers = #tpu.dot_dimension_numbers<[1], [0], [0], [1], [0, 0, 1, 1], [], []>} : vector<8x8xf32>, vector<8x1xf32>, vector<8x1xf32> -> vector<8x1xf32>
    %106 = vector.broadcast %97 : vector<1x1xf32> to vector<8x1xf32>
    %107 = arith.addf %105, %106 : vector<8x1xf32>
    %108 = math.tanh %107 : vector<8x1xf32>
    %cst_44 = arith.constant dense<0.000000e+00> : vector<1x8xf32>
    %109 = tpu.matmul %104, %86, %cst_44 {dimension_numbers = #tpu.dot_dimension_numbers<[0], [0], [1], [1], [0, 1, 1, 1], [], []>} : vector<8x1xf32>, vector<8x8xf32>, vector<1x8xf32> -> vector<1x8xf32>
    %110 = vector.broadcast %97 : vector<1x1xf32> to vector<1x8xf32>
    %111 = arith.addf %109, %110 : vector<1x8xf32>
    %112 = math.tanh %111 : vector<1x8xf32>
    %113 = tpu.iota {dimensions = array<i32: 0>} : vector<8x8xi32>
    %114 = tpu.iota {dimensions = array<i32: 1>} : vector<8x8xi32>
    %115 = arith.cmpi eq, %113, %114 : vector<8x8xi32>
    %116 = arith.extui %115 : vector<8x8xi1> to vector<8x8xi32>
    %117 = arith.sitofp %116 : vector<8x8xi32> to vector<8x8xf32>
    %118 = vector.shape_cast %108 : vector<8x1xf32> to vector<8x1xf32>
    %119 = vector.broadcast %118 : vector<8x1xf32> to vector<8x8xf32>
    %120 = vector.shape_cast %112 : vector<1x8xf32> to vector<1x8xf32>
    %121 = vector.broadcast %120 : vector<1x8xf32> to vector<8x8xf32>
    %122 = arith.cmpi ne, %113, %114 : vector<8x8xi32>
    %123 = arith.cmpf ogt, %119, %121 : vector<8x8xf32>
    %124 = arith.cmpf oeq, %119, %121 : vector<8x8xf32>
    %125 = arith.cmpi slt, %113, %114 : vector<8x8xi32>
    %126 = arith.andi %124, %125 : vector<8x8xi1>
    %127 = arith.ori %123, %126 : vector<8x8xi1>
    %128 = arith.andi %122, %127 : vector<8x8xi1>
    %129 = arith.extui %128 : vector<8x8xi1> to vector<8x8xi32>
    %130 = arith.sitofp %129 : vector<8x8xi32> to vector<8x8xf32>
    %cst_45 = arith.constant dense<0.000000e+00> : vector<8xf32>
    %131 = vector.multi_reduction <add>, %130, %cst_45 [0] : vector<8x8xf32> to vector<8xf32>
    %132 = vector.shape_cast %131 : vector<8xf32> to vector<1x8xf32>
    %cst_46 = arith.constant 4.000000e+00 : f32
    %133 = vector.broadcast %cst_46 : f32 to vector<1x8xf32>
    %134 = arith.cmpf olt, %132, %133 : vector<1x8xf32>
    %135 = arith.cmpi slt, %113, %114 : vector<8x8xi32>
    %136 = arith.extui %135 : vector<8x8xi1> to vector<8x8xi32>
    %137 = arith.sitofp %136 : vector<8x8xi32> to vector<8x8xf32>
    %138 = arith.extui %134 : vector<1x8xi1> to vector<1x8xi32>
    %139 = arith.sitofp %138 : vector<1x8xi32> to vector<1x8xf32>
    %cst_47 = arith.constant dense<0.000000e+00> : vector<1x8xf32>
    %140 = tpu.matmul %139, %137, %cst_47 {dimension_numbers = #tpu.dot_dimension_numbers<[1], [0], [0], [1], [0, 0, 1, 1], [], []>} : vector<1x8xf32>, vector<8x8xf32>, vector<1x8xf32> -> vector<1x8xf32>
    %141 = tpu.iota {dimensions = array<i32: 0>} : vector<4x8xi32>
    %142 = arith.sitofp %141 : vector<4x8xi32> to vector<4x8xf32>
    %143 = vector.broadcast %140 : vector<1x8xf32> to vector<4x8xf32>
    %144 = arith.cmpf oeq, %143, %142 : vector<4x8xf32>
    %145 = vector.broadcast %134 : vector<1x8xi1> to vector<4x8xi1>
    %146 = arith.andi %145, %144 : vector<4x8xi1>
    %147 = arith.extui %146 : vector<4x8xi1> to vector<4x8xi32>
    %148 = arith.sitofp %147 : vector<4x8xi32> to vector<4x8xf32>
    %149 = vector.broadcast %112 : vector<1x8xf32> to vector<4x8xf32>
    %150 = arith.mulf %148, %149 : vector<4x8xf32>
    %cst_48 = arith.constant dense<0.000000e+00> : vector<4x32xf32>
    %151 = tpu.matmul %150, %103, %cst_48 {dimension_numbers = #tpu.dot_dimension_numbers<[1], [0], [0], [1], [0, 0, 1, 1], [], []>} : vector<4x8xf32>, vector<8x32xf32>, vector<4x32xf32> -> vector<4x32xf32>
    %cst_49 = arith.constant 0.000000e+00 : f32
    %152 = vector.broadcast %cst_49 : f32 to vector<8x8xf32>
    %153 = arith.cmpf one, %86, %152 : vector<8x8xf32>
    %154 = arith.extui %153 : vector<8x8xi1> to vector<8x8xi32>
    %155 = arith.sitofp %154 : vector<8x8xi32> to vector<8x8xf32>
    %cst_50 = arith.constant 1.000000e+00 : f32
    %156 = vector.broadcast %cst_50 : f32 to vector<8x8xf32>
    %157 = arith.subf %156, %117 : vector<8x8xf32>
    %158 = arith.mulf %155, %157 : vector<8x8xf32>
    %cst_51 = arith.constant dense<0.000000e+00> : vector<4x8xf32>
    %159 = tpu.matmul %148, %158, %cst_51 {dimension_numbers = #tpu.dot_dimension_numbers<[1], [0], [0], [1], [0, 0, 1, 1], [], []>} : vector<4x8xf32>, vector<8x8xf32>, vector<4x8xf32> -> vector<4x8xf32>
    %cst_52 = arith.constant dense<0.000000e+00> : vector<4x4xf32>
    %160 = tpu.matmul %159, %148, %cst_52 {dimension_numbers = #tpu.dot_dimension_numbers<[1], [1], [0], [0], [0, 0, 1, 0], [], []>} : vector<4x8xf32>, vector<4x8xf32>, vector<4x4xf32> -> vector<4x4xf32>
    %161 = tpu.iota {dimensions = array<i32: 0>} : vector<4x4xi32>
    %162 = tpu.iota {dimensions = array<i32: 1>} : vector<4x4xi32>
    %163 = arith.cmpi eq, %161, %162 : vector<4x4xi32>
    %164 = arith.extui %163 : vector<4x4xi1> to vector<4x4xi32>
    %165 = arith.sitofp %164 : vector<4x4xi32> to vector<4x4xf32>
    %166 = arith.addf %160, %165 : vector<4x4xf32>
    %cst_53 = arith.constant dense<0.000000e+00> : vector<4xf32>
    %167 = vector.multi_reduction <add>, %166, %cst_53 [1] : vector<4x4xf32> to vector<4xf32>
    %168 = vector.shape_cast %167 : vector<4xf32> to vector<4x1xf32>
    %169 = math.rsqrt %168 : vector<4x1xf32>
    %cst_54 = arith.constant dense<0.000000e+00> : vector<4xf32>
    %170 = vector.multi_reduction <add>, %166, %cst_54 [0] : vector<4x4xf32> to vector<4xf32>
    %171 = vector.shape_cast %170 : vector<4xf32> to vector<1x4xf32>
    %172 = math.rsqrt %171 : vector<1x4xf32>
    %173 = vector.broadcast %169 : vector<4x1xf32> to vector<4x4xf32>
    %174 = arith.mulf %166, %173 : vector<4x4xf32>
    %175 = vector.broadcast %172 : vector<1x4xf32> to vector<4x4xf32>
    %176 = arith.mulf %174, %175 : vector<4x4xf32>
    %cst_55 = arith.constant dense<0.000000e+00> : vector<32xf32>
    %177 = vector.multi_reduction <add>, %151, %cst_55 [0] : vector<4x32xf32> to vector<32xf32>
    %178 = vector.shape_cast %177 : vector<32xf32> to vector<1x32xf32>
    %cst_56 = arith.constant 4.000000e+00 : f32
    %179 = vector.broadcast %cst_56 : f32 to vector<1x32xf32>
    %180 = arith.divf %178, %179 : vector<1x32xf32>
    %cst_57 = arith.constant dense<0xFF800000> : vector<32xf32>
    %181 = vector.multi_reduction <maximumf>, %151, %cst_57 [0] : vector<4x32xf32> to vector<32xf32>
    %182 = vector.shape_cast %181 : vector<32xf32> to vector<1x32xf32>
    %183 = tpu.concatenate %180, %182 in 1 : vector<1x32xf32>, vector<1x32xf32> -> vector<1x64xf32>
    %c0_58 = arith.constant 0 : index
    %c0_59 = arith.constant 0 : index
    %184 = vector.load %arg11[%c0_58, %c0_59] : memref<32x32xf32, #tpu.memory_space<vmem>>, vector<32x32xf32>
    %c0_60 = arith.constant 0 : index
    %c0_61 = arith.constant 0 : index
    %185 = vector.load %arg12[%c0_60, %c0_61] : memref<1x32xf32, #tpu.memory_space<vmem>>, vector<1x32xf32>
    %c0_62 = arith.constant 0 : index
    %c0_63 = arith.constant 0 : index
    %186 = vector.load %arg13[%c0_62, %c0_63] : memref<32x1xf32, #tpu.memory_space<vmem>>, vector<32x1xf32>
    %c0_64 = arith.constant 0 : index
    %c0_65 = arith.constant 0 : index
    %187 = vector.load %arg14[%c0_64, %c0_65] : memref<1x1xf32, #tpu.memory_space<vmem>>, vector<1x1xf32>
    %cst_66 = arith.constant dense<0.000000e+00> : vector<4x32xf32>
    %188 = tpu.matmul %151, %184, %cst_66 {dimension_numbers = #tpu.dot_dimension_numbers<[1], [0], [0], [1], [0, 0, 1, 1], [], []>} : vector<4x32xf32>, vector<32x32xf32>, vector<4x32xf32> -> vector<4x32xf32>
    %cst_67 = arith.constant dense<0.000000e+00> : vector<4x32xf32>
    %189 = tpu.matmul %176, %188, %cst_67 {dimension_numbers = #tpu.dot_dimension_numbers<[1], [0], [0], [1], [0, 0, 1, 1], [], []>} : vector<4x4xf32>, vector<4x32xf32>, vector<4x32xf32> -> vector<4x32xf32>
    %190 = vector.broadcast %185 : vector<1x32xf32> to vector<4x32xf32>
    %191 = arith.addf %189, %190 : vector<4x32xf32>
    %cst_68 = arith.constant 0.000000e+00 : f32
    %192 = vector.broadcast %cst_68 : f32 to vector<4x32xf32>
    %193 = arith.maximumf %191, %192 : vector<4x32xf32>
    %cst_69 = arith.constant dense<0.000000e+00> : vector<4x1xf32>
    %194 = tpu.matmul %193, %186, %cst_69 {dimension_numbers = #tpu.dot_dimension_numbers<[1], [0], [0], [1], [0, 0, 1, 1], [], []>} : vector<4x32xf32>, vector<32x1xf32>, vector<4x1xf32> -> vector<4x1xf32>
    %cst_70 = arith.constant dense<0.000000e+00> : vector<4x1xf32>
    %195 = tpu.matmul %176, %194, %cst_70 {dimension_numbers = #tpu.dot_dimension_numbers<[1], [0], [0], [1], [0, 0, 1, 1], [], []>} : vector<4x4xf32>, vector<4x1xf32>, vector<4x1xf32> -> vector<4x1xf32>
    %196 = vector.broadcast %187 : vector<1x1xf32> to vector<4x1xf32>
    %197 = arith.addf %195, %196 : vector<4x1xf32>
    %198 = math.tanh %197 : vector<4x1xf32>
    %cst_71 = arith.constant dense<0.000000e+00> : vector<1x4xf32>
    %199 = tpu.matmul %194, %176, %cst_71 {dimension_numbers = #tpu.dot_dimension_numbers<[0], [0], [1], [1], [0, 1, 1, 1], [], []>} : vector<4x1xf32>, vector<4x4xf32>, vector<1x4xf32> -> vector<1x4xf32>
    %200 = vector.broadcast %187 : vector<1x1xf32> to vector<1x4xf32>
    %201 = arith.addf %199, %200 : vector<1x4xf32>
    %202 = math.tanh %201 : vector<1x4xf32>
    %203 = tpu.iota {dimensions = array<i32: 0>} : vector<4x4xi32>
    %204 = tpu.iota {dimensions = array<i32: 1>} : vector<4x4xi32>
    %205 = vector.shape_cast %198 : vector<4x1xf32> to vector<4x1xf32>
    %206 = vector.broadcast %205 : vector<4x1xf32> to vector<4x4xf32>
    %207 = vector.shape_cast %202 : vector<1x4xf32> to vector<1x4xf32>
    %208 = vector.broadcast %207 : vector<1x4xf32> to vector<4x4xf32>
    %209 = arith.cmpi ne, %203, %204 : vector<4x4xi32>
    %210 = arith.cmpf ogt, %206, %208 : vector<4x4xf32>
    %211 = arith.cmpf oeq, %206, %208 : vector<4x4xf32>
    %212 = arith.cmpi slt, %203, %204 : vector<4x4xi32>
    %213 = arith.andi %211, %212 : vector<4x4xi1>
    %214 = arith.ori %210, %213 : vector<4x4xi1>
    %215 = arith.andi %209, %214 : vector<4x4xi1>
    %216 = arith.extui %215 : vector<4x4xi1> to vector<4x4xi32>
    %217 = arith.sitofp %216 : vector<4x4xi32> to vector<4x4xf32>
    %cst_72 = arith.constant dense<0.000000e+00> : vector<4xf32>
    %218 = vector.multi_reduction <add>, %217, %cst_72 [0] : vector<4x4xf32> to vector<4xf32>
    %219 = vector.shape_cast %218 : vector<4xf32> to vector<1x4xf32>
    %cst_73 = arith.constant 2.000000e+00 : f32
    %220 = vector.broadcast %cst_73 : f32 to vector<1x4xf32>
    %221 = arith.cmpf olt, %219, %220 : vector<1x4xf32>
    %222 = arith.cmpi slt, %203, %204 : vector<4x4xi32>
    %223 = arith.extui %222 : vector<4x4xi1> to vector<4x4xi32>
    %224 = arith.sitofp %223 : vector<4x4xi32> to vector<4x4xf32>
    %225 = arith.extui %221 : vector<1x4xi1> to vector<1x4xi32>
    %226 = arith.sitofp %225 : vector<1x4xi32> to vector<1x4xf32>
    %cst_74 = arith.constant dense<0.000000e+00> : vector<1x4xf32>
    %227 = tpu.matmul %226, %224, %cst_74 {dimension_numbers = #tpu.dot_dimension_numbers<[1], [0], [0], [1], [0, 0, 1, 1], [], []>} : vector<1x4xf32>, vector<4x4xf32>, vector<1x4xf32> -> vector<1x4xf32>
    %228 = tpu.iota {dimensions = array<i32: 0>} : vector<2x4xi32>
    %229 = arith.sitofp %228 : vector<2x4xi32> to vector<2x4xf32>
    %230 = vector.broadcast %227 : vector<1x4xf32> to vector<2x4xf32>
    %231 = arith.cmpf oeq, %230, %229 : vector<2x4xf32>
    %232 = vector.broadcast %221 : vector<1x4xi1> to vector<2x4xi1>
    %233 = arith.andi %232, %231 : vector<2x4xi1>
    %234 = arith.extui %233 : vector<2x4xi1> to vector<2x4xi32>
    %235 = arith.sitofp %234 : vector<2x4xi32> to vector<2x4xf32>
    %236 = vector.broadcast %202 : vector<1x4xf32> to vector<2x4xf32>
    %237 = arith.mulf %235, %236 : vector<2x4xf32>
    %cst_75 = arith.constant dense<0.000000e+00> : vector<2x32xf32>
    %238 = tpu.matmul %237, %193, %cst_75 {dimension_numbers = #tpu.dot_dimension_numbers<[1], [0], [0], [1], [0, 0, 1, 1], [], []>} : vector<2x4xf32>, vector<4x32xf32>, vector<2x32xf32> -> vector<2x32xf32>
    %cst_76 = arith.constant dense<0.000000e+00> : vector<32xf32>
    %239 = vector.multi_reduction <add>, %238, %cst_76 [0] : vector<2x32xf32> to vector<32xf32>
    %240 = vector.shape_cast %239 : vector<32xf32> to vector<1x32xf32>
    %cst_77 = arith.constant 2.000000e+00 : f32
    %241 = vector.broadcast %cst_77 : f32 to vector<1x32xf32>
    %242 = arith.divf %240, %241 : vector<1x32xf32>
    %cst_78 = arith.constant dense<0xFF800000> : vector<32xf32>
    %243 = vector.multi_reduction <maximumf>, %238, %cst_78 [0] : vector<2x32xf32> to vector<32xf32>
    %244 = vector.shape_cast %243 : vector<32xf32> to vector<1x32xf32>
    %245 = tpu.concatenate %242, %244 in 1 : vector<1x32xf32>, vector<1x32xf32> -> vector<1x64xf32>
    %246 = arith.addf %93, %183 : vector<1x64xf32>
    %247 = arith.addf %246, %245 : vector<1x64xf32>
    %c0_79 = arith.constant 0 : index
    %c0_80 = arith.constant 0 : index
    %248 = vector.load %arg15[%c0_79, %c0_80] : memref<64x32xf32, #tpu.memory_space<vmem>>, vector<64x32xf32>
    %cst_81 = arith.constant dense<0.000000e+00> : vector<1x32xf32>
    %249 = tpu.matmul %247, %248, %cst_81 {dimension_numbers = #tpu.dot_dimension_numbers<[1], [0], [0], [1], [0, 0, 1, 1], [], []>} : vector<1x64xf32>, vector<64x32xf32>, vector<1x32xf32> -> vector<1x32xf32>
    %c0_82 = arith.constant 0 : index
    %c0_83 = arith.constant 0 : index
    %250 = vector.load %arg16[%c0_82, %c0_83] : memref<1x32xf32, #tpu.memory_space<vmem>>, vector<1x32xf32>
    %251 = arith.addf %249, %250 : vector<1x32xf32>
    %cst_84 = arith.constant 0.000000e+00 : f32
    %252 = vector.broadcast %cst_84 : f32 to vector<1x32xf32>
    %253 = arith.maximumf %251, %252 : vector<1x32xf32>
    %c0_85 = arith.constant 0 : index
    %c0_86 = arith.constant 0 : index
    %254 = vector.load %arg17[%c0_85, %c0_86] : memref<32x16xf32, #tpu.memory_space<vmem>>, vector<32x16xf32>
    %cst_87 = arith.constant dense<0.000000e+00> : vector<1x16xf32>
    %255 = tpu.matmul %253, %254, %cst_87 {dimension_numbers = #tpu.dot_dimension_numbers<[1], [0], [0], [1], [0, 0, 1, 1], [], []>} : vector<1x32xf32>, vector<32x16xf32>, vector<1x16xf32> -> vector<1x16xf32>
    %c0_88 = arith.constant 0 : index
    %c0_89 = arith.constant 0 : index
    %256 = vector.load %arg18[%c0_88, %c0_89] : memref<1x16xf32, #tpu.memory_space<vmem>>, vector<1x16xf32>
    %257 = arith.addf %255, %256 : vector<1x16xf32>
    %cst_90 = arith.constant 0.000000e+00 : f32
    %258 = vector.broadcast %cst_90 : f32 to vector<1x16xf32>
    %259 = arith.maximumf %257, %258 : vector<1x16xf32>
    %c0_91 = arith.constant 0 : index
    %c0_92 = arith.constant 0 : index
    %260 = vector.load %arg19[%c0_91, %c0_92] : memref<16x2xf32, #tpu.memory_space<vmem>>, vector<16x2xf32>
    %cst_93 = arith.constant dense<0.000000e+00> : vector<1x2xf32>
    %261 = tpu.matmul %259, %260, %cst_93 {dimension_numbers = #tpu.dot_dimension_numbers<[1], [0], [0], [1], [0, 0, 1, 1], [], []>} : vector<1x16xf32>, vector<16x2xf32>, vector<1x2xf32> -> vector<1x2xf32>
    %c0_94 = arith.constant 0 : index
    %c0_95 = arith.constant 0 : index
    %262 = vector.load %arg20[%c0_94, %c0_95] : memref<1x2xf32, #tpu.memory_space<vmem>>, vector<1x2xf32>
    %263 = arith.addf %261, %262 : vector<1x2xf32>
    %c0_96 = arith.constant 0 : index
    %c0_97 = arith.constant 0 : index
    %c0_98 = arith.constant 0 : index
    %264 = vector.load %arg21[%c0_96, %c0_97, %c0_98] : memref<1x1x2xf32, #tpu.memory_space<vmem>>, vector<1x1x2xf32>
    %265 = vector.shape_cast %264 : vector<1x1x2xf32> to vector<1x2xf32>
    %266 = vector.shape_cast %263 : vector<1x2xf32> to vector<1x1x2xf32>
    tpu.vector_store %arg21[%c0_96, %c0_97, %c0_98], %266 {strides = array<i32>} : memref<1x1x2xf32, #tpu.memory_space<vmem>>, vector<1x1x2xf32>,
    return
  }
  func.func @transform_0(%arg0: i32) -> (i32, i32, i32) {
    %c0_i32 = arith.constant 0 : i32
    %c0_i32_0 = arith.constant 0 : i32
    %c0_i32_1 = arith.constant 0 : i32
    return %arg0, %c0_i32, %c0_i32_0 : i32, i32, i32
  }
  func.func @transform_1(%arg0: i32) -> (i32, i32, i32) {
    %c0_i32 = arith.constant 0 : i32
    %c0_i32_0 = arith.constant 0 : i32
    %c0_i32_1 = arith.constant 0 : i32
    return %arg0, %c0_i32, %c0_i32_0 : i32, i32, i32
  }
  func.func @transform_2(%arg0: i32) -> (i32, i32) {
    %c0_i32 = arith.constant 0 : i32
    %c0_i32_0 = arith.constant 0 : i32
    %c0_i32_1 = arith.constant 0 : i32
    return %c0_i32, %c0_i32_0 : i32, i32
  }
  func.func @transform_3(%arg0: i32) -> (i32, i32) {
    %c0_i32 = arith.constant 0 : i32
    %c0_i32_0 = arith.constant 0 : i32
    %c0_i32_1 = arith.constant 0 : i32
    return %c0_i32, %c0_i32_0 : i32, i32
  }
  func.func @transform_4(%arg0: i32) -> (i32, i32) {
    %c0_i32 = arith.constant 0 : i32
    %c0_i32_0 = arith.constant 0 : i32
    %c0_i32_1 = arith.constant 0 : i32
    return %c0_i32, %c0_i32_0 : i32, i32
  }
  func.func @transform_5(%arg0: i32) -> (i32, i32) {
    %c0_i32 = arith.constant 0 : i32
    %c0_i32_0 = arith.constant 0 : i32
    %c0_i32_1 = arith.constant 0 : i32
    return %c0_i32, %c0_i32_0 : i32, i32
  }
  func.func @transform_6(%arg0: i32) -> (i32, i32) {
    %c0_i32 = arith.constant 0 : i32
    %c0_i32_0 = arith.constant 0 : i32
    %c0_i32_1 = arith.constant 0 : i32
    return %c0_i32, %c0_i32_0 : i32, i32
  }
  func.func @transform_7(%arg0: i32) -> (i32, i32) {
    %c0_i32 = arith.constant 0 : i32
    %c0_i32_0 = arith.constant 0 : i32
    %c0_i32_1 = arith.constant 0 : i32
    return %c0_i32, %c0_i32_0 : i32, i32
  }
  func.func @transform_8(%arg0: i32) -> (i32, i32) {
    %c0_i32 = arith.constant 0 : i32
    %c0_i32_0 = arith.constant 0 : i32
    %c0_i32_1 = arith.constant 0 : i32
    return %c0_i32, %c0_i32_0 : i32, i32
  }
  func.func @transform_9(%arg0: i32) -> (i32, i32) {
    %c0_i32 = arith.constant 0 : i32
    %c0_i32_0 = arith.constant 0 : i32
    %c0_i32_1 = arith.constant 0 : i32
    return %c0_i32, %c0_i32_0 : i32, i32
  }
  func.func @transform_10(%arg0: i32) -> (i32, i32) {
    %c0_i32 = arith.constant 0 : i32
    %c0_i32_0 = arith.constant 0 : i32
    %c0_i32_1 = arith.constant 0 : i32
    return %c0_i32, %c0_i32_0 : i32, i32
  }
  func.func @transform_11(%arg0: i32) -> (i32, i32) {
    %c0_i32 = arith.constant 0 : i32
    %c0_i32_0 = arith.constant 0 : i32
    %c0_i32_1 = arith.constant 0 : i32
    return %c0_i32, %c0_i32_0 : i32, i32
  }
  func.func @transform_12(%arg0: i32) -> (i32, i32) {
    %c0_i32 = arith.constant 0 : i32
    %c0_i32_0 = arith.constant 0 : i32
    %c0_i32_1 = arith.constant 0 : i32
    return %c0_i32, %c0_i32_0 : i32, i32
  }
  func.func @transform_13(%arg0: i32) -> (i32, i32) {
    %c0_i32 = arith.constant 0 : i32
    %c0_i32_0 = arith.constant 0 : i32
    %c0_i32_1 = arith.constant 0 : i32
    return %c0_i32, %c0_i32_0 : i32, i32
  }
  func.func @transform_14(%arg0: i32) -> (i32, i32) {
    %c0_i32 = arith.constant 0 : i32
    %c0_i32_0 = arith.constant 0 : i32
    %c0_i32_1 = arith.constant 0 : i32
    return %c0_i32, %c0_i32_0 : i32, i32
  }
  func.func @transform_15(%arg0: i32) -> (i32, i32) {
    %c0_i32 = arith.constant 0 : i32
    %c0_i32_0 = arith.constant 0 : i32
    %c0_i32_1 = arith.constant 0 : i32
    return %c0_i32, %c0_i32_0 : i32, i32
  }
  func.func @transform_16(%arg0: i32) -> (i32, i32) {
    %c0_i32 = arith.constant 0 : i32
    %c0_i32_0 = arith.constant 0 : i32
    %c0_i32_1 = arith.constant 0 : i32
    return %c0_i32, %c0_i32_0 : i32, i32
  }
  func.func @transform_17(%arg0: i32) -> (i32, i32) {
    %c0_i32 = arith.constant 0 : i32
    %c0_i32_0 = arith.constant 0 : i32
    %c0_i32_1 = arith.constant 0 : i32
    return %c0_i32, %c0_i32_0 : i32, i32
  }
  func.func @transform_18(%arg0: i32) -> (i32, i32) {
    %c0_i32 = arith.constant 0 : i32
    %c0_i32_0 = arith.constant 0 : i32
    %c0_i32_1 = arith.constant 0 : i32
    return %c0_i32, %c0_i32_0 : i32, i32
  }
  func.func @transform_19(%arg0: i32) -> (i32, i32) {
    %c0_i32 = arith.constant 0 : i32
    %c0_i32_0 = arith.constant 0 : i32
    %c0_i32_1 = arith.constant 0 : i32
    return %c0_i32, %c0_i32_0 : i32, i32
  }
  func.func @transform_20(%arg0: i32) -> (i32, i32, i32) {
    %c0_i32 = arith.constant 0 : i32
    %c0_i32_0 = arith.constant 0 : i32
    %c0_i32_1 = arith.constant 0 : i32
    return %arg0, %c0_i32, %c0_i32_0 : i32, i32, i32
  }
}

</mosaic_0001>

<llo_original>
// kernel: model_b_forward.1
$region0: #{model_b_forward.1}
  #allocation0 [shape = 'u32[]', space=smem, size = 0x4, offset = 0x4, fixed_abs, tag = 'smem constant byte address 0x4 - core index']
  #allocation1 [shape = 'u32[144,128]{1,0:T(1,128)}', space=vmem, size = 0x12000, scoped, tag = 'internal scratch']
  #allocation2 [shape = 'f32[1,1]{1,0:T(1,128)S(1)}', space=vmem, size = 0x200, scoped, tag = 'scoped memory for model_b_forward.1']
  #allocation3 [shape = 'f32[1,1]{1,0:T(1,128)S(1)}', space=vmem, size = 0x200, scoped, tag = 'scoped memory for model_b_forward.1']
  #allocation4 [shape = 'f32[1,1]{1,0:T(1,128)S(1)}', space=vmem, size = 0x200, scoped, tag = 'scoped memory for model_b_forward.1']
  %s0 = inlined_call_operand.vmem [shape: f32[2,16,16], index: 0, kind: input, shape index: {}]
  %s1 = inlined_call_operand.vmem [shape: f32[2,16,4], index: 1, kind: input, shape index: {}]
  %s2 = inlined_call_operand.vmem [shape: f32[4,32], index: 2, kind: input, shape index: {}]
  %s3 = inlined_call_operand.vmem [shape: f32[1,32], index: 3, kind: input, shape index: {}]
  %s4 = inlined_call_operand.vmem [shape: f32[32,1], index: 4, kind: input, shape index: {}]
  %s5 = inlined_call_operand.<no memory space> [shape: f32[1,1], index: 5, kind: input, shape index: {}]
  %s6 = inlined_call_operand.vmem [shape: f32[32,32], index: 6, kind: input, shape index: {}]
  %s7 = inlined_call_operand.vmem [shape: f32[1,32], index: 7, kind: input, shape index: {}]
  %s8 = inlined_call_operand.vmem [shape: f32[32,1], index: 8, kind: input, shape index: {}]
  %s9 = inlined_call_operand.<no memory space> [shape: f32[1,1], index: 9, kind: input, shape index: {}]
  %s10 = inlined_call_operand.vmem [shape: f32[32,32], index: 10, kind: input, shape index: {}]
  %s11 = inlined_call_operand.vmem [shape: f32[1,32], index: 11, kind: input, shape index: {}]
  %s12 = inlined_call_operand.vmem [shape: f32[32,1], index: 12, kind: input, shape index: {}]
  %s13 = inlined_call_operand.<no memory space> [shape: f32[1,1], index: 13, kind: input, shape index: {}]
  %s14 = inlined_call_operand.vmem [shape: f32[64,32], index: 14, kind: input, shape index: {}]
  %s15 = inlined_call_operand.vmem [shape: f32[1,32], index: 15, kind: input, shape index: {}]
  %s16 = inlined_call_operand.vmem [shape: f32[32,16], index: 16, kind: input, shape index: {}]
  %s17 = inlined_call_operand.vmem [shape: f32[1,16], index: 17, kind: input, shape index: {}]
  %s18 = inlined_call_operand.vmem [shape: f32[16,2], index: 18, kind: input, shape index: {}]
  %s19 = inlined_call_operand.vmem [shape: f32[1,2], index: 19, kind: input, shape index: {}]
  %s20 = inlined_call_operand.hbm [shape: f32[2,1,2], index: 20, kind: output, shape index: {}]
  %s21 = sld [smem:[#allocation0]]
  $region113: #{model_b_forward.1} parent=0
    _
  %s23 = ssub.s32 1, %s21
  %s24 = scalar_select 0, %s23, %s21
  %v25 = vstv %s5
  %26 = vst [vmem:[#allocation2] sm:$0x1] %v25
  %v27 = vstv %s9
  %28 = vst [vmem:[#allocation3] sm:$0x1] %v27
  %v29 = vstv %s13
  %30 = vst [vmem:[#allocation4] sm:$0x1] %v29
  $region1: #{model_b_forward.1} parent=0
    #allocation5 [shape = 'u8[1024]{0}', space=vmem, size = 0x400, scoped, tag = 'output window, operand 0']
    #allocation6 [shape = 's32[2]{0}', space=sflag, size = 0x8, scoped, tag = 'scoped memory for model_b_forward.1']
    %31 = vsyncpa [#allocation6], 0
    %s32 = scalar_lea.sflag [#allocation6], 1
    %33 = vsyncpa %s32, 0
    loop: start=0, step=1, limit=4
    $region2: #{model_b_forward.1} parent=1 // loop_pre_header
      _
    $region3: #{model_b_forward.1} parent=1 // loop_header
      %s35 = sphi 0, %s39
      %p36 = scmp.ge.s32.totalorder %s35, 4
      %s45 = sphi 0, %s47
      %s48 = sphi 0, %s45
      %s49 = sphi 0, %s48
      %s65 = sphi 0, %s49
      %s71 = sphi 0, %s73
      %s74 = sphi 0, %s71
      %s75 = sphi 0, %s74
      %s91 = sphi 0, %s75
      %s95 = sphi 0, %s95
      %s97 = sphi 0, %s95
      %s98 = sphi 0, %s97
      %s112 = sphi 0, %s98
      %s116 = sphi 0, %s116
      %s118 = sphi 0, %s116
      %s119 = sphi 0, %s118
      %s133 = sphi 0, %s119
      %s137 = sphi 0, %s137
      %s139 = sphi 0, %s137
      %s140 = sphi 0, %s139
      %s154 = sphi 0, %s140
      %s158 = sphi 0, %s158
      %s160 = sphi 0, %s158
      %s161 = sphi 0, %s160
      %s175 = sphi 0, %s161
      %s179 = sphi 0, %s179
      %s181 = sphi 0, %s179
      %s182 = sphi 0, %s181
      %s196 = sphi 0, %s182
      %s200 = sphi 0, %s200
      %s202 = sphi 0, %s200
      %s203 = sphi 0, %s202
      %s217 = sphi 0, %s203
      %s221 = sphi 0, %s221
      %s223 = sphi 0, %s221
      %s224 = sphi 0, %s223
      %s238 = sphi 0, %s224
      %s242 = sphi 0, %s242
      %s244 = sphi 0, %s242
      %s245 = sphi 0, %s244
      %s259 = sphi 0, %s245
      %s263 = sphi 0, %s263
      %s265 = sphi 0, %s263
      %s266 = sphi 0, %s265
      %s280 = sphi 0, %s266
      %s284 = sphi 0, %s284
      %s286 = sphi 0, %s284
      %s287 = sphi 0, %s286
      %s301 = sphi 0, %s287
      %s305 = sphi 0, %s305
      %s307 = sphi 0, %s305
      %s308 = sphi 0, %s307
      %s322 = sphi 0, %s308
      %s326 = sphi 0, %s326
      %s328 = sphi 0, %s326
      %s329 = sphi 0, %s328
      %s343 = sphi 0, %s329
      %s347 = sphi 0, %s347
      %s349 = sphi 0, %s347
      %s350 = sphi 0, %s349
      %s364 = sphi 0, %s350
      %s368 = sphi 0, %s368
      %s370 = sphi 0, %s368
      %s371 = sphi 0, %s370
      %s385 = sphi 0, %s371
      %s389 = sphi 0, %s389
      %s391 = sphi 0, %s389
      %s392 = sphi 0, %s391
      %s406 = sphi 0, %s392
      %s410 = sphi 0, %s410
      %s412 = sphi 0, %s410
      %s413 = sphi 0, %s412
      %s427 = sphi 0, %s413
      %s431 = sphi 0, %s431
      %s433 = sphi 0, %s431
      %s434 = sphi 0, %s433
      %s448 = sphi 0, %s434
      %s452 = sphi 0, %s452
      %s454 = sphi 0, %s452
      %s455 = sphi 0, %s454
      %s469 = sphi 0, %s455
      %s475 = sphi 0, %s477
      %s478 = sphi 0, %s475
      %s479 = sphi 0, %s478
      %s495 = sphi 0, %s479
    $region4: #{model_b_forward.1} parent=1 // loop_header_branch
      %38 = sbr.rel (%p36) target = $region8
    $region5: #{model_b_forward.1} parent=1 // loop_body
      %s40 = ssub.s32 %s35, 1
      %s41 = ssub.s32 %s35, 2
      %s42 = sadd.s32 %s35, 1
      %s43 = ssub.s32 %s35, %s42
      %p44 = scmp.eq.s32.totalorder %s43, 0
      %s46 = sadd.s32 %s45, 1
      %s47 = scalar_select %p44, %s45, %s46
      %p50 = pneg %p44
      %p51 = scmp.eq.s32.totalorder %s35, 1
      %p52 = por %p50, %p51
      %p53 = scmp.ne.s32.totalorder %s45, %s48
      %p54 = scmp.eq.s32.totalorder %s35, 0
      %p55 = por %p53, %p54
      %p56 = scmp.ne.s32.totalorder %s45, %s48
      %p57 = scmp.eq.s32.totalorder %s40, 1
      %p58 = por %p56, %p57
      %p59 = scmp.ne.s32.totalorder %s48, %s49
      %p60 = scmp.eq.s32.totalorder %s40, 0
      %p61 = por %p59, %p60
      %p62 = scmp.ne.s32.totalorder %s48, %s49
      %p63 = scmp.eq.s32.totalorder %s41, 1
      %p64 = por %p62, %p63
      %p66 = scmp.ne.s32.totalorder %s49, %s65
      %p67 = scmp.eq.s32.totalorder %s41, 0
      %p68 = por %p66, %p67
      %s69 = ssub.s32 %s35, %s42
      %p70 = scmp.eq.s32.totalorder %s69, 0
      %s72 = sadd.s32 %s71, 1
      %s73 = scalar_select %p70, %s71, %s72
      %p76 = pneg %p70
      %p77 = scmp.eq.s32.totalorder %s35, 1
      %p78 = por %p76, %p77
      %p79 = scmp.ne.s32.totalorder %s71, %s74
      %p80 = scmp.eq.s32.totalorder %s35, 0
      %p81 = por %p79, %p80
      %p82 = scmp.ne.s32.totalorder %s71, %s74
      %p83 = scmp.eq.s32.totalorder %s40, 1
      %p84 = por %p82, %p83
      %p85 = scmp.ne.s32.totalorder %s74, %s75
      %p86 = scmp.eq.s32.totalorder %s40, 0
      %p87 = por %p85, %p86
      %p88 = scmp.ne.s32.totalorder %s74, %s75
      %p89 = scmp.eq.s32.totalorder %s41, 1
      %p90 = por %p88, %p89
      %p92 = scmp.ne.s32.totalorder %s75, %s91
      %p93 = scmp.eq.s32.totalorder %s41, 0
      %p94 = por %p92, %p93
      %s96 = sadd.s32 %s95, 1
      %p99 = scmp.eq.s32.totalorder %s35, 1
      %p100 = scmp.ne.s32.totalorder %s95, %s97
      %p101 = scmp.eq.s32.totalorder %s35, 0
      %p102 = por %p100, %p101
      %p103 = scmp.ne.s32.totalorder %s95, %s97
      %p104 = scmp.eq.s32.totalorder %s40, 1
      %p105 = por %p103, %p104
      %p106 = scmp.ne.s32.totalorder %s97, %s98
      %p107 = scmp.eq.s32.totalorder %s40, 0
      %p108 = por %p106, %p107
      %p109 = scmp.ne.s32.totalorder %s97, %s98
      %p110 = scmp.eq.s32.totalorder %s41, 1
      %p111 = por %p109, %p110
      %p113 = scmp.ne.s32.totalorder %s98, %s112
      %p114 = scmp.eq.s32.totalorder %s41, 0
      %p115 = por %p113, %p114
      %s117 = sadd.s32 %s116, 1
      %p120 = scmp.eq.s32.totalorder %s35, 1
      %p121 = scmp.ne.s32.totalorder %s116, %s118
      %p122 = scmp.eq.s32.totalorder %s35, 0
      %p123 = por %p121, %p122
      %p124 = scmp.ne.s32.totalorder %s116, %s118
      %p125 = scmp.eq.s32.totalorder %s40, 1
      %p126 = por %p124, %p125
      %p127 = scmp.ne.s32.totalorder %s118, %s119
      %p128 = scmp.eq.s32.totalorder %s40, 0
      %p129 = por %p127, %p128
      %p130 = scmp.ne.s32.totalorder %s118, %s119
      %p131 = scmp.eq.s32.totalorder %s41, 1
      %p132 = por %p130, %p131
      %p134 = scmp.ne.s32.totalorder %s119, %s133
      %p135 = scmp.eq.s32.totalorder %s41, 0
      %p136 = por %p134, %p135
      %s138 = sadd.s32 %s137, 1
      %p141 = scmp.eq.s32.totalorder %s35, 1
      %p142 = scmp.ne.s32.totalorder %s137, %s139
      %p143 = scmp.eq.s32.totalorder %s35, 0
      %p144 = por %p142, %p143
      %p145 = scmp.ne.s32.totalorder %s137, %s139
      %p146 = scmp.eq.s32.totalorder %s40, 1
      %p147 = por %p145, %p146
      %p148 = scmp.ne.s32.totalorder %s139, %s140
      %p149 = scmp.eq.s32.totalorder %s40, 0
      %p150 = por %p148, %p149
      %p151 = scmp.ne.s32.totalorder %s139, %s140
      %p152 = scmp.eq.s32.totalorder %s41, 1
      %p153 = por %p151, %p152
      %p155 = scmp.ne.s32.totalorder %s140, %s154
      %p156 = scmp.eq.s32.totalorder %s41, 0
      %p157 = por %p155, %p156
      %s159 = sadd.s32 %s158, 1
      %p162 = scmp.eq.s32.totalorder %s35, 1
      %p163 = scmp.ne.s32.totalorder %s158, %s160
      %p164 = scmp.eq.s32.totalorder %s35, 0
      %p165 = por %p163, %p164
      %p166 = scmp.ne.s32.totalorder %s158, %s160
      %p167 = scmp.eq.s32.totalorder %s40, 1
      %p168 = por %p166, %p167
      %p169 = scmp.ne.s32.totalorder %s160, %s161
      %p170 = scmp.eq.s32.totalorder %s40, 0
      %p171 = por %p169, %p170
      %p172 = scmp.ne.s32.totalorder %s160, %s161
      %p173 = scmp.eq.s32.totalorder %s41, 1
      %p174 = por %p172, %p173
      %p176 = scmp.ne.s32.totalorder %s161, %s175
      %p177 = scmp.eq.s32.totalorder %s41, 0
      %p178 = por %p176, %p177
      %s180 = sadd.s32 %s179, 1
      %p183 = scmp.eq.s32.totalorder %s35, 1
      %p184 = scmp.ne.s32.totalorder %s179, %s181
      %p185 = scmp.eq.s32.totalorder %s35, 0
      %p186 = por %p184, %p185
      %p187 = scmp.ne.s32.totalorder %s179, %s181
      %p188 = scmp.eq.s32.totalorder %s40, 1
      %p189 = por %p187, %p188
      %p190 = scmp.ne.s32.totalorder %s181, %s182
      %p191 = scmp.eq.s32.totalorder %s40, 0
      %p192 = por %p190, %p191
      %p193 = scmp.ne.s32.totalorder %s181, %s182
      %p194 = scmp.eq.s32.totalorder %s41, 1
      %p195 = por %p193, %p194
      %p197 = scmp.ne.s32.totalorder %s182, %s196
      %p198 = scmp.eq.s32.totalorder %s41, 0
      %p199 = por %p197, %p198
      %s201 = sadd.s32 %s200, 1
      %p204 = scmp.eq.s32.totalorder %s35, 1
      %p205 = scmp.ne.s32.totalorder %s200, %s202
      %p206 = scmp.eq.s32.totalorder %s35, 0
      %p207 = por %p205, %p206
      %p208 = scmp.ne.s32.totalorder %s200, %s202
      %p209 = scmp.eq.s32.totalorder %s40, 1
      %p210 = por %p208, %p209
      %p211 = scmp.ne.s32.totalorder %s202, %s203
      %p212 = scmp.eq.s32.totalorder %s40, 0
      %p213 = por %p211, %p212
      %p214 = scmp.ne.s32.totalorder %s202, %s203
      %p215 = scmp.eq.s32.totalorder %s41, 1
      %p216 = por %p214, %p215
      %p218 = scmp.ne.s32.totalorder %s203, %s217
      %p219 = scmp.eq.s32.totalorder %s41, 0
      %p220 = por %p218, %p219
      %s222 = sadd.s32 %s221, 1
      %p225 = scmp.eq.s32.totalorder %s35, 1
      %p226 = scmp.ne.s32.totalorder %s221, %s223
      %p227 = scmp.eq.s32.totalorder %s35, 0
      %p228 = por %p226, %p227
      %p229 = scmp.ne.s32.totalorder %s221, %s223
      %p230 = scmp.eq.s32.totalorder %s40, 1
      %p231 = por %p229, %p230
      %p232 = scmp.ne.s32.totalorder %s223, %s224
      %p233 = scmp.eq.s32.totalorder %s40, 0
      %p234 = por %p232, %p233
      %p235 = scmp.ne.s32.totalorder %s223, %s224
      %p236 = scmp.eq.s32.totalorder %s41, 1
      %p237 = por %p235, %p236
      %p239 = scmp.ne.s32.totalorder %s224, %s238
      %p240 = scmp.eq.s32.totalorder %s41, 0
      %p241 = por %p239, %p240
      %s243 = sadd.s32 %s242, 1
      %p246 = scmp.eq.s32.totalorder %s35, 1
      %p247 = scmp.ne.s32.totalorder %s242, %s244
      %p248 = scmp.eq.s32.totalorder %s35, 0
      %p249 = por %p247, %p248
      %p250 = scmp.ne.s32.totalorder %s242, %s244
      %p251 = scmp.eq.s32.totalorder %s40, 1
      %p252 = por %p250, %p251
      %p253 = scmp.ne.s32.totalorder %s244, %s245
      %p254 = scmp.eq.s32.totalorder %s40, 0
      %p255 = por %p253, %p254
      %p256 = scmp.ne.s32.totalorder %s244, %s245
      %p257 = scmp.eq.s32.totalorder %s41, 1
      %p258 = por %p256, %p257
      %p260 = scmp.ne.s32.totalorder %s245, %s259
      %p261 = scmp.eq.s32.totalorder %s41, 0
      %p262 = por %p260, %p261
      %s264 = sadd.s32 %s263, 1
      %p267 = scmp.eq.s32.totalorder %s35, 1
      %p268 = scmp.ne.s32.totalorder %s263, %s265
      %p269 = scmp.eq.s32.totalorder %s35, 0
      %p270 = por %p268, %p269
      %p271 = scmp.ne.s32.totalorder %s263, %s265
      %p272 = scmp.eq.s32.totalorder %s40, 1
      %p273 = por %p271, %p272
      %p274 = scmp.ne.s32.totalorder %s265, %s266
      %p275 = scmp.eq.s32.totalorder %s40, 0
      %p276 = por %p274, %p275
      %p277 = scmp.ne.s32.totalorder %s265, %s266
      %p278 = scmp.eq.s32.totalorder %s41, 1
      %p279 = por %p277, %p278
      %p281 = scmp.ne.s32.totalorder %s266, %s280
      %p282 = scmp.eq.s32.totalorder %s41, 0
      %p283 = por %p281, %p282
      %s285 = sadd.s32 %s284, 1
      %p288 = scmp.eq.s32.totalorder %s35, 1
      %p289 = scmp.ne.s32.totalorder %s284, %s286
      %p290 = scmp.eq.s32.totalorder %s35, 0
      %p291 = por %p289, %p290
      %p292 = scmp.ne.s32.totalorder %s284, %s286
      %p293 = scmp.eq.s32.totalorder %s40, 1
      %p294 = por %p292, %p293
      %p295 = scmp.ne.s32.totalorder %s286, %s287
      %p296 = scmp.eq.s32.totalorder %s40, 0
      %p297 = por %p295, %p296
      %p298 = scmp.ne.s32.totalorder %s286, %s287
      %p299 = scmp.eq.s32.totalorder %s41, 1
      %p300 = por %p298, %p299
      %p302 = scmp.ne.s32.totalorder %s287, %s301
      %p303 = scmp.eq.s32.totalorder %s41, 0
      %p304 = por %p302, %p303
      %s306 = sadd.s32 %s305, 1
      %p309 = scmp.eq.s32.totalorder %s35, 1
      %p310 = scmp.ne.s32.totalorder %s305, %s307
      %p311 = scmp.eq.s32.totalorder %s35, 0
      %p312 = por %p310, %p311
      %p313 = scmp.ne.s32.totalorder %s305, %s307
      %p314 = scmp.eq.s32.totalorder %s40, 1
      %p315 = por %p313, %p314
      %p316 = scmp.ne.s32.totalorder %s307, %s308
      %p317 = scmp.eq.s32.totalorder %s40, 0
      %p318 = por %p316, %p317
      %p319 = scmp.ne.s32.totalorder %s307, %s308
      %p320 = scmp.eq.s32.totalorder %s41, 1
      %p321 = por %p319, %p320
      %p323 = scmp.ne.s32.totalorder %s308, %s322
      %p324 = scmp.eq.s32.totalorder %s41, 0
      %p325 = por %p323, %p324
      %s327 = sadd.s32 %s326, 1
      %p330 = scmp.eq.s32.totalorder %s35, 1
      %p331 = scmp.ne.s32.totalorder %s326, %s328
      %p332 = scmp.eq.s32.totalorder %s35, 0
      %p333 = por %p331, %p332
      %p334 = scmp.ne.s32.totalorder %s326, %s328
      %p335 = scmp.eq.s32.totalorder %s40, 1
      %p336 = por %p334, %p335
      %p337 = scmp.ne.s32.totalorder %s328, %s329
      %p338 = scmp.eq.s32.totalorder %s40, 0
      %p339 = por %p337, %p338
      %p340 = scmp.ne.s32.totalorder %s328, %s329
      %p341 = scmp.eq.s32.totalorder %s41, 1
      %p342 = por %p340, %p341
      %p344 = scmp.ne.s32.totalorder %s329, %s343
      %p345 = scmp.eq.s32.totalorder %s41, 0
      %p346 = por %p344, %p345
      %s348 = sadd.s32 %s347, 1
      %p351 = scmp.eq.s32.totalorder %s35, 1
      %p352 = scmp.ne.s32.totalorder %s347, %s349
      %p353 = scmp.eq.s32.totalorder %s35, 0
      %p354 = por %p352, %p353
      %p355 = scmp.ne.s32.totalorder %s347, %s349
      %p356 = scmp.eq.s32.totalorder %s40, 1
      %p357 = por %p355, %p356
      %p358 = scmp.ne.s32.totalorder %s349, %s350
      %p359 = scmp.eq.s32.totalorder %s40, 0
      %p360 = por %p358, %p359
      %p361 = scmp.ne.s32.totalorder %s349, %s350
      %p362 = scmp.eq.s32.totalorder %s41, 1
      %p363 = por %p361, %p362
      %p365 = scmp.ne.s32.totalorder %s350, %s364
      %p366 = scmp.eq.s32.totalorder %s41, 0
      %p367 = por %p365, %p366
      %s369 = sadd.s32 %s368, 1
      %p372 = scmp.eq.s32.totalorder %s35, 1
      %p373 = scmp.ne.s32.totalorder %s368, %s370
      %p374 = scmp.eq.s32.totalorder %s35, 0
      %p375 = por %p373, %p374
      %p376 = scmp.ne.s32.totalorder %s368, %s370
      %p377 = scmp.eq.s32.totalorder %s40, 1
      %p378 = por %p376, %p377
      %p379 = scmp.ne.s32.totalorder %s370, %s371
      %p380 = scmp.eq.s32.totalorder %s40, 0
      %p381 = por %p379, %p380
      %p382 = scmp.ne.s32.totalorder %s370, %s371
      %p383 = scmp.eq.s32.totalorder %s41, 1
      %p384 = por %p382, %p383
      %p386 = scmp.ne.s32.totalorder %s371, %s385
      %p387 = scmp.eq.s32.totalorder %s41, 0
      %p388 = por %p386, %p387
      %s390 = sadd.s32 %s389, 1
      %p393 = scmp.eq.s32.totalorder %s35, 1
      %p394 = scmp.ne.s32.totalorder %s389, %s391
      %p395 = scmp.eq.s32.totalorder %s35, 0
      %p396 = por %p394, %p395
      %p397 = scmp.ne.s32.totalorder %s389, %s391
      %p398 = scmp.eq.s32.totalorder %s40, 1
      %p399 = por %p397, %p398
      %p400 = scmp.ne.s32.totalorder %s391, %s392
      %p401 = scmp.eq.s32.totalorder %s40, 0
      %p402 = por %p400, %p401
      %p403 = scmp.ne.s32.totalorder %s391, %s392
      %p404 = scmp.eq.s32.totalorder %s41, 1
      %p405 = por %p403, %p404
      %p407 = scmp.ne.s32.totalorder %s392, %s406
      %p408 = scmp.eq.s32.totalorder %s41, 0
      %p409 = por %p407, %p408
      %s411 = sadd.s32 %s410, 1
      %p414 = scmp.eq.s32.totalorder %s35, 1
      %p415 = scmp.ne.s32.totalorder %s410, %s412
      %p416 = scmp.eq.s32.totalorder %s35, 0
      %p417 = por %p415, %p416
      %p418 = scmp.ne.s32.totalorder %s410, %s412
      %p419 = scmp.eq.s32.totalorder %s40, 1
      %p420 = por %p418, %p419
      %p421 = scmp.ne.s32.totalorder %s412, %s413
      %p422 = scmp.eq.s32.totalorder %s40, 0
      %p423 = por %p421, %p422
      %p424 = scmp.ne.s32.totalorder %s412, %s413
      %p425 = scmp.eq.s32.totalorder %s41, 1
      %p426 = por %p424, %p425
      %p428 = scmp.ne.s32.totalorder %s413, %s427
      %p429 = scmp.eq.s32.totalorder %s41, 0
      %p430 = por %p428, %p429
      %s432 = sadd.s32 %s431, 1
      %p435 = scmp.eq.s32.totalorder %s35, 1
      %p436 = scmp.ne.s32.totalorder %s431, %s433
      %p437 = scmp.eq.s32.totalorder %s35, 0
      %p438 = por %p436, %p437
      %p439 = scmp.ne.s32.totalorder %s431, %s433
      %p440 = scmp.eq.s32.totalorder %s40, 1
      %p441 = por %p439, %p440
      %p442 = scmp.ne.s32.totalorder %s433, %s434
      %p443 = scmp.eq.s32.totalorder %s40, 0
      %p444 = por %p442, %p443
      %p445 = scmp.ne.s32.totalorder %s433, %s434
      %p446 = scmp.eq.s32.totalorder %s41, 1
      %p447 = por %p445, %p446
      %p449 = scmp.ne.s32.totalorder %s434, %s448
      %p450 = scmp.eq.s32.totalorder %s41, 0
      %p451 = por %p449, %p450
      %s453 = sadd.s32 %s452, 1
      %p456 = scmp.eq.s32.totalorder %s35, 1
      %p457 = scmp.ne.s32.totalorder %s452, %s454
      %p458 = scmp.eq.s32.totalorder %s35, 0
      %p459 = por %p457, %p458
      %p460 = scmp.ne.s32.totalorder %s452, %s454
      %p461 = scmp.eq.s32.totalorder %s40, 1
      %p462 = por %p460, %p461
      %p463 = scmp.ne.s32.totalorder %s454, %s455
      %p464 = scmp.eq.s32.totalorder %s40, 0
      %p465 = por %p463, %p464
      %p466 = scmp.ne.s32.totalorder %s454, %s455
      %p467 = scmp.eq.s32.totalorder %s41, 1
      %p468 = por %p466, %p467
      %p470 = scmp.ne.s32.totalorder %s455, %s469
      %p471 = scmp.eq.s32.totalorder %s41, 0
      %p472 = por %p470, %p471
      %s473 = ssub.s32 %s35, %s42
      %p474 = scmp.eq.s32.totalorder %s473, 0
      %s476 = sadd.s32 %s475, 1
      %s477 = scalar_select %p474, %s475, %s476
      %p480 = pneg %p474
      %p481 = scmp.eq.s32.totalorder %s35, 1
      %p482 = por %p480, %p481
      %p483 = scmp.ne.s32.totalorder %s475, %s478
      %p484 = scmp.eq.s32.totalorder %s35, 0
      %p485 = por %p483, %p484
      %p486 = scmp.ne.s32.totalorder %s475, %s478
      %p487 = scmp.eq.s32.totalorder %s40, 1
      %p488 = por %p486, %p487
      %p489 = scmp.ne.s32.totalorder %s478, %s479
      %p490 = scmp.eq.s32.totalorder %s40, 0
      %p491 = por %p489, %p490
      %p492 = scmp.ne.s32.totalorder %s478, %s479
      %p493 = scmp.eq.s32.totalorder %s41, 1
      %p494 = por %p492, %p493
      %p496 = scmp.ne.s32.totalorder %s479, %s495
      %p497 = scmp.eq.s32.totalorder %s41, 0
      %p498 = por %p496, %p497
      %p499 = scmp.le.s32.totalorder 1, %s35
      %p500 = scmp.lt.s32.totalorder %s35, 3
      %p501 = pnand %p499, %p500
      %p502 = pneg %p501
      // Predicated region
      $region9: #{model_b_forward.1} parent=5 // pred_check
        _
      $region10: #{model_b_forward.1} parent=5 // pred_check_branch
        %504 = sbr.rel (%p501) target = $region12
      $region11: #{model_b_forward.1} parent=5 // pred_region
        %s505 = ssub.s32 %s35, 1
        // Predicated region
        $region13: #{model_b_forward.1} parent=11 // pred_check
          %p506 = pneg %p108
        $region14: #{model_b_forward.1} parent=11 // pred_check_branch
          %508 = sbr.rel (%p506) target = $region16
        $region15: #{model_b_forward.1} parent=11 // pred_region
          _
        $region16: #{model_b_forward.1} parent=11 // pred_fallthru
          _
        // Predicated region
        $region17: #{model_b_forward.1} parent=11 // pred_check
          %p509 = pneg %p129
        $region18: #{model_b_forward.1} parent=11 // pred_check_branch
          %511 = sbr.rel (%p509) target = $region20
        $region19: #{model_b_forward.1} parent=11 // pred_region
          _
        $region20: #{model_b_forward.1} parent=11 // pred_fallthru
          _
        // Predicated region
        $region21: #{model_b_forward.1} parent=11 // pred_check
          %p512 = pneg %p150
        $region22: #{model_b_forward.1} parent=11 // pred_check_branch
          %514 = sbr.rel (%p512) target = $region24
        $region23: #{model_b_forward.1} parent=11 // pred_region
          _
        $region24: #{model_b_forward.1} parent=11 // pred_fallthru
          _
        // Predicated region
        $region25: #{model_b_forward.1} parent=11 // pred_check
          %p515 = pneg %p171
        $region26: #{model_b_forward.1} parent=11 // pred_check_branch
          %517 = sbr.rel (%p515) target = $region28
        $region27: #{model_b_forward.1} parent=11 // pred_region
          _
        $region28: #{model_b_forward.1} parent=11 // pred_fallthru
          _
        // Predicated region
        $region29: #{model_b_forward.1} parent=11 // pred_check
          %p518 = pneg %p192
        $region30: #{model_b_forward.1} parent=11 // pred_check_branch
          %520 = sbr.rel (%p518) target = $region32
        $region31: #{model_b_forward.1} parent=11 // pred_region
          _
        $region32: #{model_b_forward.1} parent=11 // pred_fallthru
          _
        // Predicated region
        $region33: #{model_b_forward.1} parent=11 // pred_check
          %p521 = pneg %p213
        $region34: #{model_b_forward.1} parent=11 // pred_check_branch
          %523 = sbr.rel (%p521) target = $region36
        $region35: #{model_b_forward.1} parent=11 // pred_region
          _
        $region36: #{model_b_forward.1} parent=11 // pred_fallthru
          _
        // Predicated region
        $region37: #{model_b_forward.1} parent=11 // pred_check
          %p524 = pneg %p234
        $region38: #{model_b_forward.1} parent=11 // pred_check_branch
          %526 = sbr.rel (%p524) target = $region40
        $region39: #{model_b_forward.1} parent=11 // pred_region
          _
        $region40: #{model_b_forward.1} parent=11 // pred_fallthru
          _
        // Predicated region
        $region41: #{model_b_forward.1} parent=11 // pred_check
          %p527 = pneg %p255
        $region42: #{model_b_forward.1} parent=11 // pred_check_branch
          %529 = sbr.rel (%p527) target = $region44
        $region43: #{model_b_forward.1} parent=11 // pred_region
          _
        $region44: #{model_b_forward.1} parent=11 // pred_fallthru
          _
        // Predicated region
        $region45: #{model_b_forward.1} parent=11 // pred_check
          %p530 = pneg %p276
        $region46: #{model_b_forward.1} parent=11 // pred_check_branch
          %532 = sbr.rel (%p530) target = $region48
        $region47: #{model_b_forward.1} parent=11 // pred_region
          _
        $region48: #{model_b_forward.1} parent=11 // pred_fallthru
          _
        // Predicated region
        $region49: #{model_b_forward.1} parent=11 // pred_check
          %p533 = pneg %p297
        $region50: #{model_b_forward.1} parent=11 // pred_check_branch
          %535 = sbr.rel (%p533) target = $region52
        $region51: #{model_b_forward.1} parent=11 // pred_region
          _
        $region52: #{model_b_forward.1} parent=11 // pred_fallthru
          _
        // Predicated region
        $region53: #{model_b_forward.1} parent=11 // pred_check
          %p536 = pneg %p318
        $region54: #{model_b_forward.1} parent=11 // pred_check_branch
          %538 = sbr.rel (%p536) target = $region56
        $region55: #{model_b_forward.1} parent=11 // pred_region
          _
        $region56: #{model_b_forward.1} parent=11 // pred_fallthru
          _
        // Predicated region
        $region57: #{model_b_forward.1} parent=11 // pred_check
          %p539 = pneg %p339
        $region58: #{model_b_forward.1} parent=11 // pred_check_branch
          %541 = sbr.rel (%p539) target = $region60
        $region59: #{model_b_forward.1} parent=11 // pred_region
          _
        $region60: #{model_b_forward.1} parent=11 // pred_fallthru
          _
        // Predicated region
        $region61: #{model_b_forward.1} parent=11 // pred_check
          %p542 = pneg %p360
        $region62: #{model_b_forward.1} parent=11 // pred_check_branch
          %544 = sbr.rel (%p542) target = $region64
        $region63: #{model_b_forward.1} parent=11 // pred_region
          _
        $region64: #{model_b_forward.1} parent=11 // pred_fallthru
          _
        // Predicated region
        $region65: #{model_b_forward.1} parent=11 // pred_check
          %p545 = pneg %p381
        $region66: #{model_b_forward.1} parent=11 // pred_check_branch
          %547 = sbr.rel (%p545) target = $region68
        $region67: #{model_b_forward.1} parent=11 // pred_region
          _
        $region68: #{model_b_forward.1} parent=11 // pred_fallthru
          _
        // Predicated region
        $region69: #{model_b_forward.1} parent=11 // pred_check
          %p548 = pneg %p402
        $region70: #{model_b_forward.1} parent=11 // pred_check_branch
          %550 = sbr.rel (%p548) target = $region72
        $region71: #{model_b_forward.1} parent=11 // pred_region
          _
        $region72: #{model_b_forward.1} parent=11 // pred_fallthru
          _
        // Predicated region
        $region73: #{model_b_forward.1} parent=11 // pred_check
          %p551 = pneg %p423
        $region74: #{model_b_forward.1} parent=11 // pred_check_branch
          %553 = sbr.rel (%p551) target = $region76
        $region75: #{model_b_forward.1} parent=11 // pred_region
          _
        $region76: #{model_b_forward.1} parent=11 // pred_fallthru
          _
        // Predicated region
        $region77: #{model_b_forward.1} parent=11 // pred_check
          %p554 = pneg %p444
        $region78: #{model_b_forward.1} parent=11 // pred_check_branch
          %556 = sbr.rel (%p554) target = $region80
        $region79: #{model_b_forward.1} parent=11 // pred_region
          _
        $region80: #{model_b_forward.1} parent=11 // pred_fallthru
          _
        // Predicated region
        $region81: #{model_b_forward.1} parent=11 // pred_check
          %p557 = pneg %p465
        $region82: #{model_b_forward.1} parent=11 // pred_check_branch
          %559 = sbr.rel (%p557) target = $region84
        $region83: #{model_b_forward.1} parent=11 // pred_region
          _
        $region84: #{model_b_forward.1} parent=11 // pred_fallthru
          _
      $region12: #{model_b_forward.1} parent=5 // pred_fallthru
        _
      %p560 = scmp.lt.s32.totalorder %s35, 2
      // Predicated region
      $region85: #{model_b_forward.1} parent=5 // pred_check
        %p561 = pneg %p560
      $region86: #{model_b_forward.1} parent=5 // pred_check_branch
        %563 = sbr.rel (%p561) target = $region88
      $region87: #{model_b_forward.1} parent=5 // pred_region
        // Predicated region
        $region89: #{model_b_forward.1} parent=87 // pred_check
          %p564 = pneg %p55
        $region90: #{model_b_forward.1} parent=87 // pred_check_branch
          %566 = sbr.rel (%p564) target = $region92
        $region91: #{model_b_forward.1} parent=87 // pred_region
          %p567 = scmp.lt.s32.totalorder %s35, 1
          %s568 = scalar_select %p567, %s35, 1
          %s569 = smul.addr %s568, 2
          %s570 = smul.addr %s569, 8
          %s571 = scalar_lea.vmem %s0, %s570
        $region92: #{model_b_forward.1} parent=87 // pred_fallthru
          _
        // Predicated region
        $region93: #{model_b_forward.1} parent=87 // pred_check
          %p572 = pneg %p81
        $region94: #{model_b_forward.1} parent=87 // pred_check_branch
          %574 = sbr.rel (%p572) target = $region96
        $region95: #{model_b_forward.1} parent=87 // pred_region
          %p575 = scmp.lt.s32.totalorder %s35, 1
          %s576 = scalar_select %p575, %s35, 1
          %s577 = smul.addr %s576, 2
          %s578 = smul.addr %s577, 8
          %s579 = scalar_lea.vmem %s1, %s578
        $region96: #{model_b_forward.1} parent=87 // pred_fallthru
          _
      $region88: #{model_b_forward.1} parent=5 // pred_fallthru
        _
      %p580 = scmp.le.s32.totalorder 1, %s35
      %p581 = scmp.lt.s32.totalorder %s35, 3
      %p582 = pnand %p580, %p581
      %p583 = pneg %p582
      // Predicated region
      $region97: #{model_b_forward.1} parent=5 // pred_check
        _
      $region98: #{model_b_forward.1} parent=5 // pred_check_branch
        %585 = sbr.rel (%p582) target = $region100
      $region99: #{model_b_forward.1} parent=5 // pred_region
        %s586 = ssub.s32 %s35, 1
        %p587 = scmp.lt.s32.totalorder %s40, 1
        %s588 = scalar_select %p587, %s40, 1
        %s589 = smul.addr %s588, 2
        %s590 = smul.addr %s589, 8
        %s591 = scalar_lea.vmem %s0, %s590
        %p592 = pneg %p61
        %p593 = pneg %p58
        %p594 = scmp.lt.s32.totalorder %s40, 1
        %s595 = scalar_select %p594, %s40, 1
        %s596 = smul.addr %s595, 2
        %s597 = smul.addr %s596, 8
        %s598 = scalar_lea.vmem %s1, %s597
        %p599 = pneg %p87
        %p600 = pneg %p84
        %p601 = pneg %p108
        %p602 = pneg %p105
        %p603 = pneg %p129
        %p604 = pneg %p126
        %p605 = pneg %p150
        %p606 = pneg %p147
        %p607 = pneg %p171
        %p608 = pneg %p168
        %p609 = pneg %p192
        %p610 = pneg %p189
        %p611 = pneg %p213
        %p612 = pneg %p210
        %p613 = pneg %p234
        %p614 = pneg %p231
        %p615 = pneg %p255
        %p616 = pneg %p252
        %p617 = pneg %p276
        %p618 = pneg %p273
        %p619 = pneg %p297
        %p620 = pneg %p294
        %p621 = pneg %p318
        %p622 = pneg %p315
        %p623 = pneg %p339
        %p624 = pneg %p336
        %p625 = pneg %p360
        %p626 = pneg %p357
        %p627 = pneg %p381
        %p628 = pneg %p378
        %p629 = pneg %p402
        %p630 = pneg %p399
        %p631 = pneg %p423
        %p632 = pneg %p420
        %p633 = pneg %p444
        %p634 = pneg %p441
        %p635 = pneg %p465
        %p636 = pneg %p462
        %p637 = pneg %p491
        %p638 = pneg %p488
        %s639 = sand.u32 %s478, 1
        %s640 = scalar_lea.sflag [#allocation6], %s639
        %s641 = sand.u32 %s478, 1
        %s642 = scalar_lea.vmem [#allocation5], %s641
        %p643 = scmp.lt.s32.totalorder %s40, 1
        %s644 = scalar_select %p643, %s40, 1
        %s645 = smul.addr %s644, 2
        %s646 = smul.addr %s645, 8
        %s647 = scalar_lea.vmem %s0, %s646
        %p648 = scmp.lt.s32.totalorder %s40, 1
        %s649 = scalar_select %p648, %s40, 1
        %s650 = smul.addr %s649, 2
        %s651 = smul.addr %s650, 8
        %s652 = scalar_lea.vmem %s1, %s651
        %v653 = vld [vmem:[%s647] sm:$0xff]
        %v654 = vld [vmem:[%s647 + $0x8] sm:$0xff]
        %v655 = vld [vmem:[%s652] sm:$0xff]
        %v656 = vld [vmem:[%s652 + $0x8] sm:$0xff]
        %v657 = vld [vmem:[%s2] sm:$0xf]
        %v658 = vld [vmem:[%s3] sm:$0x1]
        %v659 = vld [vmem:[%s4] sm:$0xff]
        %v660 = vld [vmem:[%s4 + $0x8] sm:$0xff]
        %v661 = vld [vmem:[%s4 + $0x10] sm:$0xff]
        %v662 = vld [vmem:[%s4 + $0x18] sm:$0xff]
        %v663 = vld [vmem:[#allocation2] sm:$0x1]
        %vm664 = vcmask 31744
        %v666 = vsel %vm664, %v655, 0
        %v669 = vsel %vm664, %v656, 0
        %vm671 = vcmask 1043456
        %v673 = vsel %vm671, %v657, 0
        %675 = vmatprep.subr.mxu0 0.0
        %676 = vmatpush1.msra.mxu0 %v673
        %677 = vmatprep.subr.mxu0 0.0
        %678 = vmatpush1.msra.mxu0 0.0
        %679 = vmatprep.subr.mxu0 0.0
        %680 = vmatpush1.msra.mxu0 0.0
        %681 = vmatprep.subr.mxu0 0.0
        %682 = vmatpush1.msra.mxu0 0.0
        %683 = vmatprep.subr.mxu0 0.0
        %684 = vmatpush1.msra.mxu0 0.0
        %685 = vmatprep.subr.mxu0 0.0
        %686 = vmatpush1.msra.mxu0 0.0
        %687 = vmatprep.subr.mxu0 0.0
        %688 = vmatpush1.msra.mxu0 0.0
        %689 = vmatprep.subr.mxu0 0.0
        %690 = vmatpush1.msra.mxu0 0.0
        %691 = vmatprep.subr.mxu0 0.0
        %692 = vmatpush1.msra.mxu0 0.0
        %693 = vmatprep.subr.mxu0 0.0
        %694 = vmatpush1.msra.mxu0 0.0
        %695 = vmatprep.subr.mxu0 0.0
        %696 = vmatpush1.msra.mxu0 0.0
        %697 = vmatprep.subr.mxu0 0.0
        %698 = vmatpush1.msra.mxu0 0.0
        %699 = vmatprep.subr.mxu0 0.0
        %700 = vmatpush1.msra.mxu0 0.0
        %701 = vmatprep.subr.mxu0 0.0
        %702 = vmatpush1.msra.mxu0 0.0
        %703 = vmatprep.subr.mxu0 0.0
        %704 = vmatpush1.msra.mxu0 0.0
        %705 = vmatprep.subr.mxu0 0.0
        %706 = vmatpush1.msra.mxu0 0.0
        %707 = vmatprep.subr.mxu0 0.0
        %708 = vmatpush1.msra.mxu0 0.0
        %709 = vmatprep.subr.mxu0 0.0
        %710 = vmatpush1.msra.mxu0 0.0
        %711 = vmatprep.subr.mxu0 0.0
        %712 = vmatpush1.msra.mxu0 0.0
        %713 = vmatprep.subr.mxu0 0.0
        %714 = vmatpush1.msra.mxu0 0.0
        %715 = vmatprep.subr.mxu0 0.0
        %716 = vmatpush1.msra.mxu0 0.0
        %717 = vmatprep.subr.mxu0 0.0
        %718 = vmatpush1.msra.mxu0 0.0
        %719 = vmatprep.subr.mxu0 0.0
        %720 = vmatpush1.msra.mxu0 0.0
        %721 = vmatprep.subr.mxu0 0.0
        %722 = vmatpush1.msra.mxu0 0.0
        %723 = vmatprep.subr.mxu0 0.0
        %724 = vmatpush1.msra.mxu0 0.0
        %725 = vmatprep.subr.mxu0 0.0
        %726 = vmatpush1.msra.mxu0 0.0
        %727 = vmatprep.subr.mxu0 0.0
        %728 = vmatpush1.msra.mxu0 0.0
        %729 = vmatprep.subr.mxu0 0.0
        %730 = vmatpush1.msra.mxu0 0.0
        %731 = vmatprep.subr.mxu0 0.0
        %732 = vmatpush1.msra.mxu0 0.0
        %733 = vmatprep.subr.mxu0 0.0
        %734 = vmatpush1.msra.mxu0 0.0
        %735 = vmatprep.subr.mxu0 0.0
        %736 = vmatpush1.msra.mxu0 0.0
        %737 = vmatprep.subr.mxu0 0.0
        %738 = vmatpush1.msra.mxu0 0.0
        %739 = vmatprep.mubr.f32.mxu0 0.0
        %740 = vmatmul.mubr.f32.gmra.mrb[0].mxu0 %v666
        %v741 = vpop.f32.mrb[0].mxu0
        %v742 = vadd.f32 0.0, %v741
        %v743 = vpop.f32.mrb[0].mxu0
        %744 = vmatprep.mubr.f32.mxu0 0.0
        %745 = vmatmul.mubr.f32.gmra.mrb[0].mxu0 %v669
        %v746 = vpop.f32.mrb[0].mxu0
        %v747 = vadd.f32 0.0, %v746
        %v748 = vpop.f32.mrb[0].mxu0
        %749 = vdwg.mxu0
        %v751 = vlaneseq
        %v752 = vshrl.u32 %v751, 7
        %v753 = vsub.s32 0, %v752
        %v754 = vrot.slane %v658, %v753
        %vm756 = vcmask 130048
        %v758 = vsel %vm756, %v653, 0
        %v761 = vsel %vm756, %v654, 0
        %763 = vmatprep.subr.mxu0 0.0
        %764 = vmatpush1.msra.mxu0 %v742
        %765 = vmatprep.subr.mxu0 0.0
        %766 = vmatpush1.msra.mxu0 %v747
        %767 = vmatprep.subr.mxu0 0.0
        %768 = vmatpush1.msra.mxu0 0.0
        %769 = vmatprep.subr.mxu0 0.0
        %770 = vmatpush1.msra.mxu0 0.0
        %771 = vmatprep.subr.mxu0 0.0
        %772 = vmatpush1.msra.mxu0 0.0
        %773 = vmatprep.subr.mxu0 0.0
        %774 = vmatpush1.msra.mxu0 0.0
        %775 = vmatprep.subr.mxu0 0.0
        %776 = vmatpush1.msra.mxu0 0.0
        %777 = vmatprep.subr.mxu0 0.0
        %778 = vmatpush1.msra.mxu0 0.0
        %779 = vmatprep.subr.mxu0 0.0
        %780 = vmatpush1.msra.mxu0 0.0
        %781 = vmatprep.subr.mxu0 0.0
        %782 = vmatpush1.msra.mxu0 0.0
        %783 = vmatprep.subr.mxu0 0.0
        %784 = vmatpush1.msra.mxu0 0.0
        %785 = vmatprep.subr.mxu0 0.0
        %786 = vmatpush1.msra.mxu0 0.0
        %787 = vmatprep.subr.mxu0 0.0
        %788 = vmatpush1.msra.mxu0 0.0
        %789 = vmatprep.subr.mxu0 0.0
        %790 = vmatpush1.msra.mxu0 0.0
        %791 = vmatprep.subr.mxu0 0.0
        %792 = vmatpush1.msra.mxu0 0.0
        %793 = vmatprep.subr.mxu0 0.0
        %794 = vmatpush1.msra.mxu0 0.0
        %795 = vmatprep.subr.mxu0 0.0
        %796 = vmatpush1.msra.mxu0 0.0
        %797 = vmatprep.subr.mxu0 0.0
        %798 = vmatpush1.msra.mxu0 0.0
        %799 = vmatprep.subr.mxu0 0.0
        %800 = vmatpush1.msra.mxu0 0.0
        %801 = vmatprep.subr.mxu0 0.0
        %802 = vmatpush1.msra.mxu0 0.0
        %803 = vmatprep.subr.mxu0 0.0
        %804 = vmatpush1.msra.mxu0 0.0
        %805 = vmatprep.subr.mxu0 0.0
        %806 = vmatpush1.msra.mxu0 0.0
        %807 = vmatprep.subr.mxu0 0.0
        %808 = vmatpush1.msra.mxu0 0.0
        %809 = vmatprep.subr.mxu0 0.0
        %810 = vmatpush1.msra.mxu0 0.0
        %811 = vmatprep.subr.mxu0 0.0
        %812 = vmatpush1.msra.mxu0 0.0
        %813 = vmatprep.subr.mxu0 0.0
        %814 = vmatpush1.msra.mxu0 0.0
        %815 = vmatprep.subr.mxu0 0.0
        %816 = vmatpush1.msra.mxu0 0.0
        %817 = vmatprep.subr.mxu0 0.0
        %818 = vmatpush1.msra.mxu0 0.0
        %819 = vmatprep.subr.mxu0 0.0
        %820 = vmatpush1.msra.mxu0 0.0
        %821 = vmatprep.subr.mxu0 0.0
        %822 = vmatpush1.msra.mxu0 0.0
        %823 = vmatprep.subr.mxu0 0.0
        %824 = vmatpush1.msra.mxu0 0.0
        %825 = vmatprep.subr.mxu0 0.0
        %826 = vmatpush1.msra.mxu0 0.0
        %827 = vmatprep.mubr.f32.mxu0 0.0
        %828 = vmatmul.mubr.f32.gmra.mrb[0].mxu0 %v758
        %v829 = vpop.f32.mrb[0].mxu0
        %v830 = vadd.f32 %v754, %v829
        %v831 = vpop.f32.mrb[0].mxu0
        %832 = vmatprep.mubr.f32.mxu0 0.0
        %833 = vmatmul.mubr.f32.gmra.mrb[0].mxu0 %v761
        %v834 = vpop.f32.mrb[0].mxu0
        %v835 = vadd.f32 %v754, %v834
        %v836 = vpop.f32.mrb[0].mxu0
        %837 = vdwg.mxu0
        %v838 = vmax.f32 %v830, 0.0
        %v839 = vmax.f32 %v835, 0.0
        %vm840 = vcmask 261120
        %v842 = vsel %vm840, %v838, 0
        %v845 = vsel %vm840, %v839, 0
        %847 = vmatprep.subr.mxu0 0.0
        %848 = vmatpush1.msra.mxu0 %v659
        %849 = vmatprep.subr.mxu0 0.0
        %850 = vmatpush1.msra.mxu0 %v660
        %851 = vmatprep.subr.mxu0 0.0
        %852 = vmatpush1.msra.mxu0 %v661
        %853 = vmatprep.subr.mxu0 0.0
        %854 = vmatpush1.msra.mxu0 %v662
        %855 = vmatprep.subr.mxu0 0.0
        %856 = vmatpush1.msra.mxu0 0.0
        %857 = vmatprep.subr.mxu0 0.0
        %858 = vmatpush1.msra.mxu0 0.0
        %859 = vmatprep.subr.mxu0 0.0
        %860 = vmatpush1.msra.mxu0 0.0
        %861 = vmatprep.subr.mxu0 0.0
        %862 = vmatpush1.msra.mxu0 0.0
        %863 = vmatprep.subr.mxu0 0.0
        %864 = vmatpush1.msra.mxu0 0.0
        %865 = vmatprep.subr.mxu0 0.0
        %866 = vmatpush1.msra.mxu0 0.0
        %867 = vmatprep.subr.mxu0 0.0
        %868 = vmatpush1.msra.mxu0 0.0
        %869 = vmatprep.subr.mxu0 0.0
        %870 = vmatpush1.msra.mxu0 0.0
        %871 = vmatprep.subr.mxu0 0.0
        %872 = vmatpush1.msra.mxu0 0.0
        %873 = vmatprep.subr.mxu0 0.0
        %874 = vmatpush1.msra.mxu0 0.0
        %875 = vmatprep.subr.mxu0 0.0
        %876 = vmatpush1.msra.mxu0 0.0
        %877 = vmatprep.subr.mxu0 0.0
        %878 = vmatpush1.msra.mxu0 0.0
        %879 = vmatprep.subr.mxu0 0.0
        %880 = vmatpush1.msra.mxu0 0.0
        %881 = vmatprep.subr.mxu0 0.0
        %882 = vmatpush1.msra.mxu0 0.0
        %883 = vmatprep.subr.mxu0 0.0
        %884 = vmatpush1.msra.mxu0 0.0
        %885 = vmatprep.subr.mxu0 0.0
        %886 = vmatpush1.msra.mxu0 0.0
        %887 = vmatprep.subr.mxu0 0.0
        %888 = vmatpush1.msra.mxu0 0.0
        %889 = vmatprep.subr.mxu0 0.0
        %890 = vmatpush1.msra.mxu0 0.0
        %891 = vmatprep.subr.mxu0 0.0
        %892 = vmatpush1.msra.mxu0 0.0
        %893 = vmatprep.subr.mxu0 0.0
        %894 = vmatpush1.msra.mxu0 0.0
        %895 = vmatprep.subr.mxu0 0.0
        %896 = vmatpush1.msra.mxu0 0.0
        %897 = vmatprep.subr.mxu0 0.0
        %898 = vmatpush1.msra.mxu0 0.0
        %899 = vmatprep.subr.mxu0 0.0
        %900 = vmatpush1.msra.mxu0 0.0
        %901 = vmatprep.subr.mxu0 0.0
        %902 = vmatpush1.msra.mxu0 0.0
        %903 = vmatprep.subr.mxu0 0.0
        %904 = vmatpush1.msra.mxu0 0.0
        %905 = vmatprep.subr.mxu0 0.0
        %906 = vmatpush1.msra.mxu0 0.0
        %907 = vmatprep.subr.mxu0 0.0
        %908 = vmatpush1.msra.mxu0 0.0
        %909 = vmatprep.subr.mxu0 0.0
        %910 = vmatpush1.msra.mxu0 0.0
        %911 = vmatprep.mubr.f32.mxu0 0.0
        %912 = vmatmul.mubr.f32.gmra.mrb[0].mxu0 %v842
        %v913 = vpop.f32.mrb[0].mxu0
        %v914 = vadd.f32 0.0, %v913
        %v915 = vpop.f32.mrb[0].mxu0
        %916 = vmatprep.mubr.f32.mxu0 0.0
        %917 = vmatmul.mubr.f32.gmra.mrb[0].mxu0 %v845
        %v918 = vpop.f32.mrb[0].mxu0
        %v919 = vadd.f32 0.0, %v918
        %v920 = vpop.f32.mrb[0].mxu0
        %921 = vdwg.mxu0
        %v923 = vlaneseq
        %v924 = vshrl.u32 %v923, 7
        %v925 = vsub.s32 0, %v924
        %v926 = vrot.slane %v663, %v925
        %928 = vmatprep.subr.mxu0 0.0
        %929 = vmatpush1.msra.mxu0 %v914
        %930 = vmatprep.subr.mxu0 0.0
        %931 = vmatpush1.msra.mxu0 %v919
        %932 = vmatprep.subr.mxu0 0.0
        %933 = vmatpush1.msra.mxu0 0.0
        %934 = vmatprep.subr.mxu0 0.0
        %935 = vmatpush1.msra.mxu0 0.0
        %936 = vmatprep.subr.mxu0 0.0
        %937 = vmatpush1.msra.mxu0 0.0
        %938 = vmatprep.subr.mxu0 0.0
        %939 = vmatpush1.msra.mxu0 0.0
        %940 = vmatprep.subr.mxu0 0.0
        %941 = vmatpush1.msra.mxu0 0.0
        %942 = vmatprep.subr.mxu0 0.0
        %943 = vmatpush1.msra.mxu0 0.0
        %944 = vmatprep.subr.mxu0 0.0
        %945 = vmatpush1.msra.mxu0 0.0
        %946 = vmatprep.subr.mxu0 0.0
        %947 = vmatpush1.msra.mxu0 0.0
        %948 = vmatprep.subr.mxu0 0.0
        %949 = vmatpush1.msra.mxu0 0.0
        %950 = vmatprep.subr.mxu0 0.0
        %951 = vmatpush1.msra.mxu0 0.0
        %952 = vmatprep.subr.mxu0 0.0
        %953 = vmatpush1.msra.mxu0 0.0
        %954 = vmatprep.subr.mxu0 0.0
        %955 = vmatpush1.msra.mxu0 0.0
        %956 = vmatprep.subr.mxu0 0.0
        %957 = vmatpush1.msra.mxu0 0.0
        %958 = vmatprep.subr.mxu0 0.0
        %959 = vmatpush1.msra.mxu0 0.0
        %960 = vmatprep.subr.mxu0 0.0
        %961 = vmatpush1.msra.mxu0 0.0
        %962 = vmatprep.subr.mxu0 0.0
        %963 = vmatpush1.msra.mxu0 0.0
        %964 = vmatprep.subr.mxu0 0.0
        %965 = vmatpush1.msra.mxu0 0.0
        %966 = vmatprep.subr.mxu0 0.0
        %967 = vmatpush1.msra.mxu0 0.0
        %968 = vmatprep.subr.mxu0 0.0
        %969 = vmatpush1.msra.mxu0 0.0
        %970 = vmatprep.subr.mxu0 0.0
        %971 = vmatpush1.msra.mxu0 0.0
        %972 = vmatprep.subr.mxu0 0.0
        %973 = vmatpush1.msra.mxu0 0.0
        %974 = vmatprep.subr.mxu0 0.0
        %975 = vmatpush1.msra.mxu0 0.0
        %976 = vmatprep.subr.mxu0 0.0
        %977 = vmatpush1.msra.mxu0 0.0
        %978 = vmatprep.subr.mxu0 0.0
        %979 = vmatpush1.msra.mxu0 0.0
        %980 = vmatprep.subr.mxu0 0.0
        %981 = vmatpush1.msra.mxu0 0.0
        %982 = vmatprep.subr.mxu0 0.0
        %983 = vmatpush1.msra.mxu0 0.0
        %984 = vmatprep.subr.mxu0 0.0
        %985 = vmatpush1.msra.mxu0 0.0
        %986 = vmatprep.subr.mxu0 0.0
        %987 = vmatpush1.msra.mxu0 0.0
        %988 = vmatprep.subr.mxu0 0.0
        %989 = vmatpush1.msra.mxu0 0.0
        %990 = vmatprep.subr.mxu0 0.0
        %991 = vmatpush1.msra.mxu0 0.0
        %992 = vmatprep.mubr.f32.mxu0 0.0
        %993 = vmatmul.mubr.f32.gmra.mrb[0].mxu0 %v758
        %v994 = vpop.f32.mrb[0].mxu0
        %v995 = vadd.f32 %v926, %v994
        %v996 = vpop.f32.mrb[0].mxu0
        %997 = vmatprep.mubr.f32.mxu0 0.0
        %998 = vmatmul.mubr.f32.gmra.mrb[0].mxu0 %v761
        %v999 = vpop.f32.mrb[0].mxu0
        %v1000 = vadd.f32 %v926, %v999
        %v1001 = vpop.f32.mrb[0].mxu0
        %1002 = vdwg.mxu0
        %v1003 = vtanh.pop %v995
        %v1004 = vtanh.pop %v1000
        %1005 = vset.pattern.permute.xlu0 0
        %1006 = vperm.xlu0 %1005, %v663
        %v1007 = vpop.permute.xlu0 %1006
        %v1009 = vlaneseq
        %v1010 = vshrl.u32 %v1009, 7
        %v1011 = vsub.s32 0, %v1010
        %v1012 = vrot.slane %v1007, %v1011
        %1013 = vxpose.xlu0.b32.start [1/16] %v914, 128
        %1014 = vxpose.xlu0.b32.cont [2/16] %v919, 128
        %1015 = vxpose.xlu0.b32.cont [3/16] 0.0, 128
        %1016 = vxpose.xlu0.b32.cont [4/16] 0.0, 128
        %1017 = vxpose.xlu0.b32.cont [5/16] 0.0, 128
        %1018 = vxpose.xlu0.b32.cont [6/16] 0.0, 128
        %1019 = vxpose.xlu0.b32.cont [7/16] 0.0, 128
        %1020 = vxpose.xlu0.b32.cont [8/16] 0.0, 128
        %1021 = vxpose.xlu0.b32.cont [9/16] 0.0, 128
        %1022 = vxpose.xlu0.b32.cont [10/16] 0.0, 128
        %1023 = vxpose.xlu0.b32.cont [11/16] 0.0, 128
        %1024 = vxpose.xlu0.b32.cont [12/16] 0.0, 128
        %1025 = vxpose.xlu0.b32.cont [13/16] 0.0, 128
        %1026 = vxpose.xlu0.b32.cont [14/16] 0.0, 128
        %1027 = vxpose.xlu0.b32.cont [15/16] 0.0, 128
        %1028 = vxpose.xlu0.b32.end [16/16] 0.0, 128
        %v1029 = vpop.trf.xlu0
        %v1030 = vpop.trf.xlu0
        %v1031 = vpop.trf.xlu0
        %v1032 = vpop.trf.xlu0
        %v1033 = vpop.trf.xlu0
        %v1034 = vpop.trf.xlu0
        %v1035 = vpop.trf.xlu0
        %v1036 = vpop.trf.xlu0
        %v1037 = vpop.trf.xlu0
        %v1038 = vpop.trf.xlu0
        %v1039 = vpop.trf.xlu0
        %v1040 = vpop.trf.xlu0
        %v1041 = vpop.trf.xlu0
        %v1042 = vpop.trf.xlu0
        %v1043 = vpop.trf.xlu0
        %v1044 = vpop.trf.xlu0
        %v1046 = vsel %vm756, %v1029, 0
        %1048 = vmatprep.subr.mxu0 0.0
        %1049 = vmatpush1.msra.mxu0 %v653
        %1050 = vmatprep.subr.mxu0 0.0
        %1051 = vmatpush1.msra.mxu0 %v654
        %1052 = vmatprep.subr.mxu0 0.0
        %1053 = vmatpush1.msra.mxu0 0.0
        %1054 = vmatprep.subr.mxu0 0.0
        %1055 = vmatpush1.msra.mxu0 0.0
        %1056 = vmatprep.subr.mxu0 0.0
        %1057 = vmatpush1.msra.mxu0 0.0
        %1058 = vmatprep.subr.mxu0 0.0
        %1059 = vmatpush1.msra.mxu0 0.0
        %1060 = vmatprep.subr.mxu0 0.0
        %1061 = vmatpush1.msra.mxu0 0.0
        %1062 = vmatprep.subr.mxu0 0.0
        %1063 = vmatpush1.msra.mxu0 0.0
        %1064 = vmatprep.subr.mxu0 0.0
        %1065 = vmatpush1.msra.mxu0 0.0
        %1066 = vmatprep.subr.mxu0 0.0
        %1067 = vmatpush1.msra.mxu0 0.0
        %1068 = vmatprep.subr.mxu0 0.0
        %1069 = vmatpush1.msra.mxu0 0.0
        %1070 = vmatprep.subr.mxu0 0.0
        %1071 = vmatpush1.msra.mxu0 0.0
        %1072 = vmatprep.subr.mxu0 0.0
        %1073 = vmatpush1.msra.mxu0 0.0
        %1074 = vmatprep.subr.mxu0 0.0
        %1075 = vmatpush1.msra.mxu0 0.0
        %1076 = vmatprep.subr.mxu0 0.0
        %1077 = vmatpush1.msra.mxu0 0.0
        %1078 = vmatprep.subr.mxu0 0.0
        %1079 = vmatpush1.msra.mxu0 0.0
        %1080 = vmatprep.subr.mxu0 0.0
        %1081 = vmatpush1.msra.mxu0 0.0
        %1082 = vmatprep.subr.mxu0 0.0
        %1083 = vmatpush1.msra.mxu0 0.0
        %1084 = vmatprep.subr.mxu0 0.0
        %1085 = vmatpush1.msra.mxu0 0.0
        %1086 = vmatprep.subr.mxu0 0.0
        %1087 = vmatpush1.msra.mxu0 0.0
        %1088 = vmatprep.subr.mxu0 0.0
        %1089 = vmatpush1.msra.mxu0 0.0
        %1090 = vmatprep.subr.mxu0 0.0
        %1091 = vmatpush1.msra.mxu0 0.0
        %1092 = vmatprep.subr.mxu0 0.0
        %1093 = vmatpush1.msra.mxu0 0.0
        %1094 = vmatprep.subr.mxu0 0.0
        %1095 = vmatpush1.msra.mxu0 0.0
        %1096 = vmatprep.subr.mxu0 0.0
        %1097 = vmatpush1.msra.mxu0 0.0
        %1098 = vmatprep.subr.mxu0 0.0
        %1099 = vmatpush1.msra.mxu0 0.0
        %1100 = vmatprep.subr.mxu0 0.0
        %1101 = vmatpush1.msra.mxu0 0.0
        %1102 = vmatprep.subr.mxu0 0.0
        %1103 = vmatpush1.msra.mxu0 0.0
        %1104 = vmatprep.subr.mxu0 0.0
        %1105 = vmatpush1.msra.mxu0 0.0
        %1106 = vmatprep.subr.mxu0 0.0
        %1107 = vmatpush1.msra.mxu0 0.0
        %1108 = vmatprep.subr.mxu0 0.0
        %1109 = vmatpush1.msra.mxu0 0.0
        %1110 = vmatprep.subr.mxu0 0.0
        %1111 = vmatpush1.msra.mxu0 0.0
        %1112 = vmatprep.mubr.f32.mxu0 0.0
        %1113 = vmatmul.mubr.f32.gmra.mrb[0].mxu0 %v1046
        %v1114 = vpop.f32.mrb[0].mxu0
        %v1115 = vadd.f32 %v1012, %v1114
        %v1116 = vpop.f32.mrb[0].mxu0
        %1117 = vdwg.mxu0
        %v1118 = vtanh.pop %v1115
        %v1119 = vlaneseq
        %v1120 = vshrl.u32 %v1119, 7
        %v1121 = vadd.s32 %v1120, 8
        %v1122 = vlaneseq
        %v1123 = vand.u32 %v1122, 127
        %vm1124 = vcmp.eq.s32.totalorder %v1120, %v1123
        %vm1125 = vcmp.eq.s32.totalorder %v1121, %v1123
        %v1126 = vsel %vm1124, 1, 0
        %v1127 = vsel %vm1125, 1, 0
        %v1128 = vcvt.s32.f32 %v1126
        %v1129 = vcvt.s32.f32 %v1127
        %1131 = vset.pattern.permute.xlu0 0
        %1132 = vperm.xlu0 %1131, %v1003
        %v1133 = vpop.permute.xlu0 %1132
        %1136 = vset.pattern.permute.xlu0 0
        %1137 = vperm.xlu0 %1136, %v1004
        %v1138 = vpop.permute.xlu0 %1137
        %v1140 = vlaneseq
        %v1141 = vshrl.u32 %v1140, 7
        %v1142 = vsub.s32 0, %v1141
        %v1143 = vrot.slane %v1118, %v1142
        %vm1144 = vcmp.ne.s32.totalorder %v1120, %v1123
        %vm1145 = vcmp.ne.s32.totalorder %v1121, %v1123
        %vm1146 = vcmp.gt.f32.partialorder %v1133, %v1143
        %vm1147 = vcmp.gt.f32.partialorder %v1138, %v1143
        %vm1148 = vcmp.eq.f32.partialorder %v1133, %v1143
        %vm1149 = vcmp.eq.f32.partialorder %v1138, %v1143
        %vm1150 = vcmp.lt.s32.totalorder %v1120, %v1123
        %vm1151 = vcmp.lt.s32.totalorder %v1121, %v1123
        %vm1152 = vmand %vm1148, %vm1150
        %vm1153 = vmand %vm1149, %vm1151
        %vm1154 = vmor %vm1146, %vm1152
        %vm1155 = vmor %vm1147, %vm1153
        %vm1156 = vmand %vm1144, %vm1154
        %vm1157 = vmand %vm1145, %vm1155
        %v1158 = vsel %vm1156, 1, 0
        %v1159 = vsel %vm1157, 1, 0
        %v1160 = vcvt.s32.f32 %v1158
        %v1161 = vcvt.s32.f32 %v1159
        %v1162 = vsel %vm756, %v1160, 0.0
        %v1163 = vsel %vm756, %v1161, 0.0
        %v1164 = vadd.f32 %v1162, %v1163
        %v1165 = vrot.slane %v1164, 4
        %v1166 = vadd.f32 %v1164, %v1165
        %v1167 = vrot.slane %v1166, 2
        %v1168 = vadd.f32 %v1166, %v1167
        %v1169 = vrot.slane %v1168, 1
        %v1170 = vadd.f32 %v1168, %v1169
        %vm1171 = vcmp.lt.f32.partialorder %v1170, 8.0
        %v1172 = vsel %vm1150, 1, 0
        %v1173 = vsel %vm1151, 1, 0
        %v1174 = vcvt.s32.f32 %v1172
        %v1175 = vcvt.s32.f32 %v1173
        %v1176 = vsel %vm1171, 1, 0
        %v1177 = vcvt.s32.f32 %v1176
        %v1179 = vsel %vm756, %v1177, 0
        %1181 = vmatprep.subr.mxu0 0.0
        %1182 = vmatpush1.msra.mxu0 %v1174
        %1183 = vmatprep.subr.mxu0 0.0
        %1184 = vmatpush1.msra.mxu0 %v1175
        %1185 = vmatprep.subr.mxu0 0.0
        %1186 = vmatpush1.msra.mxu0 0.0
        %1187 = vmatprep.subr.mxu0 0.0
        %1188 = vmatpush1.msra.mxu0 0.0
        %1189 = vmatprep.subr.mxu0 0.0
        %1190 = vmatpush1.msra.mxu0 0.0
        %1191 = vmatprep.subr.mxu0 0.0
        %1192 = vmatpush1.msra.mxu0 0.0
        %1193 = vmatprep.subr.mxu0 0.0
        %1194 = vmatpush1.msra.mxu0 0.0
        %1195 = vmatprep.subr.mxu0 0.0
        %1196 = vmatpush1.msra.mxu0 0.0
        %1197 = vmatprep.subr.mxu0 0.0
        %1198 = vmatpush1.msra.mxu0 0.0
        %1199 = vmatprep.subr.mxu0 0.0
        %1200 = vmatpush1.msra.mxu0 0.0
        %1201 = vmatprep.subr.mxu0 0.0
        %1202 = vmatpush1.msra.mxu0 0.0
        %1203 = vmatprep.subr.mxu0 0.0
        %1204 = vmatpush1.msra.mxu0 0.0
        %1205 = vmatprep.subr.mxu0 0.0
        %1206 = vmatpush1.msra.mxu0 0.0
        %1207 = vmatprep.subr.mxu0 0.0
        %1208 = vmatpush1.msra.mxu0 0.0
        %1209 = vmatprep.subr.mxu0 0.0
        %1210 = vmatpush1.msra.mxu0 0.0
        %1211 = vmatprep.subr.mxu0 0.0
        %1212 = vmatpush1.msra.mxu0 0.0
        %1213 = vmatprep.subr.mxu0 0.0
        %1214 = vmatpush1.msra.mxu0 0.0
        %1215 = vmatprep.subr.mxu0 0.0
        %1216 = vmatpush1.msra.mxu0 0.0
        %1217 = vmatprep.subr.mxu0 0.0
        %1218 = vmatpush1.msra.mxu0 0.0
        %1219 = vmatprep.subr.mxu0 0.0
        %1220 = vmatpush1.msra.mxu0 0.0
        %1221 = vmatprep.subr.mxu0 0.0
        %1222 = vmatpush1.msra.mxu0 0.0
        %1223 = vmatprep.subr.mxu0 0.0
        %1224 = vmatpush1.msra.mxu0 0.0
        %1225 = vmatprep.subr.mxu0 0.0
        %1226 = vmatpush1.msra.mxu0 0.0
        %1227 = vmatprep.subr.mxu0 0.0
        %1228 = vmatpush1.msra.mxu0 0.0
        %1229 = vmatprep.subr.mxu0 0.0
        %1230 = vmatpush1.msra.mxu0 0.0
        %1231 = vmatprep.subr.mxu0 0.0
        %1232 = vmatpush1.msra.mxu0 0.0
        %1233 = vmatprep.subr.mxu0 0.0
        %1234 = vmatpush1.msra.mxu0 0.0
        %1235 = vmatprep.subr.mxu0 0.0
        %1236 = vmatpush1.msra.mxu0 0.0
        %1237 = vmatprep.subr.mxu0 0.0
        %1238 = vmatpush1.msra.mxu0 0.0
        %1239 = vmatprep.subr.mxu0 0.0
        %1240 = vmatpush1.msra.mxu0 0.0
        %1241 = vmatprep.subr.mxu0 0.0
        %1242 = vmatpush1.msra.mxu0 0.0
        %1243 = vmatprep.subr.mxu0 0.0
        %1244 = vmatpush1.msra.mxu0 0.0
        %1245 = vmatprep.mubr.f32.mxu0 0.0
        %1246 = vmatmul.mubr.f32.gmra.mrb[0].mxu0 %v1179
        %v1247 = vpop.f32.mrb[0].mxu0
        %v1248 = vadd.f32 0.0, %v1247
        %v1249 = vpop.f32.mrb[0].mxu0
        %1250 = vdwg.mxu0
        %v1251 = vcvt.s32.f32 %v1120
        %v1252 = vlaneseq
        %v1253 = vshrl.u32 %v1252, 7
        %v1254 = vsub.s32 0, %v1253
        %v1255 = vrot.slane %v1248, %v1254
        %vm1256 = vcmp.eq.f32.partialorder %v1255, %v1251
        %vm1257 = vcmp.eq.s32.totalorder %v1176, 1
        %vm1258 = vmand %vm1257, %vm1256
        %v1259 = vsel %vm1258, 1, 0
        %v1260 = vcvt.s32.f32 %v1259
        %v1261 = vmul.f32 %v1260, %v1143
        %v1263 = vsel %vm756, %v1261, 0
        %1265 = vmatprep.subr.mxu0 0.0
        %1266 = vmatpush1.msra.mxu0 %v838
        %1267 = vmatprep.subr.mxu0 0.0
        %1268 = vmatpush1.msra.mxu0 %v839
        %1269 = vmatprep.subr.mxu0 0.0
        %1270 = vmatpush1.msra.mxu0 0.0
        %1271 = vmatprep.subr.mxu0 0.0
        %1272 = vmatpush1.msra.mxu0 0.0
        %1273 = vmatprep.subr.mxu0 0.0
        %1274 = vmatpush1.msra.mxu0 0.0
        %1275 = vmatprep.subr.mxu0 0.0
        %1276 = vmatpush1.msra.mxu0 0.0
        %1277 = vmatprep.subr.mxu0 0.0
        %1278 = vmatpush1.msra.mxu0 0.0
        %1279 = vmatprep.subr.mxu0 0.0
        %1280 = vmatpush1.msra.mxu0 0.0
        %1281 = vmatprep.subr.mxu0 0.0
        %1282 = vmatpush1.msra.mxu0 0.0
        %1283 = vmatprep.subr.mxu0 0.0
        %1284 = vmatpush1.msra.mxu0 0.0
        %1285 = vmatprep.subr.mxu0 0.0
        %1286 = vmatpush1.msra.mxu0 0.0
        %1287 = vmatprep.subr.mxu0 0.0
        %1288 = vmatpush1.msra.mxu0 0.0
        %1289 = vmatprep.subr.mxu0 0.0
        %1290 = vmatpush1.msra.mxu0 0.0
        %1291 = vmatprep.subr.mxu0 0.0
        %1292 = vmatpush1.msra.mxu0 0.0
        %1293 = vmatprep.subr.mxu0 0.0
        %1294 = vmatpush1.msra.mxu0 0.0
        %1295 = vmatprep.subr.mxu0 0.0
        %1296 = vmatpush1.msra.mxu0 0.0
        %1297 = vmatprep.subr.mxu0 0.0
        %1298 = vmatpush1.msra.mxu0 0.0
        %1299 = vmatprep.subr.mxu0 0.0
        %1300 = vmatpush1.msra.mxu0 0.0
        %1301 = vmatprep.subr.mxu0 0.0
        %1302 = vmatpush1.msra.mxu0 0.0
        %1303 = vmatprep.subr.mxu0 0.0
        %1304 = vmatpush1.msra.mxu0 0.0
        %1305 = vmatprep.subr.mxu0 0.0
        %1306 = vmatpush1.msra.mxu0 0.0
        %1307 = vmatprep.subr.mxu0 0.0
        %1308 = vmatpush1.msra.mxu0 0.0
        %1309 = vmatprep.subr.mxu0 0.0
        %1310 = vmatpush1.msra.mxu0 0.0
        %1311 = vmatprep.subr.mxu0 0.0
        %1312 = vmatpush1.msra.mxu0 0.0
        %1313 = vmatprep.subr.mxu0 0.0
        %1314 = vmatpush1.msra.mxu0 0.0
        %1315 = vmatprep.subr.mxu0 0.0
        %1316 = vmatpush1.msra.mxu0 0.0
        %1317 = vmatprep.subr.mxu0 0.0
        %1318 = vmatpush1.msra.mxu0 0.0
        %1319 = vmatprep.subr.mxu0 0.0
        %1320 = vmatpush1.msra.mxu0 0.0
        %1321 = vmatprep.subr.mxu0 0.0
        %1322 = vmatpush1.msra.mxu0 0.0
        %1323 = vmatprep.subr.mxu0 0.0
        %1324 = vmatpush1.msra.mxu0 0.0
        %1325 = vmatprep.subr.mxu0 0.0
        %1326 = vmatpush1.msra.mxu0 0.0
        %1327 = vmatprep.subr.mxu0 0.0
        %1328 = vmatpush1.msra.mxu0 0.0
        %1329 = vmatprep.mubr.f32.mxu0 0.0
        %1330 = vmatmul.mubr.f32.gmra.mrb[0].mxu0 %v1263
        %v1331 = vpop.f32.mrb[0].mxu0
        %v1332 = vadd.f32 0.0, %v1331
        %v1333 = vpop.f32.mrb[0].mxu0
        %1334 = vdwg.mxu0
        %vm1335 = vcmp.ne.f32.partialorder %v653, 0.0
        %vm1336 = vcmp.ne.f32.partialorder %v654, 0.0
        %v1337 = vsel %vm1335, 1, 0
        %v1338 = vsel %vm1336, 1, 0
        %v1339 = vcvt.s32.f32 %v1337
        %v1340 = vcvt.s32.f32 %v1338
        %v1341 = vsub.f32 1.0, %v1128
        %v1342 = vsub.f32 1.0, %v1129
        %v1343 = vmul.f32 %v1339, %v1341
        %v1344 = vmul.f32 %v1340, %v1342
        %v1346 = vsel %vm756, %v1260, 0
        %1348 = vmatprep.subr.mxu0 0.0
        %1349 = vmatpush1.msra.mxu0 %v1343
        %1350 = vmatprep.subr.mxu0 0.0
        %1351 = vmatpush1.msra.mxu0 %v1344
        %1352 = vmatprep.subr.mxu0 0.0
        %1353 = vmatpush1.msra.mxu0 0.0
        %1354 = vmatprep.subr.mxu0 0.0
        %1355 = vmatpush1.msra.mxu0 0.0
        %1356 = vmatprep.subr.mxu0 0.0
        %1357 = vmatpush1.msra.mxu0 0.0
        %1358 = vmatprep.subr.mxu0 0.0
        %1359 = vmatpush1.msra.mxu0 0.0
        %1360 = vmatprep.subr.mxu0 0.0
        %1361 = vmatpush1.msra.mxu0 0.0
        %1362 = vmatprep.subr.mxu0 0.0
        %1363 = vmatpush1.msra.mxu0 0.0
        %1364 = vmatprep.subr.mxu0 0.0
        %1365 = vmatpush1.msra.mxu0 0.0
        %1366 = vmatprep.subr.mxu0 0.0
        %1367 = vmatpush1.msra.mxu0 0.0
        %1368 = vmatprep.subr.mxu0 0.0
        %1369 = vmatpush1.msra.mxu0 0.0
        %1370 = vmatprep.subr.mxu0 0.0
        %1371 = vmatpush1.msra.mxu0 0.0
        %1372 = vmatprep.subr.mxu0 0.0
        %1373 = vmatpush1.msra.mxu0 0.0
        %1374 = vmatprep.subr.mxu0 0.0
        %1375 = vmatpush1.msra.mxu0 0.0
        %1376 = vmatprep.subr.mxu0 0.0
        %1377 = vmatpush1.msra.mxu0 0.0
        %1378 = vmatprep.subr.mxu0 0.0
        %1379 = vmatpush1.msra.mxu0 0.0
        %1380 = vmatprep.subr.mxu0 0.0
        %1381 = vmatpush1.msra.mxu0 0.0
        %1382 = vmatprep.subr.mxu0 0.0
        %1383 = vmatpush1.msra.mxu0 0.0
        %1384 = vmatprep.subr.mxu0 0.0
        %1385 = vmatpush1.msra.mxu0 0.0
        %1386 = vmatprep.subr.mxu0 0.0
        %1387 = vmatpush1.msra.mxu0 0.0
        %1388 = vmatprep.subr.mxu0 0.0
        %1389 = vmatpush1.msra.mxu0 0.0
        %1390 = vmatprep.subr.mxu0 0.0
        %1391 = vmatpush1.msra.mxu0 0.0
        %1392 = vmatprep.subr.mxu0 0.0
        %1393 = vmatpush1.msra.mxu0 0.0
        %1394 = vmatprep.subr.mxu0 0.0
        %1395 = vmatpush1.msra.mxu0 0.0
        %1396 = vmatprep.subr.mxu0 0.0
        %1397 = vmatpush1.msra.mxu0 0.0
        %1398 = vmatprep.subr.mxu0 0.0
        %1399 = vmatpush1.msra.mxu0 0.0
        %1400 = vmatprep.subr.mxu0 0.0
        %1401 = vmatpush1.msra.mxu0 0.0
        %1402 = vmatprep.subr.mxu0 0.0
        %1403 = vmatpush1.msra.mxu0 0.0
        %1404 = vmatprep.subr.mxu0 0.0
        %1405 = vmatpush1.msra.mxu0 0.0
        %1406 = vmatprep.subr.mxu0 0.0
        %1407 = vmatpush1.msra.mxu0 0.0
        %1408 = vmatprep.subr.mxu0 0.0
        %1409 = vmatpush1.msra.mxu0 0.0
        %1410 = vmatprep.subr.mxu0 0.0
        %1411 = vmatpush1.msra.mxu0 0.0
        %1412 = vmatprep.mubr.f32.mxu0 0.0
        %1413 = vmatmul.mubr.f32.gmra.mrb[0].mxu0 %v1346
        %v1414 = vpop.f32.mrb[0].mxu0
        %v1415 = vadd.f32 0.0, %v1414
        %v1416 = vpop.f32.mrb[0].mxu0
        %1417 = vdwg.mxu0
        %v1419 = vsel %vm756, %v1415, 0
        %1421 = vmatprep.subr.mxu0 0.0
        %1422 = vmatpush1.xpose.msra.mxu0 %v1346
        %1423 = vmatprep.subr.mxu0 0.0
        %1424 = vmatpush1.xpose.msra.mxu0 0.0
        %1425 = vmatprep.subr.mxu0 0.0
        %1426 = vmatpush1.xpose.msra.mxu0 0.0
        %1427 = vmatprep.subr.mxu0 0.0
        %1428 = vmatpush1.xpose.msra.mxu0 0.0
        %1429 = vmatprep.subr.mxu0 0.0
        %1430 = vmatpush1.xpose.msra.mxu0 0.0
        %1431 = vmatprep.subr.mxu0 0.0
        %1432 = vmatpush1.xpose.msra.mxu0 0.0
        %1433 = vmatprep.subr.mxu0 0.0
        %1434 = vmatpush1.xpose.msra.mxu0 0.0
        %1435 = vmatprep.subr.mxu0 0.0
        %1436 = vmatpush1.xpose.msra.mxu0 0.0
        %1437 = vmatprep.subr.mxu0 0.0
        %1438 = vmatpush1.xpose.msra.mxu0 0.0
        %1439 = vmatprep.subr.mxu0 0.0
        %1440 = vmatpush1.xpose.msra.mxu0 0.0
        %1441 = vmatprep.subr.mxu0 0.0
        %1442 = vmatpush1.xpose.msra.mxu0 0.0
        %1443 = vmatprep.subr.mxu0 0.0
        %1444 = vmatpush1.xpose.msra.mxu0 0.0
        %1445 = vmatprep.subr.mxu0 0.0
        %1446 = vmatpush1.xpose.msra.mxu0 0.0
        %1447 = vmatprep.subr.mxu0 0.0
        %1448 = vmatpush1.xpose.msra.mxu0 0.0
        %1449 = vmatprep.subr.mxu0 0.0
        %1450 = vmatpush1.xpose.msra.mxu0 0.0
        %1451 = vmatprep.subr.mxu0 0.0
        %1452 = vmatpush1.xpose.msra.mxu0 0.0
        %1453 = vmatprep.subr.mxu0 0.0
        %1454 = vmatpush1.xpose.msra.mxu0 0.0
        %1455 = vmatprep.subr.mxu0 0.0
        %1456 = vmatpush1.xpose.msra.mxu0 0.0
        %1457 = vmatprep.subr.mxu0 0.0
        %1458 = vmatpush1.xpose.msra.mxu0 0.0
        %1459 = vmatprep.subr.mxu0 0.0
        %1460 = vmatpush1.xpose.msra.mxu0 0.0
        %1461 = vmatprep.subr.mxu0 0.0
        %1462 = vmatpush1.xpose.msra.mxu0 0.0
        %1463 = vmatprep.subr.mxu0 0.0
        %1464 = vmatpush1.xpose.msra.mxu0 0.0
        %1465 = vmatprep.subr.mxu0 0.0
        %1466 = vmatpush1.xpose.msra.mxu0 0.0
        %1467 = vmatprep.subr.mxu0 0.0
        %1468 = vmatpush1.xpose.msra.mxu0 0.0
        %1469 = vmatprep.subr.mxu0 0.0
        %1470 = vmatpush1.xpose.msra.mxu0 0.0
        %1471 = vmatprep.subr.mxu0 0.0
        %1472 = vmatpush1.xpose.msra.mxu0 0.0
        %1473 = vmatprep.subr.mxu0 0.0
        %1474 = vmatpush1.xpose.msra.mxu0 0.0
        %1475 = vmatprep.subr.mxu0 0.0
        %1476 = vmatpush1.xpose.msra.mxu0 0.0
        %1477 = vmatprep.subr.mxu0 0.0
        %1478 = vmatpush1.xpose.msra.mxu0 0.0
        %1479 = vmatprep.subr.mxu0 0.0
        %1480 = vmatpush1.xpose.msra.mxu0 0.0
        %1481 = vmatprep.subr.mxu0 0.0
        %1482 = vmatpush1.xpose.msra.mxu0 0.0
        %1483 = vmatprep.subr.mxu0 0.0
        %1484 = vmatpush1.xpose.msra.mxu0 0.0
        %1485 = vmatprep.mubr.f32.mxu0 0.0
        %1486 = vmatmul.mubr.f32.gmra.mrb[0].mxu0 %v1419
        %v1487 = vpop.f32.mrb[0].mxu0
        %v1488 = vadd.f32 %v1128, %v1487
        %v1489 = vpop.f32.mrb[0].mxu0
        %1490 = vdwg.mxu0
        %vm1491 = vcmask 64512
        %v1492 = vsel %vm1491, %v1488, 0.0
        %1493 = vadd.xlane.f32.xlu0 %v1492
        %v1494 = vpop.xlane.xlu0 %1493
        %v1495 = vrsqrt.pop %v1494
        %v1496 = vrot.slane %v1492, 4
        %v1497 = vadd.f32 %v1492, %v1496
        %v1498 = vrot.slane %v1497, 2
        %v1499 = vadd.f32 %v1497, %v1498
        %v1500 = vrot.slane %v1499, 1
        %v1501 = vadd.f32 %v1499, %v1500
        %v1502 = vrsqrt.pop %v1501
        %v1503 = vmul.f32 %v1488, %v1495
        %v1504 = vmul.f32 %v1503, %v1502
        %v1505 = vsel %vm840, %v1332, 0.0
        %v1506 = vrot.slane %v1505, 4
        %v1507 = vadd.f32 %v1505, %v1506
        %v1508 = vrot.slane %v1507, 2
        %v1509 = vadd.f32 %v1507, %v1508
        %v1510 = vrot.slane %v1509, 1
        %v1511 = vadd.f32 %v1509, %v1510
        %v1512 = vrcp.pop 8.0
        %v1513 = vmul.f32 %v1511, %v1512
        %v1514 = vsel %vm840, %v1332, -inf
        %v1515 = vrot.slane %v1514, 4
        %v1516 = vmax.f32 %v1514, %v1515
        %v1517 = vrot.slane %v1516, 2
        %v1518 = vmax.f32 %v1516, %v1517
        %v1519 = vrot.slane %v1518, 1
        %v1520 = vmax.f32 %v1518, %v1519
        %1522 = vrot.lane.b32.xlu0 %v1520, 32
        %v1523 = vpop.permute.xlu0 %1522
        %v1525 = vsel %vm840, %v1513, %v1523
        %v1526 = vld [vmem:[%s6] sm:$0xff]
        %v1527 = vld [vmem:[%s6 + $0x8] sm:$0xff]
        %v1528 = vld [vmem:[%s6 + $0x10] sm:$0xff]
        %v1529 = vld [vmem:[%s6 + $0x18] sm:$0xff]
        %v1530 = vld [vmem:[%s7] sm:$0x1]
        %v1531 = vld [vmem:[%s8] sm:$0xff]
        %v1532 = vld [vmem:[%s8 + $0x8] sm:$0xff]
        %v1533 = vld [vmem:[%s8 + $0x10] sm:$0xff]
        %v1534 = vld [vmem:[%s8 + $0x18] sm:$0xff]
        %v1535 = vld [vmem:[#allocation3] sm:$0x1]
        %v1537 = vsel %vm840, %v1332, 0
        %1539 = vmatprep.subr.mxu0 0.0
        %1540 = vmatpush1.msra.mxu0 %v1526
        %1541 = vmatprep.subr.mxu0 0.0
        %1542 = vmatpush1.msra.mxu0 %v1527
        %1543 = vmatprep.subr.mxu0 0.0
        %1544 = vmatpush1.msra.mxu0 %v1528
        %1545 = vmatprep.subr.mxu0 0.0
        %1546 = vmatpush1.msra.mxu0 %v1529
        %1547 = vmatprep.subr.mxu0 0.0
        %1548 = vmatpush1.msra.mxu0 0.0
        %1549 = vmatprep.subr.mxu0 0.0
        %1550 = vmatpush1.msra.mxu0 0.0
        %1551 = vmatprep.subr.mxu0 0.0
        %1552 = vmatpush1.msra.mxu0 0.0
        %1553 = vmatprep.subr.mxu0 0.0
        %1554 = vmatpush1.msra.mxu0 0.0
        %1555 = vmatprep.subr.mxu0 0.0
        %1556 = vmatpush1.msra.mxu0 0.0
        %1557 = vmatprep.subr.mxu0 0.0
        %1558 = vmatpush1.msra.mxu0 0.0
        %1559 = vmatprep.subr.mxu0 0.0
        %1560 = vmatpush1.msra.mxu0 0.0
        %1561 = vmatprep.subr.mxu0 0.0
        %1562 = vmatpush1.msra.mxu0 0.0
        %1563 = vmatprep.subr.mxu0 0.0
        %1564 = vmatpush1.msra.mxu0 0.0
        %1565 = vmatprep.subr.mxu0 0.0
        %1566 = vmatpush1.msra.mxu0 0.0
        %1567 = vmatprep.subr.mxu0 0.0
        %1568 = vmatpush1.msra.mxu0 0.0
        %1569 = vmatprep.subr.mxu0 0.0
        %1570 = vmatpush1.msra.mxu0 0.0
        %1571 = vmatprep.subr.mxu0 0.0
        %1572 = vmatpush1.msra.mxu0 0.0
        %1573 = vmatprep.subr.mxu0 0.0
        %1574 = vmatpush1.msra.mxu0 0.0
        %1575 = vmatprep.subr.mxu0 0.0
        %1576 = vmatpush1.msra.mxu0 0.0
        %1577 = vmatprep.subr.mxu0 0.0
        %1578 = vmatpush1.msra.mxu0 0.0
        %1579 = vmatprep.subr.mxu0 0.0
        %1580 = vmatpush1.msra.mxu0 0.0
        %1581 = vmatprep.subr.mxu0 0.0
        %1582 = vmatpush1.msra.mxu0 0.0
        %1583 = vmatprep.subr.mxu0 0.0
        %1584 = vmatpush1.msra.mxu0 0.0
        %1585 = vmatprep.subr.mxu0 0.0
        %1586 = vmatpush1.msra.mxu0 0.0
        %1587 = vmatprep.subr.mxu0 0.0
        %1588 = vmatpush1.msra.mxu0 0.0
        %1589 = vmatprep.subr.mxu0 0.0
        %1590 = vmatpush1.msra.mxu0 0.0
        %1591 = vmatprep.subr.mxu0 0.0
        %1592 = vmatpush1.msra.mxu0 0.0
        %1593 = vmatprep.subr.mxu0 0.0
        %1594 = vmatpush1.msra.mxu0 0.0
        %1595 = vmatprep.subr.mxu0 0.0
        %1596 = vmatpush1.msra.mxu0 0.0
        %1597 = vmatprep.subr.mxu0 0.0
        %1598 = vmatpush1.msra.mxu0 0.0
        %1599 = vmatprep.subr.mxu0 0.0
        %1600 = vmatpush1.msra.mxu0 0.0
        %1601 = vmatprep.subr.mxu0 0.0
        %1602 = vmatpush1.msra.mxu0 0.0
        %1603 = vmatprep.mubr.f32.mxu0 0.0
        %1604 = vmatmul.mubr.f32.gmra.mrb[0].mxu0 %v1537
        %v1605 = vpop.f32.mrb[0].mxu0
        %v1606 = vadd.f32 0.0, %v1605
        %v1607 = vpop.f32.mrb[0].mxu0
        %1608 = vdwg.mxu0
        %v1610 = vlaneseq
        %v1611 = vshrl.u32 %v1610, 7
        %v1612 = vsub.s32 0, %v1611
        %v1613 = vrot.slane %v1530, %v1612
        %v1616 = vsel %vm1491, %v1504, 0
        %1618 = vmatprep.subr.mxu0 0.0
        %1619 = vmatpush1.msra.mxu0 %v1606
        %1620 = vmatprep.subr.mxu0 0.0
        %1621 = vmatpush1.msra.mxu0 0.0
        %1622 = vmatprep.subr.mxu0 0.0
        %1623 = vmatpush1.msra.mxu0 0.0
        %1624 = vmatprep.subr.mxu0 0.0
        %1625 = vmatpush1.msra.mxu0 0.0
        %1626 = vmatprep.subr.mxu0 0.0
        %1627 = vmatpush1.msra.mxu0 0.0
        %1628 = vmatprep.subr.mxu0 0.0
        %1629 = vmatpush1.msra.mxu0 0.0
        %1630 = vmatprep.subr.mxu0 0.0
        %1631 = vmatpush1.msra.mxu0 0.0
        %1632 = vmatprep.subr.mxu0 0.0
        %1633 = vmatpush1.msra.mxu0 0.0
        %1634 = vmatprep.subr.mxu0 0.0
        %1635 = vmatpush1.msra.mxu0 0.0
        %1636 = vmatprep.subr.mxu0 0.0
        %1637 = vmatpush1.msra.mxu0 0.0
        %1638 = vmatprep.subr.mxu0 0.0
        %1639 = vmatpush1.msra.mxu0 0.0
        %1640 = vmatprep.subr.mxu0 0.0
        %1641 = vmatpush1.msra.mxu0 0.0
        %1642 = vmatprep.subr.mxu0 0.0
        %1643 = vmatpush1.msra.mxu0 0.0
        %1644 = vmatprep.subr.mxu0 0.0
        %1645 = vmatpush1.msra.mxu0 0.0
        %1646 = vmatprep.subr.mxu0 0.0
        %1647 = vmatpush1.msra.mxu0 0.0
        %1648 = vmatprep.subr.mxu0 0.0
        %1649 = vmatpush1.msra.mxu0 0.0
        %1650 = vmatprep.subr.mxu0 0.0
        %1651 = vmatpush1.msra.mxu0 0.0
        %1652 = vmatprep.subr.mxu0 0.0
        %1653 = vmatpush1.msra.mxu0 0.0
        %1654 = vmatprep.subr.mxu0 0.0
        %1655 = vmatpush1.msra.mxu0 0.0
        %1656 = vmatprep.subr.mxu0 0.0
        %1657 = vmatpush1.msra.mxu0 0.0
        %1658 = vmatprep.subr.mxu0 0.0
        %1659 = vmatpush1.msra.mxu0 0.0
        %1660 = vmatprep.subr.mxu0 0.0
        %1661 = vmatpush1.msra.mxu0 0.0
        %1662 = vmatprep.subr.mxu0 0.0
        %1663 = vmatpush1.msra.mxu0 0.0
        %1664 = vmatprep.subr.mxu0 0.0
        %1665 = vmatpush1.msra.mxu0 0.0
        %1666 = vmatprep.subr.mxu0 0.0
        %1667 = vmatpush1.msra.mxu0 0.0
        %1668 = vmatprep.subr.mxu0 0.0
        %1669 = vmatpush1.msra.mxu0 0.0
        %1670 = vmatprep.subr.mxu0 0.0
        %1671 = vmatpush1.msra.mxu0 0.0
        %1672 = vmatprep.subr.mxu0 0.0
        %1673 = vmatpush1.msra.mxu0 0.0
        %1674 = vmatprep.subr.mxu0 0.0
        %1675 = vmatpush1.msra.mxu0 0.0
        %1676 = vmatprep.subr.mxu0 0.0
        %1677 = vmatpush1.msra.mxu0 0.0
        %1678 = vmatprep.subr.mxu0 0.0
        %1679 = vmatpush1.msra.mxu0 0.0
        %1680 = vmatprep.subr.mxu0 0.0
        %1681 = vmatpush1.msra.mxu0 0.0
        %1682 = vmatprep.mubr.f32.mxu0 0.0
        %1683 = vmatmul.mubr.f32.gmra.mrb[0].mxu0 %v1616
        %v1684 = vpop.f32.mrb[0].mxu0
        %v1685 = vadd.f32 %v1613, %v1684
        %v1686 = vpop.f32.mrb[0].mxu0
        %1687 = vdwg.mxu0
        %v1688 = vmax.f32 %v1685, 0.0
        %v1690 = vsel %vm840, %v1688, 0
        %1692 = vmatprep.subr.mxu0 0.0
        %1693 = vmatpush1.msra.mxu0 %v1531
        %1694 = vmatprep.subr.mxu0 0.0
        %1695 = vmatpush1.msra.mxu0 %v1532
        %1696 = vmatprep.subr.mxu0 0.0
        %1697 = vmatpush1.msra.mxu0 %v1533
        %1698 = vmatprep.subr.mxu0 0.0
        %1699 = vmatpush1.msra.mxu0 %v1534
        %1700 = vmatprep.subr.mxu0 0.0
        %1701 = vmatpush1.msra.mxu0 0.0
        %1702 = vmatprep.subr.mxu0 0.0
        %1703 = vmatpush1.msra.mxu0 0.0
        %1704 = vmatprep.subr.mxu0 0.0
        %1705 = vmatpush1.msra.mxu0 0.0
        %1706 = vmatprep.subr.mxu0 0.0
        %1707 = vmatpush1.msra.mxu0 0.0
        %1708 = vmatprep.subr.mxu0 0.0
        %1709 = vmatpush1.msra.mxu0 0.0
        %1710 = vmatprep.subr.mxu0 0.0
        %1711 = vmatpush1.msra.mxu0 0.0
        %1712 = vmatprep.subr.mxu0 0.0
        %1713 = vmatpush1.msra.mxu0 0.0
        %1714 = vmatprep.subr.mxu0 0.0
        %1715 = vmatpush1.msra.mxu0 0.0
        %1716 = vmatprep.subr.mxu0 0.0
        %1717 = vmatpush1.msra.mxu0 0.0
        %1718 = vmatprep.subr.mxu0 0.0
        %1719 = vmatpush1.msra.mxu0 0.0
        %1720 = vmatprep.subr.mxu0 0.0
        %1721 = vmatpush1.msra.mxu0 0.0
        %1722 = vmatprep.subr.mxu0 0.0
        %1723 = vmatpush1.msra.mxu0 0.0
        %1724 = vmatprep.subr.mxu0 0.0
        %1725 = vmatpush1.msra.mxu0 0.0
        %1726 = vmatprep.subr.mxu0 0.0
        %1727 = vmatpush1.msra.mxu0 0.0
        %1728 = vmatprep.subr.mxu0 0.0
        %1729 = vmatpush1.msra.mxu0 0.0
        %1730 = vmatprep.subr.mxu0 0.0
        %1731 = vmatpush1.msra.mxu0 0.0
        %1732 = vmatprep.subr.mxu0 0.0
        %1733 = vmatpush1.msra.mxu0 0.0
        %1734 = vmatprep.subr.mxu0 0.0
        %1735 = vmatpush1.msra.mxu0 0.0
        %1736 = vmatprep.subr.mxu0 0.0
        %1737 = vmatpush1.msra.mxu0 0.0
        %1738 = vmatprep.subr.mxu0 0.0
        %1739 = vmatpush1.msra.mxu0 0.0
        %1740 = vmatprep.subr.mxu0 0.0
        %1741 = vmatpush1.msra.mxu0 0.0
        %1742 = vmatprep.subr.mxu0 0.0
        %1743 = vmatpush1.msra.mxu0 0.0
        %1744 = vmatprep.subr.mxu0 0.0
        %1745 = vmatpush1.msra.mxu0 0.0
        %1746 = vmatprep.subr.mxu0 0.0
        %1747 = vmatpush1.msra.mxu0 0.0
        %1748 = vmatprep.subr.mxu0 0.0
        %1749 = vmatpush1.msra.mxu0 0.0
        %1750 = vmatprep.subr.mxu0 0.0
        %1751 = vmatpush1.msra.mxu0 0.0
        %1752 = vmatprep.subr.mxu0 0.0
        %1753 = vmatpush1.msra.mxu0 0.0
        %1754 = vmatprep.subr.mxu0 0.0
        %1755 = vmatpush1.msra.mxu0 0.0
        %1756 = vmatprep.mubr.f32.mxu0 0.0
        %1757 = vmatmul.mubr.f32.gmra.mrb[0].mxu0 %v1690
        %v1758 = vpop.f32.mrb[0].mxu0
        %v1759 = vadd.f32 0.0, %v1758
        %v1760 = vpop.f32.mrb[0].mxu0
        %1761 = vdwg.mxu0
        %v1763 = vlaneseq
        %v1764 = vshrl.u32 %v1763, 7
        %v1765 = vsub.s32 0, %v1764
        %v1766 = vrot.slane %v1535, %v1765
        %1768 = vmatprep.subr.mxu0 0.0
        %1769 = vmatpush1.msra.mxu0 %v1759
        %1770 = vmatprep.subr.mxu0 0.0
        %1771 = vmatpush1.msra.mxu0 0.0
        %1772 = vmatprep.subr.mxu0 0.0
        %1773 = vmatpush1.msra.mxu0 0.0
        %1774 = vmatprep.subr.mxu0 0.0
        %1775 = vmatpush1.msra.mxu0 0.0
        %1776 = vmatprep.subr.mxu0 0.0
        %1777 = vmatpush1.msra.mxu0 0.0
        %1778 = vmatprep.subr.mxu0 0.0
        %1779 = vmatpush1.msra.mxu0 0.0
        %1780 = vmatprep.subr.mxu0 0.0
        %1781 = vmatpush1.msra.mxu0 0.0
        %1782 = vmatprep.subr.mxu0 0.0
        %1783 = vmatpush1.msra.mxu0 0.0
        %1784 = vmatprep.subr.mxu0 0.0
        %1785 = vmatpush1.msra.mxu0 0.0
        %1786 = vmatprep.subr.mxu0 0.0
        %1787 = vmatpush1.msra.mxu0 0.0
        %1788 = vmatprep.subr.mxu0 0.0
        %1789 = vmatpush1.msra.mxu0 0.0
        %1790 = vmatprep.subr.mxu0 0.0
        %1791 = vmatpush1.msra.mxu0 0.0
        %1792 = vmatprep.subr.mxu0 0.0
        %1793 = vmatpush1.msra.mxu0 0.0
        %1794 = vmatprep.subr.mxu0 0.0
        %1795 = vmatpush1.msra.mxu0 0.0
        %1796 = vmatprep.subr.mxu0 0.0
        %1797 = vmatpush1.msra.mxu0 0.0
        %1798 = vmatprep.subr.mxu0 0.0
        %1799 = vmatpush1.msra.mxu0 0.0
        %1800 = vmatprep.subr.mxu0 0.0
        %1801 = vmatpush1.msra.mxu0 0.0
        %1802 = vmatprep.subr.mxu0 0.0
        %1803 = vmatpush1.msra.mxu0 0.0
        %1804 = vmatprep.subr.mxu0 0.0
        %1805 = vmatpush1.msra.mxu0 0.0
        %1806 = vmatprep.subr.mxu0 0.0
        %1807 = vmatpush1.msra.mxu0 0.0
        %1808 = vmatprep.subr.mxu0 0.0
        %1809 = vmatpush1.msra.mxu0 0.0
        %1810 = vmatprep.subr.mxu0 0.0
        %1811 = vmatpush1.msra.mxu0 0.0
        %1812 = vmatprep.subr.mxu0 0.0
        %1813 = vmatpush1.msra.mxu0 0.0
        %1814 = vmatprep.subr.mxu0 0.0
        %1815 = vmatpush1.msra.mxu0 0.0
        %1816 = vmatprep.subr.mxu0 0.0
        %1817 = vmatpush1.msra.mxu0 0.0
        %1818 = vmatprep.subr.mxu0 0.0
        %1819 = vmatpush1.msra.mxu0 0.0
        %1820 = vmatprep.subr.mxu0 0.0
        %1821 = vmatpush1.msra.mxu0 0.0
        %1822 = vmatprep.subr.mxu0 0.0
        %1823 = vmatpush1.msra.mxu0 0.0
        %1824 = vmatprep.subr.mxu0 0.0
        %1825 = vmatpush1.msra.mxu0 0.0
        %1826 = vmatprep.subr.mxu0 0.0
        %1827 = vmatpush1.msra.mxu0 0.0
        %1828 = vmatprep.subr.mxu0 0.0
        %1829 = vmatpush1.msra.mxu0 0.0
        %1830 = vmatprep.subr.mxu0 0.0
        %1831 = vmatpush1.msra.mxu0 0.0
        %1832 = vmatprep.mubr.f32.mxu0 0.0
        %1833 = vmatmul.mubr.f32.gmra.mrb[0].mxu0 %v1616
        %v1834 = vpop.f32.mrb[0].mxu0
        %v1835 = vadd.f32 %v1766, %v1834
        %v1836 = vpop.f32.mrb[0].mxu0
        %1837 = vdwg.mxu0
        %v1838 = vtanh.pop %v1835
        %1839 = vset.pattern.permute.xlu0 0
        %1840 = vperm.xlu0 %1839, %v1535
        %v1841 = vpop.permute.xlu0 %1840
        %v1843 = vlaneseq
        %v1844 = vshrl.u32 %v1843, 7
        %v1845 = vsub.s32 0, %v1844
        %v1846 = vrot.slane %v1841, %v1845
        %1847 = vxpose.xlu0.b32.start [1/16] %v1759, 128
        %1848 = vxpose.xlu0.b32.cont [2/16] 0.0, 128
        %1849 = vxpose.xlu0.b32.cont [3/16] 0.0, 128
        %1850 = vxpose.xlu0.b32.cont [4/16] 0.0, 128
        %1851 = vxpose.xlu0.b32.cont [5/16] 0.0, 128
        %1852 = vxpose.xlu0.b32.cont [6/16] 0.0, 128
        %1853 = vxpose.xlu0.b32.cont [7/16] 0.0, 128
        %1854 = vxpose.xlu0.b32.cont [8/16] 0.0, 128
        %1855 = vxpose.xlu0.b32.cont [9/16] 0.0, 128
        %1856 = vxpose.xlu0.b32.cont [10/16] 0.0, 128
        %1857 = vxpose.xlu0.b32.cont [11/16] 0.0, 128
        %1858 = vxpose.xlu0.b32.cont [12/16] 0.0, 128
        %1859 = vxpose.xlu0.b32.cont [13/16] 0.0, 128
        %1860 = vxpose.xlu0.b32.cont [14/16] 0.0, 128
        %1861 = vxpose.xlu0.b32.cont [15/16] 0.0, 128
        %1862 = vxpose.xlu0.b32.end [16/16] 0.0, 128
        %v1863 = vpop.trf.xlu0
        %v1864 = vpop.trf.xlu0
        %v1865 = vpop.trf.xlu0
        %v1866 = vpop.trf.xlu0
        %v1867 = vpop.trf.xlu0
        %v1868 = vpop.trf.xlu0
        %v1869 = vpop.trf.xlu0
        %v1870 = vpop.trf.xlu0
        %v1871 = vpop.trf.xlu0
        %v1872 = vpop.trf.xlu0
        %v1873 = vpop.trf.xlu0
        %v1874 = vpop.trf.xlu0
        %v1875 = vpop.trf.xlu0
        %v1876 = vpop.trf.xlu0
        %v1877 = vpop.trf.xlu0
        %v1878 = vpop.trf.xlu0
        %v1880 = vsel %vm1491, %v1863, 0
        %1882 = vmatprep.subr.mxu0 0.0
        %1883 = vmatpush1.msra.mxu0 %v1504
        %1884 = vmatprep.subr.mxu0 0.0
        %1885 = vmatpush1.msra.mxu0 0.0
        %1886 = vmatprep.subr.mxu0 0.0
        %1887 = vmatpush1.msra.mxu0 0.0
        %1888 = vmatprep.subr.mxu0 0.0
        %1889 = vmatpush1.msra.mxu0 0.0
        %1890 = vmatprep.subr.mxu0 0.0
        %1891 = vmatpush1.msra.mxu0 0.0
        %1892 = vmatprep.subr.mxu0 0.0
        %1893 = vmatpush1.msra.mxu0 0.0
        %1894 = vmatprep.subr.mxu0 0.0
        %1895 = vmatpush1.msra.mxu0 0.0
        %1896 = vmatprep.subr.mxu0 0.0
        %1897 = vmatpush1.msra.mxu0 0.0
        %1898 = vmatprep.subr.mxu0 0.0
        %1899 = vmatpush1.msra.mxu0 0.0
        %1900 = vmatprep.subr.mxu0 0.0
        %1901 = vmatpush1.msra.mxu0 0.0
        %1902 = vmatprep.subr.mxu0 0.0
        %1903 = vmatpush1.msra.mxu0 0.0
        %1904 = vmatprep.subr.mxu0 0.0
        %1905 = vmatpush1.msra.mxu0 0.0
        %1906 = vmatprep.subr.mxu0 0.0
        %1907 = vmatpush1.msra.mxu0 0.0
        %1908 = vmatprep.subr.mxu0 0.0
        %1909 = vmatpush1.msra.mxu0 0.0
        %1910 = vmatprep.subr.mxu0 0.0
        %1911 = vmatpush1.msra.mxu0 0.0
        %1912 = vmatprep.subr.mxu0 0.0
        %1913 = vmatpush1.msra.mxu0 0.0
        %1914 = vmatprep.subr.mxu0 0.0
        %1915 = vmatpush1.msra.mxu0 0.0
        %1916 = vmatprep.subr.mxu0 0.0
        %1917 = vmatpush1.msra.mxu0 0.0
        %1918 = vmatprep.subr.mxu0 0.0
        %1919 = vmatpush1.msra.mxu0 0.0
        %1920 = vmatprep.subr.mxu0 0.0
        %1921 = vmatpush1.msra.mxu0 0.0
        %1922 = vmatprep.subr.mxu0 0.0
        %1923 = vmatpush1.msra.mxu0 0.0
        %1924 = vmatprep.subr.mxu0 0.0
        %1925 = vmatpush1.msra.mxu0 0.0
        %1926 = vmatprep.subr.mxu0 0.0
        %1927 = vmatpush1.msra.mxu0 0.0
        %1928 = vmatprep.subr.mxu0 0.0
        %1929 = vmatpush1.msra.mxu0 0.0
        %1930 = vmatprep.subr.mxu0 0.0
        %1931 = vmatpush1.msra.mxu0 0.0
        %1932 = vmatprep.subr.mxu0 0.0
        %1933 = vmatpush1.msra.mxu0 0.0
        %1934 = vmatprep.subr.mxu0 0.0
        %1935 = vmatpush1.msra.mxu0 0.0
        %1936 = vmatprep.subr.mxu0 0.0
        %1937 = vmatpush1.msra.mxu0 0.0
        %1938 = vmatprep.subr.mxu0 0.0
        %1939 = vmatpush1.msra.mxu0 0.0
        %1940 = vmatprep.subr.mxu0 0.0
        %1941 = vmatpush1.msra.mxu0 0.0
        %1942 = vmatprep.subr.mxu0 0.0
        %1943 = vmatpush1.msra.mxu0 0.0
        %1944 = vmatprep.subr.mxu0 0.0
        %1945 = vmatpush1.msra.mxu0 0.0
        %1946 = vmatprep.mubr.f32.mxu0 0.0
        %1947 = vmatmul.mubr.f32.gmra.mrb[0].mxu0 %v1880
        %v1948 = vpop.f32.mrb[0].mxu0
        %v1949 = vadd.f32 %v1846, %v1948
        %v1950 = vpop.f32.mrb[0].mxu0
        %1951 = vdwg.mxu0
        %v1952 = vtanh.pop %v1949
        %1954 = vset.pattern.permute.xlu0 0
        %1955 = vperm.xlu0 %1954, %v1838
        %v1956 = vpop.permute.xlu0 %1955
        %v1958 = vlaneseq
        %v1959 = vshrl.u32 %v1958, 7
        %v1960 = vsub.s32 0, %v1959
        %v1961 = vrot.slane %v1952, %v1960
        %vm1962 = vcmp.gt.f32.partialorder %v1956, %v1961
        %vm1963 = vcmp.eq.f32.partialorder %v1956, %v1961
        %vm1964 = vmand %vm1963, %vm1150
        %vm1965 = vmor %vm1962, %vm1964
        %vm1966 = vmand %vm1144, %vm1965
        %v1967 = vsel %vm1966, 1, 0
        %v1968 = vcvt.s32.f32 %v1967
        %v1969 = vsel %vm1491, %v1968, 0.0
        %v1970 = vrot.slane %v1969, 4
        %v1971 = vadd.f32 %v1969, %v1970
        %v1972 = vrot.slane %v1971, 2
        %v1973 = vadd.f32 %v1971, %v1972
        %v1974 = vrot.slane %v1973, 1
        %v1975 = vadd.f32 %v1973, %v1974
        %vm1976 = vcmp.lt.f32.partialorder %v1975, 4.0
        %v1977 = vsel %vm1976, 1, 0
        %v1978 = vcvt.s32.f32 %v1977
        %v1980 = vsel %vm1491, %v1978, 0
        %1982 = vmatprep.subr.mxu0 0.0
        %1983 = vmatpush1.msra.mxu0 %v1174
        %1984 = vmatprep.subr.mxu0 0.0
        %1985 = vmatpush1.msra.mxu0 0.0
        %1986 = vmatprep.subr.mxu0 0.0
        %1987 = vmatpush1.msra.mxu0 0.0
        %1988 = vmatprep.subr.mxu0 0.0
        %1989 = vmatpush1.msra.mxu0 0.0
        %1990 = vmatprep.subr.mxu0 0.0
        %1991 = vmatpush1.msra.mxu0 0.0
        %1992 = vmatprep.subr.mxu0 0.0
        %1993 = vmatpush1.msra.mxu0 0.0
        %1994 = vmatprep.subr.mxu0 0.0
        %1995 = vmatpush1.msra.mxu0 0.0
        %1996 = vmatprep.subr.mxu0 0.0
        %1997 = vmatpush1.msra.mxu0 0.0
        %1998 = vmatprep.subr.mxu0 0.0
        %1999 = vmatpush1.msra.mxu0 0.0
        %2000 = vmatprep.subr.mxu0 0.0
        %2001 = vmatpush1.msra.mxu0 0.0
        %2002 = vmatprep.subr.mxu0 0.0
        %2003 = vmatpush1.msra.mxu0 0.0
        %2004 = vmatprep.subr.mxu0 0.0
        %2005 = vmatpush1.msra.mxu0 0.0
        %2006 = vmatprep.subr.mxu0 0.0
        %2007 = vmatpush1.msra.mxu0 0.0
        %2008 = vmatprep.subr.mxu0 0.0
        %2009 = vmatpush1.msra.mxu0 0.0
        %2010 = vmatprep.subr.mxu0 0.0
        %2011 = vmatpush1.msra.mxu0 0.0
        %2012 = vmatprep.subr.mxu0 0.0
        %2013 = vmatpush1.msra.mxu0 0.0
        %2014 = vmatprep.subr.mxu0 0.0
        %2015 = vmatpush1.msra.mxu0 0.0
        %2016 = vmatprep.subr.mxu0 0.0
        %2017 = vmatpush1.msra.mxu0 0.0
        %2018 = vmatprep.subr.mxu0 0.0
        %2019 = vmatpush1.msra.mxu0 0.0
        %2020 = vmatprep.subr.mxu0 0.0
        %2021 = vmatpush1.msra.mxu0 0.0
        %2022 = vmatprep.subr.mxu0 0.0
        %2023 = vmatpush1.msra.mxu0 0.0
        %2024 = vmatprep.subr.mxu0 0.0
        %2025 = vmatpush1.msra.mxu0 0.0
        %2026 = vmatprep.subr.mxu0 0.0
        %2027 = vmatpush1.msra.mxu0 0.0
        %2028 = vmatprep.subr.mxu0 0.0
        %2029 = vmatpush1.msra.mxu0 0.0
        %2030 = vmatprep.subr.mxu0 0.0
        %2031 = vmatpush1.msra.mxu0 0.0
        %2032 = vmatprep.subr.mxu0 0.0
        %2033 = vmatpush1.msra.mxu0 0.0
        %2034 = vmatprep.subr.mxu0 0.0
        %2035 = vmatpush1.msra.mxu0 0.0
        %2036 = vmatprep.subr.mxu0 0.0
        %2037 = vmatpush1.msra.mxu0 0.0
        %2038 = vmatprep.subr.mxu0 0.0
        %2039 = vmatpush1.msra.mxu0 0.0
        %2040 = vmatprep.subr.mxu0 0.0
        %2041 = vmatpush1.msra.mxu0 0.0
        %2042 = vmatprep.subr.mxu0 0.0
        %2043 = vmatpush1.msra.mxu0 0.0
        %2044 = vmatprep.subr.mxu0 0.0
        %2045 = vmatpush1.msra.mxu0 0.0
        %2046 = vmatprep.mubr.f32.mxu0 0.0
        %2047 = vmatmul.mubr.f32.gmra.mrb[0].mxu0 %v1980
        %v2048 = vpop.f32.mrb[0].mxu0
        %v2049 = vadd.f32 0.0, %v2048
        %v2050 = vpop.f32.mrb[0].mxu0
        %2051 = vdwg.mxu0
        %v2052 = vlaneseq
        %v2053 = vshrl.u32 %v2052, 7
        %v2054 = vsub.s32 0, %v2053
        %v2055 = vrot.slane %v2049, %v2054
        %vm2056 = vcmp.eq.f32.partialorder %v2055, %v1251
        %vm2057 = vcmp.eq.s32.totalorder %v1977, 1
        %vm2058 = vmand %vm2057, %vm2056
        %v2059 = vsel %vm2058, 1, 0
        %v2060 = vcvt.s32.f32 %v2059
        %v2061 = vmul.f32 %v2060, %v1961
        %v2063 = vsel %vm1491, %v2061, 0
        %2065 = vmatprep.subr.mxu0 0.0
        %2066 = vmatpush1.msra.mxu0 %v1688
        %2067 = vmatprep.subr.mxu0 0.0
        %2068 = vmatpush1.msra.mxu0 0.0
        %2069 = vmatprep.subr.mxu0 0.0
        %2070 = vmatpush1.msra.mxu0 0.0
        %2071 = vmatprep.subr.mxu0 0.0
        %2072 = vmatpush1.msra.mxu0 0.0
        %2073 = vmatprep.subr.mxu0 0.0
        %2074 = vmatpush1.msra.mxu0 0.0
        %2075 = vmatprep.subr.mxu0 0.0
        %2076 = vmatpush1.msra.mxu0 0.0
        %2077 = vmatprep.subr.mxu0 0.0
        %2078 = vmatpush1.msra.mxu0 0.0
        %2079 = vmatprep.subr.mxu0 0.0
        %2080 = vmatpush1.msra.mxu0 0.0
        %2081 = vmatprep.subr.mxu0 0.0
        %2082 = vmatpush1.msra.mxu0 0.0
        %2083 = vmatprep.subr.mxu0 0.0
        %2084 = vmatpush1.msra.mxu0 0.0
        %2085 = vmatprep.subr.mxu0 0.0
        %2086 = vmatpush1.msra.mxu0 0.0
        %2087 = vmatprep.subr.mxu0 0.0
        %2088 = vmatpush1.msra.mxu0 0.0
        %2089 = vmatprep.subr.mxu0 0.0
        %2090 = vmatpush1.msra.mxu0 0.0
        %2091 = vmatprep.subr.mxu0 0.0
        %2092 = vmatpush1.msra.mxu0 0.0
        %2093 = vmatprep.subr.mxu0 0.0
        %2094 = vmatpush1.msra.mxu0 0.0
        %2095 = vmatprep.subr.mxu0 0.0
        %2096 = vmatpush1.msra.mxu0 0.0
        %2097 = vmatprep.subr.mxu0 0.0
        %2098 = vmatpush1.msra.mxu0 0.0
        %2099 = vmatprep.subr.mxu0 0.0
        %2100 = vmatpush1.msra.mxu0 0.0
        %2101 = vmatprep.subr.mxu0 0.0
        %2102 = vmatpush1.msra.mxu0 0.0
        %2103 = vmatprep.subr.mxu0 0.0
        %2104 = vmatpush1.msra.mxu0 0.0
        %2105 = vmatprep.subr.mxu0 0.0
        %2106 = vmatpush1.msra.mxu0 0.0
        %2107 = vmatprep.subr.mxu0 0.0
        %2108 = vmatpush1.msra.mxu0 0.0
        %2109 = vmatprep.subr.mxu0 0.0
        %2110 = vmatpush1.msra.mxu0 0.0
        %2111 = vmatprep.subr.mxu0 0.0
        %2112 = vmatpush1.msra.mxu0 0.0
        %2113 = vmatprep.subr.mxu0 0.0
        %2114 = vmatpush1.msra.mxu0 0.0
        %2115 = vmatprep.subr.mxu0 0.0
        %2116 = vmatpush1.msra.mxu0 0.0
        %2117 = vmatprep.subr.mxu0 0.0
        %2118 = vmatpush1.msra.mxu0 0.0
        %2119 = vmatprep.subr.mxu0 0.0
        %2120 = vmatpush1.msra.mxu0 0.0
        %2121 = vmatprep.subr.mxu0 0.0
        %2122 = vmatpush1.msra.mxu0 0.0
        %2123 = vmatprep.subr.mxu0 0.0
        %2124 = vmatpush1.msra.mxu0 0.0
        %2125 = vmatprep.subr.mxu0 0.0
        %2126 = vmatpush1.msra.mxu0 0.0
        %2127 = vmatprep.subr.mxu0 0.0
        %2128 = vmatpush1.msra.mxu0 0.0
        %2129 = vmatprep.mubr.f32.mxu0 0.0
        %2130 = vmatmul.mubr.f32.gmra.mrb[0].mxu0 %v2063
        %v2131 = vpop.f32.mrb[0].mxu0
        %v2132 = vadd.f32 0.0, %v2131
        %v2133 = vpop.f32.mrb[0].mxu0
        %2134 = vdwg.mxu0
        %vm2135 = vcmp.ne.f32.partialorder %v1504, 0.0
        %v2136 = vsel %vm2135, 1, 0
        %v2137 = vcvt.s32.f32 %v2136
        %v2138 = vmul.f32 %v2137, %v1341
        %v2140 = vsel %vm1491, %v2060, 0
        %2142 = vmatprep.subr.mxu0 0.0
        %2143 = vmatpush1.msra.mxu0 %v2138
        %2144 = vmatprep.subr.mxu0 0.0
        %2145 = vmatpush1.msra.mxu0 0.0
        %2146 = vmatprep.subr.mxu0 0.0
        %2147 = vmatpush1.msra.mxu0 0.0
        %2148 = vmatprep.subr.mxu0 0.0
        %2149 = vmatpush1.msra.mxu0 0.0
        %2150 = vmatprep.subr.mxu0 0.0
        %2151 = vmatpush1.msra.mxu0 0.0
        %2152 = vmatprep.subr.mxu0 0.0
        %2153 = vmatpush1.msra.mxu0 0.0
        %2154 = vmatprep.subr.mxu0 0.0
        %2155 = vmatpush1.msra.mxu0 0.0
        %2156 = vmatprep.subr.mxu0 0.0
        %2157 = vmatpush1.msra.mxu0 0.0
        %2158 = vmatprep.subr.mxu0 0.0
        %2159 = vmatpush1.msra.mxu0 0.0
        %2160 = vmatprep.subr.mxu0 0.0
        %2161 = vmatpush1.msra.mxu0 0.0
        %2162 = vmatprep.subr.mxu0 0.0
        %2163 = vmatpush1.msra.mxu0 0.0
        %2164 = vmatprep.subr.mxu0 0.0
        %2165 = vmatpush1.msra.mxu0 0.0
        %2166 = vmatprep.subr.mxu0 0.0
        %2167 = vmatpush1.msra.mxu0 0.0
        %2168 = vmatprep.subr.mxu0 0.0
        %2169 = vmatpush1.msra.mxu0 0.0
        %2170 = vmatprep.subr.mxu0 0.0
        %2171 = vmatpush1.msra.mxu0 0.0
        %2172 = vmatprep.subr.mxu0 0.0
        %2173 = vmatpush1.msra.mxu0 0.0
        %2174 = vmatprep.subr.mxu0 0.0
        %2175 = vmatpush1.msra.mxu0 0.0
        %2176 = vmatprep.subr.mxu0 0.0
        %2177 = vmatpush1.msra.mxu0 0.0
        %2178 = vmatprep.subr.mxu0 0.0
        %2179 = vmatpush1.msra.mxu0 0.0
        %2180 = vmatprep.subr.mxu0 0.0
        %2181 = vmatpush1.msra.mxu0 0.0
        %2182 = vmatprep.subr.mxu0 0.0
        %2183 = vmatpush1.msra.mxu0 0.0
        %2184 = vmatprep.subr.mxu0 0.0
        %2185 = vmatpush1.msra.mxu0 0.0
        %2186 = vmatprep.subr.mxu0 0.0
        %2187 = vmatpush1.msra.mxu0 0.0
        %2188 = vmatprep.subr.mxu0 0.0
        %2189 = vmatpush1.msra.mxu0 0.0
        %2190 = vmatprep.subr.mxu0 0.0
        %2191 = vmatpush1.msra.mxu0 0.0
        %2192 = vmatprep.subr.mxu0 0.0
        %2193 = vmatpush1.msra.mxu0 0.0
        %2194 = vmatprep.subr.mxu0 0.0
        %2195 = vmatpush1.msra.mxu0 0.0
        %2196 = vmatprep.subr.mxu0 0.0
        %2197 = vmatpush1.msra.mxu0 0.0
        %2198 = vmatprep.subr.mxu0 0.0
        %2199 = vmatpush1.msra.mxu0 0.0
        %2200 = vmatprep.subr.mxu0 0.0
        %2201 = vmatpush1.msra.mxu0 0.0
        %2202 = vmatprep.subr.mxu0 0.0
        %2203 = vmatpush1.msra.mxu0 0.0
        %2204 = vmatprep.subr.mxu0 0.0
        %2205 = vmatpush1.msra.mxu0 0.0
        %2206 = vmatprep.mubr.f32.mxu0 0.0
        %2207 = vmatmul.mubr.f32.gmra.mrb[0].mxu0 %v2140
        %v2208 = vpop.f32.mrb[0].mxu0
        %v2209 = vadd.f32 0.0, %v2208
        %v2210 = vpop.f32.mrb[0].mxu0
        %2211 = vdwg.mxu0
        %v2213 = vsel %vm1491, %v2209, 0
        %2215 = vmatprep.subr.mxu0 0.0
        %2216 = vmatpush1.xpose.msra.mxu0 %v2140
        %2217 = vmatprep.subr.mxu0 0.0
        %2218 = vmatpush1.xpose.msra.mxu0 0.0
        %2219 = vmatprep.subr.mxu0 0.0
        %2220 = vmatpush1.xpose.msra.mxu0 0.0
        %2221 = vmatprep.subr.mxu0 0.0
        %2222 = vmatpush1.xpose.msra.mxu0 0.0
        %2223 = vmatprep.subr.mxu0 0.0
        %2224 = vmatpush1.xpose.msra.mxu0 0.0
        %2225 = vmatprep.subr.mxu0 0.0
        %2226 = vmatpush1.xpose.msra.mxu0 0.0
        %2227 = vmatprep.subr.mxu0 0.0
        %2228 = vmatpush1.xpose.msra.mxu0 0.0
        %2229 = vmatprep.subr.mxu0 0.0
        %2230 = vmatpush1.xpose.msra.mxu0 0.0
        %2231 = vmatprep.subr.mxu0 0.0
        %2232 = vmatpush1.xpose.msra.mxu0 0.0
        %2233 = vmatprep.subr.mxu0 0.0
        %2234 = vmatpush1.xpose.msra.mxu0 0.0
        %2235 = vmatprep.subr.mxu0 0.0
        %2236 = vmatpush1.xpose.msra.mxu0 0.0
        %2237 = vmatprep.subr.mxu0 0.0
        %2238 = vmatpush1.xpose.msra.mxu0 0.0
        %2239 = vmatprep.subr.mxu0 0.0
        %2240 = vmatpush1.xpose.msra.mxu0 0.0
        %2241 = vmatprep.subr.mxu0 0.0
        %2242 = vmatpush1.xpose.msra.mxu0 0.0
        %2243 = vmatprep.subr.mxu0 0.0
        %2244 = vmatpush1.xpose.msra.mxu0 0.0
        %2245 = vmatprep.subr.mxu0 0.0
        %2246 = vmatpush1.xpose.msra.mxu0 0.0
        %2247 = vmatprep.subr.mxu0 0.0
        %2248 = vmatpush1.xpose.msra.mxu0 0.0
        %2249 = vmatprep.subr.mxu0 0.0
        %2250 = vmatpush1.xpose.msra.mxu0 0.0
        %2251 = vmatprep.subr.mxu0 0.0
        %2252 = vmatpush1.xpose.msra.mxu0 0.0
        %2253 = vmatprep.subr.mxu0 0.0
        %2254 = vmatpush1.xpose.msra.mxu0 0.0
        %2255 = vmatprep.subr.mxu0 0.0
        %2256 = vmatpush1.xpose.msra.mxu0 0.0
        %2257 = vmatprep.subr.mxu0 0.0
        %2258 = vmatpush1.xpose.msra.mxu0 0.0
        %2259 = vmatprep.subr.mxu0 0.0
        %2260 = vmatpush1.xpose.msra.mxu0 0.0
        %2261 = vmatprep.subr.mxu0 0.0
        %2262 = vmatpush1.xpose.msra.mxu0 0.0
        %2263 = vmatprep.subr.mxu0 0.0
        %2264 = vmatpush1.xpose.msra.mxu0 0.0
        %2265 = vmatprep.subr.mxu0 0.0
        %2266 = vmatpush1.xpose.msra.mxu0 0.0
        %2267 = vmatprep.subr.mxu0 0.0
        %2268 = vmatpush1.xpose.msra.mxu0 0.0
        %2269 = vmatprep.subr.mxu0 0.0
        %2270 = vmatpush1.xpose.msra.mxu0 0.0
        %2271 = vmatprep.subr.mxu0 0.0
        %2272 = vmatpush1.xpose.msra.mxu0 0.0
        %2273 = vmatprep.subr.mxu0 0.0
        %2274 = vmatpush1.xpose.msra.mxu0 0.0
        %2275 = vmatprep.subr.mxu0 0.0
        %2276 = vmatpush1.xpose.msra.mxu0 0.0
        %2277 = vmatprep.subr.mxu0 0.0
        %2278 = vmatpush1.xpose.msra.mxu0 0.0
        %2279 = vmatprep.mubr.f32.mxu0 0.0
        %2280 = vmatmul.mubr.f32.gmra.mrb[0].mxu0 %v2213
        %v2281 = vpop.f32.mrb[0].mxu0
        %v2282 = vadd.f32 %v1128, %v2281
        %v2283 = vpop.f32.mrb[0].mxu0
        %2284 = vdwg.mxu0
        %vm2285 = vcmask 27648
        %v2286 = vsel %vm2285, %v2282, 0.0
        %2287 = vadd.xlane.f32.xlu0 %v2286
        %v2288 = vpop.xlane.xlu0 %2287
        %v2289 = vrsqrt.pop %v2288
        %v2290 = vrot.slane %v2286, 4
        %v2291 = vadd.f32 %v2286, %v2290
        %v2292 = vrot.slane %v2291, 2
        %v2293 = vadd.f32 %v2291, %v2292
        %v2294 = vrot.slane %v2293, 1
        %v2295 = vadd.f32 %v2293, %v2294
        %v2296 = vrsqrt.pop %v2295
        %v2297 = vmul.f32 %v2282, %v2289
        %v2298 = vmul.f32 %v2297, %v2296
        %vm2299 = vcmask 257024
        %v2300 = vsel %vm2299, %v2132, 0.0
        %v2301 = vrot.slane %v2300, 4
        %v2302 = vadd.f32 %v2300, %v2301
        %v2303 = vrot.slane %v2302, 2
        %v2304 = vadd.f32 %v2302, %v2303
        %v2305 = vrot.slane %v2304, 1
        %v2306 = vadd.f32 %v2304, %v2305
        %v2307 = vrcp.pop 4.0
        %v2308 = vmul.f32 %v2306, %v2307
        %v2309 = vsel %vm2299, %v2132, -inf
        %v2310 = vrot.slane %v2309, 4
        %v2311 = vmax.f32 %v2309, %v2310
        %v2312 = vrot.slane %v2311, 2
        %v2313 = vmax.f32 %v2311, %v2312
        %v2314 = vrot.slane %v2313, 1
        %v2315 = vmax.f32 %v2313, %v2314
        %2317 = vrot.lane.b32.xlu0 %v2315, 32
        %v2318 = vpop.permute.xlu0 %2317
        %v2320 = vsel %vm840, %v2308, %v2318
        %v2321 = vld [vmem:[%s10] sm:$0xff]
        %v2322 = vld [vmem:[%s10 + $0x8] sm:$0xff]
        %v2323 = vld [vmem:[%s10 + $0x10] sm:$0xff]
        %v2324 = vld [vmem:[%s10 + $0x18] sm:$0xff]
        %v2325 = vld [vmem:[%s11] sm:$0x1]
        %v2326 = vld [vmem:[%s12] sm:$0xff]
        %v2327 = vld [vmem:[%s12 + $0x8] sm:$0xff]
        %v2328 = vld [vmem:[%s12 + $0x10] sm:$0xff]
        %v2329 = vld [vmem:[%s12 + $0x18] sm:$0xff]
        %v2330 = vld [vmem:[#allocation4] sm:$0x1]
        %v2332 = vsel %vm840, %v2132, 0
        %2334 = vmatprep.subr.mxu0 0.0
        %2335 = vmatpush1.msra.mxu0 %v2321
        %2336 = vmatprep.subr.mxu0 0.0
        %2337 = vmatpush1.msra.mxu0 %v2322
        %2338 = vmatprep.subr.mxu0 0.0
        %2339 = vmatpush1.msra.mxu0 %v2323
        %2340 = vmatprep.subr.mxu0 0.0
        %2341 = vmatpush1.msra.mxu0 %v2324
        %2342 = vmatprep.subr.mxu0 0.0
        %2343 = vmatpush1.msra.mxu0 0.0
        %2344 = vmatprep.subr.mxu0 0.0
        %2345 = vmatpush1.msra.mxu0 0.0
        %2346 = vmatprep.subr.mxu0 0.0
        %2347 = vmatpush1.msra.mxu0 0.0
        %2348 = vmatprep.subr.mxu0 0.0
        %2349 = vmatpush1.msra.mxu0 0.0
        %2350 = vmatprep.subr.mxu0 0.0
        %2351 = vmatpush1.msra.mxu0 0.0
        %2352 = vmatprep.subr.mxu0 0.0
        %2353 = vmatpush1.msra.mxu0 0.0
        %2354 = vmatprep.subr.mxu0 0.0
        %2355 = vmatpush1.msra.mxu0 0.0
        %2356 = vmatprep.subr.mxu0 0.0
        %2357 = vmatpush1.msra.mxu0 0.0
        %2358 = vmatprep.subr.mxu0 0.0
        %2359 = vmatpush1.msra.mxu0 0.0
        %2360 = vmatprep.subr.mxu0 0.0
        %2361 = vmatpush1.msra.mxu0 0.0
        %2362 = vmatprep.subr.mxu0 0.0
        %2363 = vmatpush1.msra.mxu0 0.0
        %2364 = vmatprep.subr.mxu0 0.0
        %2365 = vmatpush1.msra.mxu0 0.0
        %2366 = vmatprep.subr.mxu0 0.0
        %2367 = vmatpush1.msra.mxu0 0.0
        %2368 = vmatprep.subr.mxu0 0.0
        %2369 = vmatpush1.msra.mxu0 0.0
        %2370 = vmatprep.subr.mxu0 0.0
        %2371 = vmatpush1.msra.mxu0 0.0
        %2372 = vmatprep.subr.mxu0 0.0
        %2373 = vmatpush1.msra.mxu0 0.0
        %2374 = vmatprep.subr.mxu0 0.0
        %2375 = vmatpush1.msra.mxu0 0.0
        %2376 = vmatprep.subr.mxu0 0.0
        %2377 = vmatpush1.msra.mxu0 0.0
        %2378 = vmatprep.subr.mxu0 0.0
        %2379 = vmatpush1.msra.mxu0 0.0
        %2380 = vmatprep.subr.mxu0 0.0
        %2381 = vmatpush1.msra.mxu0 0.0
        %2382 = vmatprep.subr.mxu0 0.0
        %2383 = vmatpush1.msra.mxu0 0.0
        %2384 = vmatprep.subr.mxu0 0.0
        %2385 = vmatpush1.msra.mxu0 0.0
        %2386 = vmatprep.subr.mxu0 0.0
        %2387 = vmatpush1.msra.mxu0 0.0
        %2388 = vmatprep.subr.mxu0 0.0
        %2389 = vmatpush1.msra.mxu0 0.0
        %2390 = vmatprep.subr.mxu0 0.0
        %2391 = vmatpush1.msra.mxu0 0.0
        %2392 = vmatprep.subr.mxu0 0.0
        %2393 = vmatpush1.msra.mxu0 0.0
        %2394 = vmatprep.subr.mxu0 0.0
        %2395 = vmatpush1.msra.mxu0 0.0
        %2396 = vmatprep.subr.mxu0 0.0
        %2397 = vmatpush1.msra.mxu0 0.0
        %2398 = vmatprep.mubr.f32.mxu0 0.0
        %2399 = vmatmul.mubr.f32.gmra.mrb[0].mxu0 %v2332
        %v2400 = vpop.f32.mrb[0].mxu0
        %v2401 = vadd.f32 0.0, %v2400
        %v2402 = vpop.f32.mrb[0].mxu0
        %2403 = vdwg.mxu0
        %v2405 = vlaneseq
        %v2406 = vshrl.u32 %v2405, 7
        %v2407 = vsub.s32 0, %v2406
        %v2408 = vrot.slane %v2325, %v2407
        %v2411 = vsel %vm664, %v2298, 0
        %v2414 = vsel %vm671, %v2401, 0
        %2416 = vmatprep.subr.mxu0 0.0
        %2417 = vmatpush1.msra.mxu0 %v2414
        %2418 = vmatprep.subr.mxu0 0.0
        %2419 = vmatpush1.msra.mxu0 0.0
        %2420 = vmatprep.subr.mxu0 0.0
        %2421 = vmatpush1.msra.mxu0 0.0
        %2422 = vmatprep.subr.mxu0 0.0
        %2423 = vmatpush1.msra.mxu0 0.0
        %2424 = vmatprep.subr.mxu0 0.0
        %2425 = vmatpush1.msra.mxu0 0.0
        %2426 = vmatprep.subr.mxu0 0.0
        %2427 = vmatpush1.msra.mxu0 0.0
        %2428 = vmatprep.subr.mxu0 0.0
        %2429 = vmatpush1.msra.mxu0 0.0
        %2430 = vmatprep.subr.mxu0 0.0
        %2431 = vmatpush1.msra.mxu0 0.0
        %2432 = vmatprep.subr.mxu0 0.0
        %2433 = vmatpush1.msra.mxu0 0.0
        %2434 = vmatprep.subr.mxu0 0.0
        %2435 = vmatpush1.msra.mxu0 0.0
        %2436 = vmatprep.subr.mxu0 0.0
        %2437 = vmatpush1.msra.mxu0 0.0
        %2438 = vmatprep.subr.mxu0 0.0
        %2439 = vmatpush1.msra.mxu0 0.0
        %2440 = vmatprep.subr.mxu0 0.0
        %2441 = vmatpush1.msra.mxu0 0.0
        %2442 = vmatprep.subr.mxu0 0.0
        %2443 = vmatpush1.msra.mxu0 0.0
        %2444 = vmatprep.subr.mxu0 0.0
        %2445 = vmatpush1.msra.mxu0 0.0
        %2446 = vmatprep.subr.mxu0 0.0
        %2447 = vmatpush1.msra.mxu0 0.0
        %2448 = vmatprep.subr.mxu0 0.0
        %2449 = vmatpush1.msra.mxu0 0.0
        %2450 = vmatprep.subr.mxu0 0.0
        %2451 = vmatpush1.msra.mxu0 0.0
        %2452 = vmatprep.subr.mxu0 0.0
        %2453 = vmatpush1.msra.mxu0 0.0
        %2454 = vmatprep.subr.mxu0 0.0
        %2455 = vmatpush1.msra.mxu0 0.0
        %2456 = vmatprep.subr.mxu0 0.0
        %2457 = vmatpush1.msra.mxu0 0.0
        %2458 = vmatprep.subr.mxu0 0.0
        %2459 = vmatpush1.msra.mxu0 0.0
        %2460 = vmatprep.subr.mxu0 0.0
        %2461 = vmatpush1.msra.mxu0 0.0
        %2462 = vmatprep.subr.mxu0 0.0
        %2463 = vmatpush1.msra.mxu0 0.0
        %2464 = vmatprep.subr.mxu0 0.0
        %2465 = vmatpush1.msra.mxu0 0.0
        %2466 = vmatprep.subr.mxu0 0.0
        %2467 = vmatpush1.msra.mxu0 0.0
        %2468 = vmatprep.subr.mxu0 0.0
        %2469 = vmatpush1.msra.mxu0 0.0
        %2470 = vmatprep.subr.mxu0 0.0
        %2471 = vmatpush1.msra.mxu0 0.0
        %2472 = vmatprep.subr.mxu0 0.0
        %2473 = vmatpush1.msra.mxu0 0.0
        %2474 = vmatprep.subr.mxu0 0.0
        %2475 = vmatpush1.msra.mxu0 0.0
        %2476 = vmatprep.subr.mxu0 0.0
        %2477 = vmatpush1.msra.mxu0 0.0
        %2478 = vmatprep.subr.mxu0 0.0
        %2479 = vmatpush1.msra.mxu0 0.0
        %2480 = vmatprep.mubr.f32.mxu0 0.0
        %2481 = vmatmul.mubr.f32.gmra.mrb[0].mxu0 %v2411
        %v2482 = vpop.f32.mrb[0].mxu0
        %v2483 = vadd.f32 %v2408, %v2482
        %v2484 = vpop.f32.mrb[0].mxu0
        %2485 = vdwg.mxu0
        %v2486 = vmax.f32 %v2483, 0.0
        %v2488 = vsel %vm840, %v2486, 0
        %2490 = vmatprep.subr.mxu0 0.0
        %2491 = vmatpush1.msra.mxu0 %v2326
        %2492 = vmatprep.subr.mxu0 0.0
        %2493 = vmatpush1.msra.mxu0 %v2327
        %2494 = vmatprep.subr.mxu0 0.0
        %2495 = vmatpush1.msra.mxu0 %v2328
        %2496 = vmatprep.subr.mxu0 0.0
        %2497 = vmatpush1.msra.mxu0 %v2329
        %2498 = vmatprep.subr.mxu0 0.0
        %2499 = vmatpush1.msra.mxu0 0.0
        %2500 = vmatprep.subr.mxu0 0.0
        %2501 = vmatpush1.msra.mxu0 0.0
        %2502 = vmatprep.subr.mxu0 0.0
        %2503 = vmatpush1.msra.mxu0 0.0
        %2504 = vmatprep.subr.mxu0 0.0
        %2505 = vmatpush1.msra.mxu0 0.0
        %2506 = vmatprep.subr.mxu0 0.0
        %2507 = vmatpush1.msra.mxu0 0.0
        %2508 = vmatprep.subr.mxu0 0.0
        %2509 = vmatpush1.msra.mxu0 0.0
        %2510 = vmatprep.subr.mxu0 0.0
        %2511 = vmatpush1.msra.mxu0 0.0
        %2512 = vmatprep.subr.mxu0 0.0
        %2513 = vmatpush1.msra.mxu0 0.0
        %2514 = vmatprep.subr.mxu0 0.0
        %2515 = vmatpush1.msra.mxu0 0.0
        %2516 = vmatprep.subr.mxu0 0.0
        %2517 = vmatpush1.msra.mxu0 0.0
        %2518 = vmatprep.subr.mxu0 0.0
        %2519 = vmatpush1.msra.mxu0 0.0
        %2520 = vmatprep.subr.mxu0 0.0
        %2521 = vmatpush1.msra.mxu0 0.0
        %2522 = vmatprep.subr.mxu0 0.0
        %2523 = vmatpush1.msra.mxu0 0.0
        %2524 = vmatprep.subr.mxu0 0.0
        %2525 = vmatpush1.msra.mxu0 0.0
        %2526 = vmatprep.subr.mxu0 0.0
        %2527 = vmatpush1.msra.mxu0 0.0
        %2528 = vmatprep.subr.mxu0 0.0
        %2529 = vmatpush1.msra.mxu0 0.0
        %2530 = vmatprep.subr.mxu0 0.0
        %2531 = vmatpush1.msra.mxu0 0.0
        %2532 = vmatprep.subr.mxu0 0.0
        %2533 = vmatpush1.msra.mxu0 0.0
        %2534 = vmatprep.subr.mxu0 0.0
        %2535 = vmatpush1.msra.mxu0 0.0
        %2536 = vmatprep.subr.mxu0 0.0
        %2537 = vmatpush1.msra.mxu0 0.0
        %2538 = vmatprep.subr.mxu0 0.0
        %2539 = vmatpush1.msra.mxu0 0.0
        %2540 = vmatprep.subr.mxu0 0.0
        %2541 = vmatpush1.msra.mxu0 0.0
        %2542 = vmatprep.subr.mxu0 0.0
        %2543 = vmatpush1.msra.mxu0 0.0
        %2544 = vmatprep.subr.mxu0 0.0
        %2545 = vmatpush1.msra.mxu0 0.0
        %2546 = vmatprep.subr.mxu0 0.0
        %2547 = vmatpush1.msra.mxu0 0.0
        %2548 = vmatprep.subr.mxu0 0.0
        %2549 = vmatpush1.msra.mxu0 0.0
        %2550 = vmatprep.subr.mxu0 0.0
        %2551 = vmatpush1.msra.mxu0 0.0
        %2552 = vmatprep.subr.mxu0 0.0
        %2553 = vmatpush1.msra.mxu0 0.0
        %2554 = vmatprep.mubr.f32.mxu0 0.0
        %2555 = vmatmul.mubr.f32.gmra.mrb[0].mxu0 %v2488
        %v2556 = vpop.f32.mrb[0].mxu0
        %v2557 = vadd.f32 0.0, %v2556
        %v2558 = vpop.f32.mrb[0].mxu0
        %2559 = vdwg.mxu0
        %v2561 = vlaneseq
        %v2562 = vshrl.u32 %v2561, 7
        %v2563 = vsub.s32 0, %v2562
        %v2564 = vrot.slane %v2330, %v2563
        %v2567 = vsel %vm671, %v2557, 0
        %2569 = vmatprep.subr.mxu0 0.0
        %2570 = vmatpush1.msra.mxu0 %v2567
        %2571 = vmatprep.subr.mxu0 0.0
        %2572 = vmatpush1.msra.mxu0 0.0
        %2573 = vmatprep.subr.mxu0 0.0
        %2574 = vmatpush1.msra.mxu0 0.0
        %2575 = vmatprep.subr.mxu0 0.0
        %2576 = vmatpush1.msra.mxu0 0.0
        %2577 = vmatprep.subr.mxu0 0.0
        %2578 = vmatpush1.msra.mxu0 0.0
        %2579 = vmatprep.subr.mxu0 0.0
        %2580 = vmatpush1.msra.mxu0 0.0
        %2581 = vmatprep.subr.mxu0 0.0
        %2582 = vmatpush1.msra.mxu0 0.0
        %2583 = vmatprep.subr.mxu0 0.0
        %2584 = vmatpush1.msra.mxu0 0.0
        %2585 = vmatprep.subr.mxu0 0.0
        %2586 = vmatpush1.msra.mxu0 0.0
        %2587 = vmatprep.subr.mxu0 0.0
        %2588 = vmatpush1.msra.mxu0 0.0
        %2589 = vmatprep.subr.mxu0 0.0
        %2590 = vmatpush1.msra.mxu0 0.0
        %2591 = vmatprep.subr.mxu0 0.0
        %2592 = vmatpush1.msra.mxu0 0.0
        %2593 = vmatprep.subr.mxu0 0.0
        %2594 = vmatpush1.msra.mxu0 0.0
        %2595 = vmatprep.subr.mxu0 0.0
        %2596 = vmatpush1.msra.mxu0 0.0
        %2597 = vmatprep.subr.mxu0 0.0
        %2598 = vmatpush1.msra.mxu0 0.0
        %2599 = vmatprep.subr.mxu0 0.0
        %2600 = vmatpush1.msra.mxu0 0.0
        %2601 = vmatprep.subr.mxu0 0.0
        %2602 = vmatpush1.msra.mxu0 0.0
        %2603 = vmatprep.subr.mxu0 0.0
        %2604 = vmatpush1.msra.mxu0 0.0
        %2605 = vmatprep.subr.mxu0 0.0
        %2606 = vmatpush1.msra.mxu0 0.0
        %2607 = vmatprep.subr.mxu0 0.0
        %2608 = vmatpush1.msra.mxu0 0.0
        %2609 = vmatprep.subr.mxu0 0.0
        %2610 = vmatpush1.msra.mxu0 0.0
        %2611 = vmatprep.subr.mxu0 0.0
        %2612 = vmatpush1.msra.mxu0 0.0
        %2613 = vmatprep.subr.mxu0 0.0
        %2614 = vmatpush1.msra.mxu0 0.0
        %2615 = vmatprep.subr.mxu0 0.0
        %2616 = vmatpush1.msra.mxu0 0.0
        %2617 = vmatprep.subr.mxu0 0.0
        %2618 = vmatpush1.msra.mxu0 0.0
        %2619 = vmatprep.subr.mxu0 0.0
        %2620 = vmatpush1.msra.mxu0 0.0
        %2621 = vmatprep.subr.mxu0 0.0
        %2622 = vmatpush1.msra.mxu0 0.0
        %2623 = vmatprep.subr.mxu0 0.0
        %2624 = vmatpush1.msra.mxu0 0.0
        %2625 = vmatprep.subr.mxu0 0.0
        %2626 = vmatpush1.msra.mxu0 0.0
        %2627 = vmatprep.subr.mxu0 0.0
        %2628 = vmatpush1.msra.mxu0 0.0
        %2629 = vmatprep.subr.mxu0 0.0
        %2630 = vmatpush1.msra.mxu0 0.0
        %2631 = vmatprep.subr.mxu0 0.0
        %2632 = vmatpush1.msra.mxu0 0.0
        %2633 = vmatprep.mubr.f32.mxu0 0.0
        %2634 = vmatmul.mubr.f32.gmra.mrb[0].mxu0 %v2411
        %v2635 = vpop.f32.mrb[0].mxu0
        %v2636 = vadd.f32 %v2564, %v2635
        %v2637 = vpop.f32.mrb[0].mxu0
        %2638 = vdwg.mxu0
        %v2639 = vtanh.pop %v2636
        %2640 = vset.pattern.permute.xlu0 0
        %2641 = vperm.xlu0 %2640, %v2330
        %v2642 = vpop.permute.xlu0 %2641
        %v2644 = vlaneseq
        %v2645 = vshrl.u32 %v2644, 7
        %v2646 = vsub.s32 0, %v2645
        %v2647 = vrot.slane %v2642, %v2646
        %2648 = vxpose.xlu0.b32.start [1/16] %v2557, 128
        %2649 = vxpose.xlu0.b32.cont [2/16] 0.0, 128
        %2650 = vxpose.xlu0.b32.cont [3/16] 0.0, 128
        %2651 = vxpose.xlu0.b32.cont [4/16] 0.0, 128
        %2652 = vxpose.xlu0.b32.cont [5/16] 0.0, 128
        %2653 = vxpose.xlu0.b32.cont [6/16] 0.0, 128
        %2654 = vxpose.xlu0.b32.cont [7/16] 0.0, 128
        %2655 = vxpose.xlu0.b32.cont [8/16] 0.0, 128
        %2656 = vxpose.xlu0.b32.cont [9/16] 0.0, 128
        %2657 = vxpose.xlu0.b32.cont [10/16] 0.0, 128
        %2658 = vxpose.xlu0.b32.cont [11/16] 0.0, 128
        %2659 = vxpose.xlu0.b32.cont [12/16] 0.0, 128
        %2660 = vxpose.xlu0.b32.cont [13/16] 0.0, 128
        %2661 = vxpose.xlu0.b32.cont [14/16] 0.0, 128
        %2662 = vxpose.xlu0.b32.cont [15/16] 0.0, 128
        %2663 = vxpose.xlu0.b32.end [16/16] 0.0, 128
        %v2664 = vpop.trf.xlu0
        %v2665 = vpop.trf.xlu0
        %v2666 = vpop.trf.xlu0
        %v2667 = vpop.trf.xlu0
        %v2668 = vpop.trf.xlu0
        %v2669 = vpop.trf.xlu0
        %v2670 = vpop.trf.xlu0
        %v2671 = vpop.trf.xlu0
        %v2672 = vpop.trf.xlu0
        %v2673 = vpop.trf.xlu0
        %v2674 = vpop.trf.xlu0
        %v2675 = vpop.trf.xlu0
        %v2676 = vpop.trf.xlu0
        %v2677 = vpop.trf.xlu0
        %v2678 = vpop.trf.xlu0
        %v2679 = vpop.trf.xlu0
        %v2681 = vsel %vm664, %v2664, 0
        %v2683 = vsel %vm671, %v2298, 0
        %2685 = vmatprep.subr.mxu0 0.0
        %2686 = vmatpush1.msra.mxu0 %v2683
        %2687 = vmatprep.subr.mxu0 0.0
        %2688 = vmatpush1.msra.mxu0 0.0
        %2689 = vmatprep.subr.mxu0 0.0
        %2690 = vmatpush1.msra.mxu0 0.0
        %2691 = vmatprep.subr.mxu0 0.0
        %2692 = vmatpush1.msra.mxu0 0.0
        %2693 = vmatprep.subr.mxu0 0.0
        %2694 = vmatpush1.msra.mxu0 0.0
        %2695 = vmatprep.subr.mxu0 0.0
        %2696 = vmatpush1.msra.mxu0 0.0
        %2697 = vmatprep.subr.mxu0 0.0
        %2698 = vmatpush1.msra.mxu0 0.0
        %2699 = vmatprep.subr.mxu0 0.0
        %2700 = vmatpush1.msra.mxu0 0.0
        %2701 = vmatprep.subr.mxu0 0.0
        %2702 = vmatpush1.msra.mxu0 0.0
        %2703 = vmatprep.subr.mxu0 0.0
        %2704 = vmatpush1.msra.mxu0 0.0
        %2705 = vmatprep.subr.mxu0 0.0
        %2706 = vmatpush1.msra.mxu0 0.0
        %2707 = vmatprep.subr.mxu0 0.0
        %2708 = vmatpush1.msra.mxu0 0.0
        %2709 = vmatprep.subr.mxu0 0.0
        %2710 = vmatpush1.msra.mxu0 0.0
        %2711 = vmatprep.subr.mxu0 0.0
        %2712 = vmatpush1.msra.mxu0 0.0
        %2713 = vmatprep.subr.mxu0 0.0
        %2714 = vmatpush1.msra.mxu0 0.0
        %2715 = vmatprep.subr.mxu0 0.0
        %2716 = vmatpush1.msra.mxu0 0.0
        %2717 = vmatprep.subr.mxu0 0.0
        %2718 = vmatpush1.msra.mxu0 0.0
        %2719 = vmatprep.subr.mxu0 0.0
        %2720 = vmatpush1.msra.mxu0 0.0
        %2721 = vmatprep.subr.mxu0 0.0
        %2722 = vmatpush1.msra.mxu0 0.0
        %2723 = vmatprep.subr.mxu0 0.0
        %2724 = vmatpush1.msra.mxu0 0.0
        %2725 = vmatprep.subr.mxu0 0.0
        %2726 = vmatpush1.msra.mxu0 0.0
        %2727 = vmatprep.subr.mxu0 0.0
        %2728 = vmatpush1.msra.mxu0 0.0
        %2729 = vmatprep.subr.mxu0 0.0
        %2730 = vmatpush1.msra.mxu0 0.0
        %2731 = vmatprep.subr.mxu0 0.0
        %2732 = vmatpush1.msra.mxu0 0.0
        %2733 = vmatprep.subr.mxu0 0.0
        %2734 = vmatpush1.msra.mxu0 0.0
        %2735 = vmatprep.subr.mxu0 0.0
        %2736 = vmatpush1.msra.mxu0 0.0
        %2737 = vmatprep.subr.mxu0 0.0
        %2738 = vmatpush1.msra.mxu0 0.0
        %2739 = vmatprep.subr.mxu0 0.0
        %2740 = vmatpush1.msra.mxu0 0.0
        %2741 = vmatprep.subr.mxu0 0.0
        %2742 = vmatpush1.msra.mxu0 0.0
        %2743 = vmatprep.subr.mxu0 0.0
        %2744 = vmatpush1.msra.mxu0 0.0
        %2745 = vmatprep.subr.mxu0 0.0
        %2746 = vmatpush1.msra.mxu0 0.0
        %2747 = vmatprep.subr.mxu0 0.0
        %2748 = vmatpush1.msra.mxu0 0.0
        %2749 = vmatprep.mubr.f32.mxu0 0.0
        %2750 = vmatmul.mubr.f32.gmra.mrb[0].mxu0 %v2681
        %v2751 = vpop.f32.mrb[0].mxu0
        %v2752 = vadd.f32 %v2647, %v2751
        %v2753 = vpop.f32.mrb[0].mxu0
        %2754 = vdwg.mxu0
        %v2755 = vtanh.pop %v2752
        %2757 = vset.pattern.permute.xlu0 0
        %2758 = vperm.xlu0 %2757, %v2639
        %v2759 = vpop.permute.xlu0 %2758
        %v2761 = vlaneseq
        %v2762 = vshrl.u32 %v2761, 7
        %v2763 = vsub.s32 0, %v2762
        %v2764 = vrot.slane %v2755, %v2763
        %vm2765 = vcmp.gt.f32.partialorder %v2759, %v2764
        %vm2766 = vcmp.eq.f32.partialorder %v2759, %v2764
        %vm2767 = vmand %vm2766, %vm1150
        %vm2768 = vmor %vm2765, %vm2767
        %vm2769 = vmand %vm1144, %vm2768
        %v2770 = vsel %vm2769, 1, 0
        %v2771 = vcvt.s32.f32 %v2770
        %v2772 = vsel %vm2285, %v2771, 0.0
        %v2773 = vrot.slane %v2772, 4
        %v2774 = vadd.f32 %v2772, %v2773
        %v2775 = vrot.slane %v2774, 2
        %v2776 = vadd.f32 %v2774, %v2775
        %v2777 = vrot.slane %v2776, 1
        %v2778 = vadd.f32 %v2776, %v2777
        %vm2779 = vcmp.lt.f32.partialorder %v2778, 2.0
        %v2780 = vsel %vm2779, 1, 0
        %v2781 = vcvt.s32.f32 %v2780
        %v2783 = vsel %vm664, %v2781, 0
        %v2786 = vsel %vm671, %v1174, 0
        %2788 = vmatprep.subr.mxu0 0.0
        %2789 = vmatpush1.msra.mxu0 %v2786
        %2790 = vmatprep.subr.mxu0 0.0
        %2791 = vmatpush1.msra.mxu0 0.0
        %2792 = vmatprep.subr.mxu0 0.0
        %2793 = vmatpush1.msra.mxu0 0.0
        %2794 = vmatprep.subr.mxu0 0.0
        %2795 = vmatpush1.msra.mxu0 0.0
        %2796 = vmatprep.subr.mxu0 0.0
        %2797 = vmatpush1.msra.mxu0 0.0
        %2798 = vmatprep.subr.mxu0 0.0
        %2799 = vmatpush1.msra.mxu0 0.0
        %2800 = vmatprep.subr.mxu0 0.0
        %2801 = vmatpush1.msra.mxu0 0.0
        %2802 = vmatprep.subr.mxu0 0.0
        %2803 = vmatpush1.msra.mxu0 0.0
        %2804 = vmatprep.subr.mxu0 0.0
        %2805 = vmatpush1.msra.mxu0 0.0
        %2806 = vmatprep.subr.mxu0 0.0
        %2807 = vmatpush1.msra.mxu0 0.0
        %2808 = vmatprep.subr.mxu0 0.0
        %2809 = vmatpush1.msra.mxu0 0.0
        %2810 = vmatprep.subr.mxu0 0.0
        %2811 = vmatpush1.msra.mxu0 0.0
        %2812 = vmatprep.subr.mxu0 0.0
        %2813 = vmatpush1.msra.mxu0 0.0
        %2814 = vmatprep.subr.mxu0 0.0
        %2815 = vmatpush1.msra.mxu0 0.0
        %2816 = vmatprep.subr.mxu0 0.0
        %2817 = vmatpush1.msra.mxu0 0.0
        %2818 = vmatprep.subr.mxu0 0.0
        %2819 = vmatpush1.msra.mxu0 0.0
        %2820 = vmatprep.subr.mxu0 0.0
        %2821 = vmatpush1.msra.mxu0 0.0
        %2822 = vmatprep.subr.mxu0 0.0
        %2823 = vmatpush1.msra.mxu0 0.0
        %2824 = vmatprep.subr.mxu0 0.0
        %2825 = vmatpush1.msra.mxu0 0.0
        %2826 = vmatprep.subr.mxu0 0.0
        %2827 = vmatpush1.msra.mxu0 0.0
        %2828 = vmatprep.subr.mxu0 0.0
        %2829 = vmatpush1.msra.mxu0 0.0
        %2830 = vmatprep.subr.mxu0 0.0
        %2831 = vmatpush1.msra.mxu0 0.0
        %2832 = vmatprep.subr.mxu0 0.0
        %2833 = vmatpush1.msra.mxu0 0.0
        %2834 = vmatprep.subr.mxu0 0.0
        %2835 = vmatpush1.msra.mxu0 0.0
        %2836 = vmatprep.subr.mxu0 0.0
        %2837 = vmatpush1.msra.mxu0 0.0
        %2838 = vmatprep.subr.mxu0 0.0
        %2839 = vmatpush1.msra.mxu0 0.0
        %2840 = vmatprep.subr.mxu0 0.0
        %2841 = vmatpush1.msra.mxu0 0.0
        %2842 = vmatprep.subr.mxu0 0.0
        %2843 = vmatpush1.msra.mxu0 0.0
        %2844 = vmatprep.subr.mxu0 0.0
        %2845 = vmatpush1.msra.mxu0 0.0
        %2846 = vmatprep.subr.mxu0 0.0
        %2847 = vmatpush1.msra.mxu0 0.0
        %2848 = vmatprep.subr.mxu0 0.0
        %2849 = vmatpush1.msra.mxu0 0.0
        %2850 = vmatprep.subr.mxu0 0.0
        %2851 = vmatpush1.msra.mxu0 0.0
        %2852 = vmatprep.mubr.f32.mxu0 0.0
        %2853 = vmatmul.mubr.f32.gmra.mrb[0].mxu0 %v2783
        %v2854 = vpop.f32.mrb[0].mxu0
        %v2855 = vadd.f32 0.0, %v2854
        %v2856 = vpop.f32.mrb[0].mxu0
        %2857 = vdwg.mxu0
        %v2858 = vlaneseq
        %v2859 = vshrl.u32 %v2858, 7
        %v2860 = vsub.s32 0, %v2859
        %v2861 = vrot.slane %v2855, %v2860
        %vm2862 = vcmp.eq.f32.partialorder %v2861, %v1251
        %vm2863 = vcmp.eq.s32.totalorder %v2780, 1
        %vm2864 = vmand %vm2863, %vm2862
        %v2865 = vsel %vm2864, 1, 0
        %v2866 = vcvt.s32.f32 %v2865
        %v2867 = vmul.f32 %v2866, %v2764
        %v2869 = vsel %vm664, %v2867, 0
        %v2871 = vsel %vm671, %v2486, 0
        %2873 = vmatprep.subr.mxu0 0.0
        %2874 = vmatpush1.msra.mxu0 %v2871
        %2875 = vmatprep.subr.mxu0 0.0
        %2876 = vmatpush1.msra.mxu0 0.0
        %2877 = vmatprep.subr.mxu0 0.0
        %2878 = vmatpush1.msra.mxu0 0.0
        %2879 = vmatprep.subr.mxu0 0.0
        %2880 = vmatpush1.msra.mxu0 0.0
        %2881 = vmatprep.subr.mxu0 0.0
        %2882 = vmatpush1.msra.mxu0 0.0
        %2883 = vmatprep.subr.mxu0 0.0
        %2884 = vmatpush1.msra.mxu0 0.0
        %2885 = vmatprep.subr.mxu0 0.0
        %2886 = vmatpush1.msra.mxu0 0.0
        %2887 = vmatprep.subr.mxu0 0.0
        %2888 = vmatpush1.msra.mxu0 0.0
        %2889 = vmatprep.subr.mxu0 0.0
        %2890 = vmatpush1.msra.mxu0 0.0
        %2891 = vmatprep.subr.mxu0 0.0
        %2892 = vmatpush1.msra.mxu0 0.0
        %2893 = vmatprep.subr.mxu0 0.0
        %2894 = vmatpush1.msra.mxu0 0.0
        %2895 = vmatprep.subr.mxu0 0.0
        %2896 = vmatpush1.msra.mxu0 0.0
        %2897 = vmatprep.subr.mxu0 0.0
        %2898 = vmatpush1.msra.mxu0 0.0
        %2899 = vmatprep.subr.mxu0 0.0
        %2900 = vmatpush1.msra.mxu0 0.0
        %2901 = vmatprep.subr.mxu0 0.0
        %2902 = vmatpush1.msra.mxu0 0.0
        %2903 = vmatprep.subr.mxu0 0.0
        %2904 = vmatpush1.msra.mxu0 0.0
        %2905 = vmatprep.subr.mxu0 0.0
        %2906 = vmatpush1.msra.mxu0 0.0
        %2907 = vmatprep.subr.mxu0 0.0
        %2908 = vmatpush1.msra.mxu0 0.0
        %2909 = vmatprep.subr.mxu0 0.0
        %2910 = vmatpush1.msra.mxu0 0.0
        %2911 = vmatprep.subr.mxu0 0.0
        %2912 = vmatpush1.msra.mxu0 0.0
        %2913 = vmatprep.subr.mxu0 0.0
        %2914 = vmatpush1.msra.mxu0 0.0
        %2915 = vmatprep.subr.mxu0 0.0
        %2916 = vmatpush1.msra.mxu0 0.0
        %2917 = vmatprep.subr.mxu0 0.0
        %2918 = vmatpush1.msra.mxu0 0.0
        %2919 = vmatprep.subr.mxu0 0.0
        %2920 = vmatpush1.msra.mxu0 0.0
        %2921 = vmatprep.subr.mxu0 0.0
        %2922 = vmatpush1.msra.mxu0 0.0
        %2923 = vmatprep.subr.mxu0 0.0
        %2924 = vmatpush1.msra.mxu0 0.0
        %2925 = vmatprep.subr.mxu0 0.0
        %2926 = vmatpush1.msra.mxu0 0.0
        %2927 = vmatprep.subr.mxu0 0.0
        %2928 = vmatpush1.msra.mxu0 0.0
        %2929 = vmatprep.subr.mxu0 0.0
        %2930 = vmatpush1.msra.mxu0 0.0
        %2931 = vmatprep.subr.mxu0 0.0
        %2932 = vmatpush1.msra.mxu0 0.0
        %2933 = vmatprep.subr.mxu0 0.0
        %2934 = vmatpush1.msra.mxu0 0.0
        %2935 = vmatprep.subr.mxu0 0.0
        %2936 = vmatpush1.msra.mxu0 0.0
        %2937 = vmatprep.mubr.f32.mxu0 0.0
        %2938 = vmatmul.mubr.f32.gmra.mrb[0].mxu0 %v2869
        %v2939 = vpop.f32.mrb[0].mxu0
        %v2940 = vadd.f32 0.0, %v2939
        %v2941 = vpop.f32.mrb[0].mxu0
        %2942 = vdwg.mxu0
        %vm2943 = vcmask 254976
        %v2944 = vsel %vm2943, %v2940, 0.0
        %v2945 = vrot.slane %v2944, 4
        %v2946 = vadd.f32 %v2944, %v2945
        %v2947 = vrot.slane %v2946, 2
        %v2948 = vadd.f32 %v2946, %v2947
        %v2949 = vrot.slane %v2948, 1
        %v2950 = vadd.f32 %v2948, %v2949
        %v2951 = vrcp.pop 2.0
        %v2952 = vmul.f32 %v2950, %v2951
        %v2953 = vsel %vm2943, %v2940, -inf
        %v2954 = vrot.slane %v2953, 4
        %v2955 = vmax.f32 %v2953, %v2954
        %v2956 = vrot.slane %v2955, 2
        %v2957 = vmax.f32 %v2955, %v2956
        %v2958 = vrot.slane %v2957, 1
        %v2959 = vmax.f32 %v2957, %v2958
        %2961 = vrot.lane.b32.xlu0 %v2959, 32
        %v2962 = vpop.permute.xlu0 %2961
        %v2964 = vsel %vm840, %v2952, %v2962
        %v2965 = vadd.f32 %v1525, %v2320
        %v2966 = vadd.f32 %v2965, %v2964
        %v2967 = vld [vmem:[%s14] sm:$0xff]
        %v2968 = vld [vmem:[%s14 + $0x8] sm:$0xff]
        %v2969 = vld [vmem:[%s14 + $0x10] sm:$0xff]
        %v2970 = vld [vmem:[%s14 + $0x18] sm:$0xff]
        %v2971 = vld [vmem:[%s14 + $0x20] sm:$0xff]
        %v2972 = vld [vmem:[%s14 + $0x28] sm:$0xff]
        %v2973 = vld [vmem:[%s14 + $0x30] sm:$0xff]
        %v2974 = vld [vmem:[%s14 + $0x38] sm:$0xff]
        %v2975 = vld [vmem:[%s15] sm:$0x1]
        %vm2976 = vcmask 523264
        %v2978 = vsel %vm2976, %v2966, 0
        %2980 = vmatprep.subr.mxu0 0.0
        %2981 = vmatpush1.msra.mxu0 %v2967
        %2982 = vmatprep.subr.mxu0 0.0
        %2983 = vmatpush1.msra.mxu0 %v2968
        %2984 = vmatprep.subr.mxu0 0.0
        %2985 = vmatpush1.msra.mxu0 %v2969
        %2986 = vmatprep.subr.mxu0 0.0
        %2987 = vmatpush1.msra.mxu0 %v2970
        %2988 = vmatprep.subr.mxu0 0.0
        %2989 = vmatpush1.msra.mxu0 %v2971
        %2990 = vmatprep.subr.mxu0 0.0
        %2991 = vmatpush1.msra.mxu0 %v2972
        %2992 = vmatprep.subr.mxu0 0.0
        %2993 = vmatpush1.msra.mxu0 %v2973
        %2994 = vmatprep.subr.mxu0 0.0
        %2995 = vmatpush1.msra.mxu0 %v2974
        %2996 = vmatprep.subr.mxu0 0.0
        %2997 = vmatpush1.msra.mxu0 0.0
        %2998 = vmatprep.subr.mxu0 0.0
        %2999 = vmatpush1.msra.mxu0 0.0
        %3000 = vmatprep.subr.mxu0 0.0
        %3001 = vmatpush1.msra.mxu0 0.0
        %3002 = vmatprep.subr.mxu0 0.0
        %3003 = vmatpush1.msra.mxu0 0.0
        %3004 = vmatprep.subr.mxu0 0.0
        %3005 = vmatpush1.msra.mxu0 0.0
        %3006 = vmatprep.subr.mxu0 0.0
        %3007 = vmatpush1.msra.mxu0 0.0
        %3008 = vmatprep.subr.mxu0 0.0
        %3009 = vmatpush1.msra.mxu0 0.0
        %3010 = vmatprep.subr.mxu0 0.0
        %3011 = vmatpush1.msra.mxu0 0.0
        %3012 = vmatprep.subr.mxu0 0.0
        %3013 = vmatpush1.msra.mxu0 0.0
        %3014 = vmatprep.subr.mxu0 0.0
        %3015 = vmatpush1.msra.mxu0 0.0
        %3016 = vmatprep.subr.mxu0 0.0
        %3017 = vmatpush1.msra.mxu0 0.0
        %3018 = vmatprep.subr.mxu0 0.0
        %3019 = vmatpush1.msra.mxu0 0.0
        %3020 = vmatprep.subr.mxu0 0.0
        %3021 = vmatpush1.msra.mxu0 0.0
        %3022 = vmatprep.subr.mxu0 0.0
        %3023 = vmatpush1.msra.mxu0 0.0
        %3024 = vmatprep.subr.mxu0 0.0
        %3025 = vmatpush1.msra.mxu0 0.0
        %3026 = vmatprep.subr.mxu0 0.0
        %3027 = vmatpush1.msra.mxu0 0.0
        %3028 = vmatprep.subr.mxu0 0.0
        %3029 = vmatpush1.msra.mxu0 0.0
        %3030 = vmatprep.subr.mxu0 0.0
        %3031 = vmatpush1.msra.mxu0 0.0
        %3032 = vmatprep.subr.mxu0 0.0
        %3033 = vmatpush1.msra.mxu0 0.0
        %3034 = vmatprep.subr.mxu0 0.0
        %3035 = vmatpush1.msra.mxu0 0.0
        %3036 = vmatprep.subr.mxu0 0.0
        %3037 = vmatpush1.msra.mxu0 0.0
        %3038 = vmatprep.subr.mxu0 0.0
        %3039 = vmatpush1.msra.mxu0 0.0
        %3040 = vmatprep.subr.mxu0 0.0
        %3041 = vmatpush1.msra.mxu0 0.0
        %3042 = vmatprep.subr.mxu0 0.0
        %3043 = vmatpush1.msra.mxu0 0.0
        %3044 = vmatprep.mubr.f32.mxu0 0.0
        %3045 = vmatmul.mubr.f32.gmra.mrb[0].mxu0 %v2978
        %v3046 = vpop.f32.mrb[0].mxu0
        %v3047 = vadd.f32 %v2975, %v3046
        %v3048 = vpop.f32.mrb[0].mxu0
        %3049 = vdwg.mxu0
        %v3050 = vmax.f32 %v3047, 0.0
        %v3051 = vld [vmem:[%s16] sm:$0xff]
        %v3052 = vld [vmem:[%s16 + $0x8] sm:$0xff]
        %v3053 = vld [vmem:[%s16 + $0x10] sm:$0xff]
        %v3054 = vld [vmem:[%s16 + $0x18] sm:$0xff]
        %v3055 = vld [vmem:[%s17] sm:$0x1]
        %v3057 = vsel %vm840, %v3050, 0
        %3059 = vmatprep.subr.mxu0 0.0
        %3060 = vmatpush1.msra.mxu0 %v3051
        %3061 = vmatprep.subr.mxu0 0.0
        %3062 = vmatpush1.msra.mxu0 %v3052
        %3063 = vmatprep.subr.mxu0 0.0
        %3064 = vmatpush1.msra.mxu0 %v3053
        %3065 = vmatprep.subr.mxu0 0.0
        %3066 = vmatpush1.msra.mxu0 %v3054
        %3067 = vmatprep.subr.mxu0 0.0
        %3068 = vmatpush1.msra.mxu0 0.0
        %3069 = vmatprep.subr.mxu0 0.0
        %3070 = vmatpush1.msra.mxu0 0.0
        %3071 = vmatprep.subr.mxu0 0.0
        %3072 = vmatpush1.msra.mxu0 0.0
        %3073 = vmatprep.subr.mxu0 0.0
        %3074 = vmatpush1.msra.mxu0 0.0
        %3075 = vmatprep.subr.mxu0 0.0
        %3076 = vmatpush1.msra.mxu0 0.0
        %3077 = vmatprep.subr.mxu0 0.0
        %3078 = vmatpush1.msra.mxu0 0.0
        %3079 = vmatprep.subr.mxu0 0.0
        %3080 = vmatpush1.msra.mxu0 0.0
        %3081 = vmatprep.subr.mxu0 0.0
        %3082 = vmatpush1.msra.mxu0 0.0
        %3083 = vmatprep.subr.mxu0 0.0
        %3084 = vmatpush1.msra.mxu0 0.0
        %3085 = vmatprep.subr.mxu0 0.0
        %3086 = vmatpush1.msra.mxu0 0.0
        %3087 = vmatprep.subr.mxu0 0.0
        %3088 = vmatpush1.msra.mxu0 0.0
        %3089 = vmatprep.subr.mxu0 0.0
        %3090 = vmatpush1.msra.mxu0 0.0
        %3091 = vmatprep.subr.mxu0 0.0
        %3092 = vmatpush1.msra.mxu0 0.0
        %3093 = vmatprep.subr.mxu0 0.0
        %3094 = vmatpush1.msra.mxu0 0.0
        %3095 = vmatprep.subr.mxu0 0.0
        %3096 = vmatpush1.msra.mxu0 0.0
        %3097 = vmatprep.subr.mxu0 0.0
        %3098 = vmatpush1.msra.mxu0 0.0
        %3099 = vmatprep.subr.mxu0 0.0
        %3100 = vmatpush1.msra.mxu0 0.0
        %3101 = vmatprep.subr.mxu0 0.0
        %3102 = vmatpush1.msra.mxu0 0.0
        %3103 = vmatprep.subr.mxu0 0.0
        %3104 = vmatpush1.msra.mxu0 0.0
        %3105 = vmatprep.subr.mxu0 0.0
        %3106 = vmatpush1.msra.mxu0 0.0
        %3107 = vmatprep.subr.mxu0 0.0
        %3108 = vmatpush1.msra.mxu0 0.0
        %3109 = vmatprep.subr.mxu0 0.0
        %3110 = vmatpush1.msra.mxu0 0.0
        %3111 = vmatprep.subr.mxu0 0.0
        %3112 = vmatpush1.msra.mxu0 0.0
        %3113 = vmatprep.subr.mxu0 0.0
        %3114 = vmatpush1.msra.mxu0 0.0
        %3115 = vmatprep.subr.mxu0 0.0
        %3116 = vmatpush1.msra.mxu0 0.0
        %3117 = vmatprep.subr.mxu0 0.0
        %3118 = vmatpush1.msra.mxu0 0.0
        %3119 = vmatprep.subr.mxu0 0.0
        %3120 = vmatpush1.msra.mxu0 0.0
        %3121 = vmatprep.subr.mxu0 0.0
        %3122 = vmatpush1.msra.mxu0 0.0
        %3123 = vmatprep.mubr.f32.mxu0 0.0
        %3124 = vmatmul.mubr.f32.gmra.mrb[0].mxu0 %v3057
        %v3125 = vpop.f32.mrb[0].mxu0
        %v3126 = vadd.f32 %v3055, %v3125
        %v3127 = vpop.f32.mrb[0].mxu0
        %3128 = vdwg.mxu0
        %v3129 = vmax.f32 %v3126, 0.0
        %v3130 = vld [vmem:[%s18] sm:$0xff]
        %v3131 = vld [vmem:[%s18 + $0x8] sm:$0xff]
        %v3132 = vld [vmem:[%s19] sm:$0x1]
        %v3134 = vsel %vm756, %v3129, 0
        %3136 = vmatprep.subr.mxu0 0.0
        %3137 = vmatpush1.msra.mxu0 %v3130
        %3138 = vmatprep.subr.mxu0 0.0
        %3139 = vmatpush1.msra.mxu0 %v3131
        %3140 = vmatprep.subr.mxu0 0.0
        %3141 = vmatpush1.msra.mxu0 0.0
        %3142 = vmatprep.subr.mxu0 0.0
        %3143 = vmatpush1.msra.mxu0 0.0
        %3144 = vmatprep.subr.mxu0 0.0
        %3145 = vmatpush1.msra.mxu0 0.0
        %3146 = vmatprep.subr.mxu0 0.0
        %3147 = vmatpush1.msra.mxu0 0.0
        %3148 = vmatprep.subr.mxu0 0.0
        %3149 = vmatpush1.msra.mxu0 0.0
        %3150 = vmatprep.subr.mxu0 0.0
        %3151 = vmatpush1.msra.mxu0 0.0
        %3152 = vmatprep.subr.mxu0 0.0
        %3153 = vmatpush1.msra.mxu0 0.0
        %3154 = vmatprep.subr.mxu0 0.0
        %3155 = vmatpush1.msra.mxu0 0.0
        %3156 = vmatprep.subr.mxu0 0.0
        %3157 = vmatpush1.msra.mxu0 0.0
        %3158 = vmatprep.subr.mxu0 0.0
        %3159 = vmatpush1.msra.mxu0 0.0
        %3160 = vmatprep.subr.mxu0 0.0
        %3161 = vmatpush1.msra.mxu0 0.0
        %3162 = vmatprep.subr.mxu0 0.0
        %3163 = vmatpush1.msra.mxu0 0.0
        %3164 = vmatprep.subr.mxu0 0.0
        %3165 = vmatpush1.msra.mxu0 0.0
        %3166 = vmatprep.subr.mxu0 0.0
        %3167 = vmatpush1.msra.mxu0 0.0
        %3168 = vmatprep.subr.mxu0 0.0
        %3169 = vmatpush1.msra.mxu0 0.0
        %3170 = vmatprep.subr.mxu0 0.0
        %3171 = vmatpush1.msra.mxu0 0.0
        %3172 = vmatprep.subr.mxu0 0.0
        %3173 = vmatpush1.msra.mxu0 0.0
        %3174 = vmatprep.subr.mxu0 0.0
        %3175 = vmatpush1.msra.mxu0 0.0
        %3176 = vmatprep.subr.mxu0 0.0
        %3177 = vmatpush1.msra.mxu0 0.0
        %3178 = vmatprep.subr.mxu0 0.0
        %3179 = vmatpush1.msra.mxu0 0.0
        %3180 = vmatprep.subr.mxu0 0.0
        %3181 = vmatpush1.msra.mxu0 0.0
        %3182 = vmatprep.subr.mxu0 0.0
        %3183 = vmatpush1.msra.mxu0 0.0
        %3184 = vmatprep.subr.mxu0 0.0
        %3185 = vmatpush1.msra.mxu0 0.0
        %3186 = vmatprep.subr.mxu0 0.0
        %3187 = vmatpush1.msra.mxu0 0.0
        %3188 = vmatprep.subr.mxu0 0.0
        %3189 = vmatpush1.msra.mxu0 0.0
        %3190 = vmatprep.subr.mxu0 0.0
        %3191 = vmatpush1.msra.mxu0 0.0
        %3192 = vmatprep.subr.mxu0 0.0
        %3193 = vmatpush1.msra.mxu0 0.0
        %3194 = vmatprep.subr.mxu0 0.0
        %3195 = vmatpush1.msra.mxu0 0.0
        %3196 = vmatprep.subr.mxu0 0.0
        %3197 = vmatpush1.msra.mxu0 0.0
        %3198 = vmatprep.subr.mxu0 0.0
        %3199 = vmatpush1.msra.mxu0 0.0
        %3200 = vmatprep.mubr.f32.mxu0 0.0
        %3201 = vmatmul.mubr.f32.gmra.mrb[0].mxu0 %v3134
        %v3202 = vpop.f32.mrb[0].mxu0
        %v3203 = vadd.f32 %v3132, %v3202
        %v3204 = vpop.f32.mrb[0].mxu0
        %3205 = vdwg.mxu0
        %vm3206 = vcmask 8192
        %3207 = vst.msk [vmem:[%s642] sm:$0x1] %vm3206, %v3203
        %s3208 = sand.u32 %s478, 1
        %s3209 = scalar_lea.sflag [#allocation6], %s3208
        %s3210 = sand.u32 %s478, 1
        %s3211 = scalar_lea.vmem [#allocation5], %s3210
        // Predicated region
        $region101: #{model_b_forward.1} parent=99 // pred_check
          %p3212 = pneg %p488
        $region102: #{model_b_forward.1} parent=99 // pred_check_branch
          %3214 = sbr.rel (%p3212) target = $region104
        $region103: #{model_b_forward.1} parent=99 // pred_region
          %s3216 = ssub.s32 16, 16
          %3217 = vsyncadd %s3209, %s3216
          %s3218 = smul.addr %s40, 16
          %s3219 = scalar_lea.hbm %s20, %s3218
          %s3221 = sshll.u32 %s3211, 4
          %s3222 = int_to_ptr.vmem [resolvable:$true] %s3221
          %3224 = dma.vmem_to_hbm [thread:$0]  %s3222, 16, %s3219, %s3209
        $region104: #{model_b_forward.1} parent=99 // pred_fallthru
          _
      $region100: #{model_b_forward.1} parent=5 // pred_fallthru
        _
      %p3225 = scmp.le.s32.totalorder 2, %s35
      // Predicated region
      $region105: #{model_b_forward.1} parent=5 // pred_check
        %p3226 = pneg %p3225
      $region106: #{model_b_forward.1} parent=5 // pred_check_branch
        %3228 = sbr.rel (%p3226) target = $region108
      $region107: #{model_b_forward.1} parent=5 // pred_region
        %s3229 = ssub.s32 %s35, 2
        // Predicated region
        $region109: #{model_b_forward.1} parent=107 // pred_check
          %p3230 = pneg %p494
        $region110: #{model_b_forward.1} parent=107 // pred_check_branch
          %3232 = sbr.rel (%p3230) target = $region112
        $region111: #{model_b_forward.1} parent=107 // pred_region
          %s3233 = sand.u32 %s479, 1
          %s3234 = scalar_lea.sflag [#allocation6], %s3233
          %s3235 = sand.u32 %s479, 1
          %s3236 = scalar_lea.vmem [#allocation5], %s3235
          %3237 = dma.done %s3234, 16
        $region112: #{model_b_forward.1} parent=107 // pred_fallthru
          _
      $region108: #{model_b_forward.1} parent=5 // pred_fallthru
        _
    $region6: #{model_b_forward.1} parent=1 // loop_footer
      %s39 = sadd.s32 1, %s35
    $region7: #{model_b_forward.1} parent=1 // loop_footer_branch
      %34 = sbr.rel target = $region3
    $region8: #{model_b_forward.1} parent=1 // loop_exit
      _
    %3238 = vsyncpa [#allocation6], 1
    %s3239 = scalar_lea.sflag [#allocation6], 1
    %3240 = vsyncpa %s3239, 1

</llo_original>
